<compile_context>
chip_gen: v6e
topology: v6e:2x2x1
jax: 0.10.0
libtpu: 0.0.40
codegen_flags: <defaults>
</compile_context>

<pallas_src>
import math
import functools

import jax
import jax.numpy as jnp
from jax.experimental import pallas as pl
from jax.experimental.pallas import tpu as pltpu

LN_EPS = 1e-5  # PyTorch nn.LayerNorm default


# ----------------------------- in-kernel helpers -----------------------------

def _layer_norm(x, g, b):
    # x: [..., D], g/b broadcastable over the last dim.
    mean = jnp.mean(x, axis=-1, keepdims=True)
    var = jnp.mean((x - mean) ** 2, axis=-1, keepdims=True)
    inv = jax.lax.rsqrt(var + LN_EPS)
    return (x - mean) * inv * g + b


def _erf(x):
    # Abramowitz & Stegun 7.1.26 polynomial (|err| < 1.5e-7, f32-accurate).
    a1, a2, a3, a4, a5 = 0.254829592, -0.284496736, 1.421413741, -1.453152027, 1.061405429
    p = 0.3275911
    s = jnp.where(x >= 0.0, 1.0, -1.0)
    z = jnp.abs(x)
    t = 1.0 / (1.0 + p * z)
    poly = ((((a5 * t + a4) * t + a3) * t + a2) * t + a1) * t
    return s * (1.0 - poly * jnp.exp(-z * z))


def _gelu(x):
    # PyTorch nn.GELU() default = exact erf form.
    # (If VALU binds at large shapes, switch to the tanh approximation -> EUP slot.)
    return 0.5 * x * (1.0 + _erf(x * (1.0 / math.sqrt(2.0))))


# ------------------------------ fused Pallas kernel ---------------------------

def fused_transformer_kernel(x_ref,
                             vecs_ref, b1_ref, fvec_ref,
                             wqkv_ref, wo_ref, w1_ref, w2_ref,
                             o_ref, ctx_sc,
                             *, heads, dim_head, batch, seq):
    """Grid = (batch_tile, layer). Residual slab lives in the output block (VMEM-resident)."""
    l = pl.program_id(1)
    n_layer = pl.num_programs(1)
    inner = heads * dim_head
    rows = batch * seq

    # Initialize the resident residual slab for this batch tile from the embeddings.
    @pl.when(l == 0)
    def _():
        o_ref[...] = x_ref[...]

    x = o_ref[...]                                                  # [rows, D] f32

    # Per-layer small vectors, resident in VMEM for all layers (one DMA total).
    vecs = vecs_ref[l]                                              # [6, D] f32
    ln1_g, ln1_b = vecs[0:1], vecs[1:2]
    ln2_g, ln2_b = vecs[2:3], vecs[3:4]
    bo, b2 = vecs[4:5], vecs[5:6]
    b1 = b1_ref[l]                                                  # [1, ffd] f32

    # ----- self-attention sublayer: x = x + Attn(LN(x)) -----
    h = _layer_norm(x, ln1_g, ln1_b)
    qkv = jnp.dot(h.astype(jnp.bfloat16), wqkv_ref[0],
                  preferred_element_type=jnp.float32)               # [rows, 3*inner]
    # Softmax scale is pre-folded into the q columns of wqkv (init_params).
    q = qkv[:, :inner].reshape(batch, seq, inner).astype(jnp.bfloat16)
    k = qkv[:, inner:2 * inner].reshape(batch, seq, inner).astype(jnp.bfloat16)
    v = qkv[:, 2 * inner:].reshape(batch, seq, inner).astype(jnp.bfloat16)

    for hd in range(heads):  # static unroll over heads; batched (per-batch) 3-D matmuls
        sl = slice(hd * dim_head, (hd + 1) * dim_head)
        qh, kh, vh = q[..., sl], k[..., sl], v[..., sl]
        logits = jnp.einsum('bqd,bkd->bqk', qh, kh,
                            preferred_element_type=jnp.float32)     # [batch, seq, seq] f32
        logits = logits - jnp.max(logits, axis=-1, keepdims=True)
        p = jnp.exp(logits)
        ssum = jnp.sum(p, axis=-1, keepdims=True)
        r = pl.reciprocal(ssum, approx=True)
        r = r * (2.0 - ssum * r)                                    # one Newton step
        p = (p * r).astype(jnp.bfloat16)
        oh = jnp.einsum('bqk,bkd->bqd', p, vh,
                        preferred_element_type=jnp.float32)         # [batch, seq, dh]
        ctx_sc[:, sl] = oh.reshape(rows, dim_head)                  # bound live range

    attn = jnp.dot(ctx_sc[...].astype(jnp.bfloat16), wo_ref[0],
                   preferred_element_type=jnp.float32) + bo
    x = x + attn

    # ----- feed-forward sublayer: x = x + FF(LN(x)) -----
    h = _layer_norm(x, ln2_g, ln2_b)
    h = jnp.dot(h.astype(jnp.bfloat16), w1_ref[0],
                preferred_element_type=jnp.float32) + b1
    h = _gelu(h)
    h = jnp.dot(h.astype(jnp.bfloat16), w2_ref[0],
                preferred_element_type=jnp.float32) + b2
    x = x + h

    @pl.when(l < n_layer - 1)
    def _():
        o_ref[...] = x

    # Final LayerNorm fused into the last layer step (overwrites the residual slab).
    @pl.when(l == n_layer - 1)
    def _():
        o_ref[...] = _layer_norm(x, fvec_ref[0:1], fvec_ref[1:2])


# ------------------------------ Python wrapper --------------------------------

def transformer_embedder_forward(tokens, params, heads, dim_head, batch_tile=None):
    """TransformerEmbedder.forward(tokens) -> z (return_embeddings=True)."""
    B, S = tokens.shape
    D = params["token_emb"].shape[1]
    L = params["wqkv"].shape[0]
    inner = heads * dim_head
    ffd = params["b1"].shape[-1]

    # TODO(synk): data-dependent vocab gather stays in plain JAX (no clean BlockSpec
    # form for per-token embedding lookup at this size).
    x = jnp.take(params["token_emb"], tokens, axis=0)               # [B, S, D]
    x = x + params["pos_emb"][:S][None, :, :]                       # absolute pos emb
    x2 = x.reshape(B * S, D).astype(jnp.float32)                    # fold batch into M

    if batch_tile is None:
        batch_tile = B          # n_bt=1: best for v5e/v6e; set batch_tile=B//2 on v7x
    assert B % batch_tile == 0
    n_bt = B // batch_tile
    rows = batch_tile * S
    # Sublane constraint: partial batch-tile blocks need rows % 8 == 0.
    assert batch_tile == B or rows % 8 == 0, "batch_tile*S must be a multiple of 8"

    # Explicit VMEM budget from the computed footprint (+headroom).
    per_layer_w = (D * 3 * inner + inner * D + D * ffd + ffd * D) * 2      # bf16, per layer
    resident = (L * 6 * D + L * ffd + 2 * D) * 4                           # small vecs, f32
    slabs = rows * D * 4 * 4                                               # x (2 buf) + out
    scratch = rows * inner * 4                                             # ctx
    acts = rows * (3 * inner + ffd) * 4 * 2                                # qkv / FF interm.
    est = 2 * per_layer_w + resident + slabs + scratch + acts
    vmem_limit = int(min(100 * 2**20, max(32 * 2**20, 1.5 * est)))

    def wspec(per_layer_shape):
        nd = len(per_layer_shape)
        return pl.BlockSpec((1,) + per_layer_shape,
                            lambda bt, l, _nd=nd: (l,) + (0,) * _nd)

    kernel = functools.partial(fused_transformer_kernel,
                               heads=heads, dim_head=dim_head,
                               batch=batch_tile, seq=S)

    out2 = pl.pallas_call(
        kernel,
        out_shape=jax.ShapeDtypeStruct((B * S, D), jnp.float32),
        grid_spec=pltpu.PrefetchScalarGridSpec(
            num_scalar_prefetch=0,
            grid=(n_bt, L),
            in_specs=[
                pl.BlockSpec((rows, D), lambda bt, l: (bt, 0)),       # x (read at l==0)
                pl.BlockSpec((L, 6, D), lambda bt, l: (0, 0, 0)),     # coalesced LN/bias vecs
                pl.BlockSpec((L, 1, ffd), lambda bt, l: (0, 0, 0)),   # b1 (resident)
                pl.BlockSpec((2, D), lambda bt, l: (0, 0)),           # final ln g/b
                wspec((D, 3 * inner)),                                # fused wqkv (bf16)
                wspec((inner, D)),                                    # wo (bf16)
                wspec((D, ffd)),                                      # w1 (bf16)
                wspec((ffd, D)),                                      # w2 (bf16)
            ],
            out_specs=pl.BlockSpec((rows, D), lambda bt, l: (bt, 0)), # resident residual slab
            scratch_shapes=[pltpu.VMEM((rows, inner), jnp.float32)],  # ctx (head outputs)
        ),
        compiler_params=pltpu.CompilerParams(
            dimension_semantics=("parallel", "arbitrary"),
            vmem_limit_bytes=vmem_limit),
    )(x2,
      params["vecs"], params["b1"], params["final_vec"],
      params["wqkv"], params["wo"], params["w1"], params["w2"])
    return out2.reshape(B, S, D)


# ------------------------------ pure-JAX reference -----------------------------

def transformer_embedder_reference(tokens, params, heads, dim_head):
    B, S = tokens.shape
    L = params["wqkv"].shape[0]
    inner = heads * dim_head
    bf16, f32 = jnp.bfloat16, jnp.float32
    x = jnp.take(params["token_emb"], tokens, axis=0) + params["pos_emb"][:S][None]
    x = x.astype(f32)
    for l in range(L):
        vecs = params["vecs"][l]
        h = _layer_norm(x, vecs[0], vecs[1])
        qkv = jnp.einsum('bsd,df->bsf', h.astype(bf16), params["wqkv"][l],
                         preferred_element_type=f32)
        q = qkv[..., :inner].reshape(B, S, heads, dim_head).astype(bf16)
        k = qkv[..., inner:2 * inner].reshape(B, S, heads, dim_head).astype(bf16)
        v = qkv[..., 2 * inner:].reshape(B, S, heads, dim_head).astype(bf16)
        logits = jnp.einsum('bqhd,bkhd->bhqk', q, k, preferred_element_type=f32)
        p = jax.nn.softmax(logits, axis=-1)
        ctx = jnp.einsum('bhqk,bkhd->bqhd', p.astype(bf16), v,
                         preferred_element_type=f32).reshape(B, S, inner)
        attn = jnp.einsum('bsf,fd->bsd', ctx.astype(bf16), params["wo"][l],
                          preferred_element_type=f32) + vecs[4]
        x = x + attn
        h = _layer_norm(x, vecs[2], vecs[3])
        h = jnp.einsum('bsd,df->bsf', h.astype(bf16), params["w1"][l],
                       preferred_element_type=f32) + params["b1"][l]
        h = _gelu(h)
        h = jnp.einsum('bsf,fd->bsd', h.astype(bf16), params["w2"][l],
                       preferred_element_type=f32) + vecs[5]
        x = x + h
    return _layer_norm(x, params["final_vec"][0], params["final_vec"][1])


# ------------------------------ parameter init --------------------------------

def init_params(key, *, n_embed, n_layer, vocab_size, max_seq_len, heads, dim_head):
    inner = heads * dim_head
    ffd = 4 * n_embed
    scale = dim_head ** -0.5
    keys = jax.random.split(key, 2 + n_layer)

    def lin(kk, fan_in, fan_out):
        bound = 1.0 / math.sqrt(fan_in)
        return jax.random.uniform(kk, (fan_in, fan_out), jnp.float32, -bound, bound)

    wqkv, wo, w1, w2, vecs, b1 = [], [], [], [], [], []
    for i in range(n_layer):
        k = jax.random.split(keys[2 + i], 8)
        wq = lin(k[0], n_embed, inner) * scale      # fold softmax scale into q columns
        wk = lin(k[1], n_embed, inner)
        wv = lin(k[2], n_embed, inner)
        wqkv.append(jnp.concatenate([wq, wk, wv], axis=1))            # [D, 3*inner]
        wo.append(lin(k[3], inner, n_embed))
        bo_b = 1.0 / math.sqrt(inner)
        bo_i = jax.random.uniform(k[4], (n_embed,), jnp.float32, -bo_b, bo_b)
        w1.append(lin(k[5], n_embed, ffd))
        b1_b = 1.0 / math.sqrt(n_embed)
        b1.append(jax.random.uniform(k[6], (1, ffd), jnp.float32, -b1_b, b1_b))
        w2.append(lin(k[7], ffd, n_embed))
        b2_i = jnp.zeros((n_embed,), jnp.float32)
        # Coalesced per-layer small vectors: [ln1_g, ln1_b, ln2_g, ln2_b, bo, b2]
        vecs.append(jnp.stack([jnp.ones((n_embed,), jnp.float32),
                               jnp.zeros((n_embed,), jnp.float32),
                               jnp.ones((n_embed,), jnp.float32),
                               jnp.zeros((n_embed,), jnp.float32),
                               bo_i, b2_i]))

    params = dict(
        token_emb=0.02 * jax.random.normal(keys[0], (vocab_size, n_embed), jnp.float32),
        pos_emb=0.02 * jax.random.normal(keys[1], (max_seq_len, n_embed), jnp.float32),
        vecs=jnp.stack(vecs),                                         # [L, 6, D] f32
        b1=jnp.stack(b1),                                             # [L, 1, ffd] f32
        final_vec=jnp.stack([jnp.ones((n_embed,), jnp.float32),
                             jnp.zeros((n_embed,), jnp.float32)]),    # [2, D] f32
        wqkv=jnp.stack(wqkv).astype(jnp.bfloat16),                    # MXU operands bf16
        wo=jnp.stack(wo).astype(jnp.bfloat16),
        w1=jnp.stack(w1).astype(jnp.bfloat16),
        w2=jnp.stack(w2).astype(jnp.bfloat16),
    )
    return params


# ------------------------------------ main -------------------------------------

if __name__ == "__main__":
    # Small synthetic config consistent with TransformerEmbedder(n_embed, n_layer, vocab_size)
    n_embed, n_layer, vocab_size, max_seq_len = 64, 2, 128, 77
    heads, dim_head = 8, 64            # x-transformers Attention defaults
    B, S = 2, 8

    key = jax.random.PRNGKey(0)
    pkey, tkey = jax.random.split(key)
    params = init_params(pkey, n_embed=n_embed, n_layer=n_layer, vocab_size=vocab_size,
                         max_seq_len=max_seq_len, heads=heads, dim_head=dim_head)
    tokens = jax.random.randint(tkey, (B, S), 0, vocab_size, dtype=jnp.int32)

    fwd = jax.jit(functools.partial(transformer_embedder_forward,
                                    heads=heads, dim_head=dim_head))
    z = fwd(tokens, params)
    z = jax.block_until_ready(z)
    assert z.shape == (B, S, n_embed) and z.dtype == jnp.float32
    assert bool(jnp.all(jnp.isfinite(z)))

    z_ref = transformer_embedder_reference(tokens, params, heads, dim_head)
    max_err = float(jnp.max(jnp.abs(z - z_ref)))
    assert max_err < 5e-2, f"kernel/reference mismatch: max_err={max_err}"
    print("KERNEL_OK")
</pallas_src>

<mosaic_0001>
module attributes {stable_mosaic.version = 11 : i64} {
  func.func @fused_transformer_kernel(%arg0: i32, %arg1: i32, %arg2: memref<16x64xf32, #tpu.memory_space<vmem>>, %arg3: memref<2x6x64xf32, #tpu.memory_space<vmem>>, %arg4: memref<2x1x256xf32, #tpu.memory_space<vmem>>, %arg5: memref<2x64xf32, #tpu.memory_space<vmem>>, %arg6: memref<1x64x1536xbf16, #tpu.memory_space<vmem>>, %arg7: memref<1x512x64xbf16, #tpu.memory_space<vmem>>, %arg8: memref<1x64x256xbf16, #tpu.memory_space<vmem>>, %arg9: memref<1x256x64xbf16, #tpu.memory_space<vmem>>, %arg10: memref<16x64xf32, #tpu.memory_space<vmem>>, %arg11: memref<16x512xf32, #tpu.memory_space<vmem>>) attributes {dimension_semantics = [#tpu.dimension_semantics<parallel>, #tpu.dimension_semantics<arbitrary>], iteration_bounds = array<i64: 1, 2>, scalar_prefetch = 0 : i64, scratch_operands = 1 : i64, tpu.core_type = #tpu.core_type<tc>, window_params = [{transform_indices = @transform_0, window_bounds = array<i64: 16, 64>}, {pipeline_mode = #tpu.pipeline_mode<synchronous>, transform_indices = @transform_1, window_bounds = array<i64: 2, 6, 64>}, {pipeline_mode = #tpu.pipeline_mode<synchronous>, transform_indices = @transform_2, window_bounds = array<i64: 2, 1, 256>}, {pipeline_mode = #tpu.pipeline_mode<synchronous>, transform_indices = @transform_3, window_bounds = array<i64: 2, 64>}, {transform_indices = @transform_4, window_bounds = array<i64: 1, 64, 1536>}, {transform_indices = @transform_5, window_bounds = array<i64: 1, 512, 64>}, {transform_indices = @transform_6, window_bounds = array<i64: 1, 64, 256>}, {transform_indices = @transform_7, window_bounds = array<i64: 1, 256, 64>}, {transform_indices = @transform_8, window_bounds = array<i64: 16, 64>}]} {
    %c0_i32 = arith.constant 0 : i32
    %0 = arith.cmpi eq, %arg1, %c0_i32 : i32
    %1 = arith.extui %0 : i1 to i32
    %c0_i32_0 = arith.constant 0 : i32
    %2 = arith.cmpi ne, %1, %c0_i32_0 : i32
    scf.if %2 {
      %c0_101 = arith.constant 0 : index
      %c0_102 = arith.constant 0 : index
      %317 = vector.load %arg2[%c0_101, %c0_102] : memref<16x64xf32, #tpu.memory_space<vmem>>, vector<16x64xf32>
      %c0_103 = arith.constant 0 : index
      %c0_104 = arith.constant 0 : index
      %318 = vector.load %arg10[%c0_103, %c0_104] : memref<16x64xf32, #tpu.memory_space<vmem>>, vector<16x64xf32>
      tpu.vector_store %arg10[%c0_103, %c0_104], %317 {strides = array<i32>} : memref<16x64xf32, #tpu.memory_space<vmem>>, vector<16x64xf32>,
    } else {
    }
    %c0 = arith.constant 0 : index
    %c0_1 = arith.constant 0 : index
    %3 = vector.load %arg10[%c0, %c0_1] : memref<16x64xf32, #tpu.memory_space<vmem>>, vector<16x64xf32>
    %4 = arith.index_cast %arg1 : i32 to index
    %c0_2 = arith.constant 0 : index
    %c0_3 = arith.constant 0 : index
    %5 = vector.load %arg3[%4, %c0_2, %c0_3] : memref<2x6x64xf32, #tpu.memory_space<vmem>>, vector<1x6x64xf32>
    %6 = vector.shape_cast %5 : vector<1x6x64xf32> to vector<6x64xf32>
    %7 = vector.extract_strided_slice %6 {offsets = [0, 0], sizes = [1, 64], strides = [1, 1]} : vector<6x64xf32> to vector<1x64xf32>
    %8 = vector.extract_strided_slice %6 {offsets = [1, 0], sizes = [1, 64], strides = [1, 1]} : vector<6x64xf32> to vector<1x64xf32>
    %9 = vector.extract_strided_slice %6 {offsets = [2, 0], sizes = [1, 64], strides = [1, 1]} : vector<6x64xf32> to vector<1x64xf32>
    %10 = vector.extract_strided_slice %6 {offsets = [3, 0], sizes = [1, 64], strides = [1, 1]} : vector<6x64xf32> to vector<1x64xf32>
    %11 = vector.extract_strided_slice %6 {offsets = [4, 0], sizes = [1, 64], strides = [1, 1]} : vector<6x64xf32> to vector<1x64xf32>
    %12 = vector.extract_strided_slice %6 {offsets = [5, 0], sizes = [1, 64], strides = [1, 1]} : vector<6x64xf32> to vector<1x64xf32>
    %13 = arith.index_cast %arg1 : i32 to index
    %c0_4 = arith.constant 0 : index
    %c0_5 = arith.constant 0 : index
    %14 = vector.load %arg4[%13, %c0_4, %c0_5] : memref<2x1x256xf32, #tpu.memory_space<vmem>>, vector<1x1x256xf32>
    %15 = vector.shape_cast %14 : vector<1x1x256xf32> to vector<1x256xf32>
    %cst = arith.constant dense<0.000000e+00> : vector<16xf32>
    %16 = vector.multi_reduction <add>, %3, %cst [1] : vector<16x64xf32> to vector<16xf32>
    %17 = vector.shape_cast %16 : vector<16xf32> to vector<16x1xf32>
    %cst_6 = arith.constant 6.400000e+01 : f32
    %18 = vector.broadcast %cst_6 : f32 to vector<16x1xf32>
    %19 = arith.divf %17, %18 : vector<16x1xf32>
    %20 = vector.broadcast %19 : vector<16x1xf32> to vector<16x64xf32>
    %21 = arith.subf %3, %20 : vector<16x64xf32>
    %22 = arith.mulf %21, %21 : vector<16x64xf32>
    %cst_7 = arith.constant dense<0.000000e+00> : vector<16xf32>
    %23 = vector.multi_reduction <add>, %22, %cst_7 [1] : vector<16x64xf32> to vector<16xf32>
    %24 = vector.shape_cast %23 : vector<16xf32> to vector<16x1xf32>
    %cst_8 = arith.constant 6.400000e+01 : f32
    %25 = vector.broadcast %cst_8 : f32 to vector<16x1xf32>
    %26 = arith.divf %24, %25 : vector<16x1xf32>
    %cst_9 = arith.constant 9.99999974E-6 : f32
    %27 = vector.broadcast %cst_9 : f32 to vector<16x1xf32>
    %28 = arith.addf %26, %27 : vector<16x1xf32>
    %29 = math.rsqrt %28 : vector<16x1xf32>
    %30 = vector.broadcast %19 : vector<16x1xf32> to vector<16x64xf32>
    %31 = arith.subf %3, %30 : vector<16x64xf32>
    %32 = vector.broadcast %29 : vector<16x1xf32> to vector<16x64xf32>
    %33 = arith.mulf %31, %32 : vector<16x64xf32>
    %34 = vector.broadcast %7 : vector<1x64xf32> to vector<16x64xf32>
    %35 = arith.mulf %33, %34 : vector<16x64xf32>
    %36 = vector.broadcast %8 : vector<1x64xf32> to vector<16x64xf32>
    %37 = arith.addf %35, %36 : vector<16x64xf32>
    %38 = arith.truncf %37 : vector<16x64xf32> to vector<16x64xbf16>
    %c0_10 = arith.constant 0 : index
    %c0_11 = arith.constant 0 : index
    %c0_12 = arith.constant 0 : index
    %39 = vector.load %arg6[%c0_10, %c0_11, %c0_12] : memref<1x64x1536xbf16, #tpu.memory_space<vmem>>, vector<1x64x1536xbf16>
    %40 = vector.shape_cast %39 : vector<1x64x1536xbf16> to vector<64x1536xbf16>
    %cst_13 = arith.constant dense<0.000000e+00> : vector<16x1536xf32>
    %41 = tpu.matmul %38, %40, %cst_13 {dimension_numbers = #tpu.dot_dimension_numbers<[1], [0], [0], [1], [0, 0, 1, 1], [], []>} : vector<16x64xbf16>, vector<64x1536xbf16>, vector<16x1536xf32> -> vector<16x1536xf32>
    %42 = vector.extract_strided_slice %41 {offsets = [0, 0], sizes = [16, 512], strides = [1, 1]} : vector<16x1536xf32> to vector<16x512xf32>
    %43 = vector.shape_cast %42 : vector<16x512xf32> to vector<2x8x512xf32>
    %44 = arith.truncf %43 : vector<2x8x512xf32> to vector<2x8x512xbf16>
    %45 = vector.extract_strided_slice %41 {offsets = [0, 512], sizes = [16, 512], strides = [1, 1]} : vector<16x1536xf32> to vector<16x512xf32>
    %46 = vector.shape_cast %45 : vector<16x512xf32> to vector<2x8x512xf32>
    %47 = arith.truncf %46 : vector<2x8x512xf32> to vector<2x8x512xbf16>
    %48 = vector.extract_strided_slice %41 {offsets = [0, 1024], sizes = [16, 512], strides = [1, 1]} : vector<16x1536xf32> to vector<16x512xf32>
    %49 = vector.shape_cast %48 : vector<16x512xf32> to vector<2x8x512xf32>
    %50 = arith.truncf %49 : vector<2x8x512xf32> to vector<2x8x512xbf16>
    %51 = vector.extract_strided_slice %44 {offsets = [0, 0, 0], sizes = [2, 8, 64], strides = [1, 1, 1]} : vector<2x8x512xbf16> to vector<2x8x64xbf16>
    %52 = vector.extract_strided_slice %47 {offsets = [0, 0, 0], sizes = [2, 8, 64], strides = [1, 1, 1]} : vector<2x8x512xbf16> to vector<2x8x64xbf16>
    %53 = vector.extract_strided_slice %50 {offsets = [0, 0, 0], sizes = [2, 8, 64], strides = [1, 1, 1]} : vector<2x8x512xbf16> to vector<2x8x64xbf16>
    "tpu.trace_start"() <{level = 10 : i32, message = "bqd,bkd->bqk"}> : () -> ()
    %cst_14 = arith.constant dense<0.000000e+00> : vector<2x8x8xf32>
    %54 = tpu.matmul %51, %52, %cst_14 {dimension_numbers = #tpu.dot_dimension_numbers<[2], [2], [1], [1], [0, 0, 0, 1, 1, 1], [0], [0]>} : vector<2x8x64xbf16>, vector<2x8x64xbf16>, vector<2x8x8xf32> -> vector<2x8x8xf32>
    "tpu.trace_stop"() : () -> ()
    %cst_15 = arith.constant dense<0xFF800000> : vector<2x8xf32>
    %55 = vector.multi_reduction <maximumf>, %54, %cst_15 [2] : vector<2x8x8xf32> to vector<2x8xf32>
    %56 = vector.shape_cast %55 : vector<2x8xf32> to vector<2x8x1xf32>
    %57 = vector.broadcast %56 : vector<2x8x1xf32> to vector<2x8x8xf32>
    %58 = arith.subf %54, %57 : vector<2x8x8xf32>
    %59 = math.exp %58 : vector<2x8x8xf32>
    %cst_16 = arith.constant dense<0.000000e+00> : vector<2x8xf32>
    %60 = vector.multi_reduction <add>, %59, %cst_16 [2] : vector<2x8x8xf32> to vector<2x8xf32>
    %61 = vector.shape_cast %60 : vector<2x8xf32> to vector<2x8x1xf32>
    %62 = tpu.reciprocal %61 {approx = true} : vector<2x8x1xf32> -> vector<2x8x1xf32>
    %63 = arith.mulf %61, %62 : vector<2x8x1xf32>
    %cst_17 = arith.constant 2.000000e+00 : f32
    %64 = vector.broadcast %cst_17 : f32 to vector<2x8x1xf32>
    %65 = arith.subf %64, %63 : vector<2x8x1xf32>
    %66 = arith.mulf %62, %65 : vector<2x8x1xf32>
    %67 = vector.broadcast %66 : vector<2x8x1xf32> to vector<2x8x8xf32>
    %68 = arith.mulf %59, %67 : vector<2x8x8xf32>
    %69 = arith.truncf %68 : vector<2x8x8xf32> to vector<2x8x8xbf16>
    "tpu.trace_start"() <{level = 10 : i32, message = "bqk,bkd->bqd"}> : () -> ()
    %cst_18 = arith.constant dense<0.000000e+00> : vector<2x8x64xf32>
    %70 = tpu.matmul %69, %53, %cst_18 {dimension_numbers = #tpu.dot_dimension_numbers<[2], [1], [1], [2], [0, 0, 0, 1, 1, 2], [0], [0]>} : vector<2x8x8xbf16>, vector<2x8x64xbf16>, vector<2x8x64xf32> -> vector<2x8x64xf32>
    "tpu.trace_stop"() : () -> ()
    %71 = vector.shape_cast %70 : vector<2x8x64xf32> to vector<16x64xf32>
    %c0_19 = arith.constant 0 : index
    %c0_20 = arith.constant 0 : index
    %72 = vector.load %arg11[%c0_19, %c0_20] : memref<16x512xf32, #tpu.memory_space<vmem>>, vector<16x64xf32>
    tpu.vector_store %arg11[%c0_19, %c0_20], %71 {strides = array<i32>} : memref<16x512xf32, #tpu.memory_space<vmem>>, vector<16x64xf32>,
    %73 = vector.extract_strided_slice %44 {offsets = [0, 0, 64], sizes = [2, 8, 64], strides = [1, 1, 1]} : vector<2x8x512xbf16> to vector<2x8x64xbf16>
    %74 = vector.extract_strided_slice %47 {offsets = [0, 0, 64], sizes = [2, 8, 64], strides = [1, 1, 1]} : vector<2x8x512xbf16> to vector<2x8x64xbf16>
    %75 = vector.extract_strided_slice %50 {offsets = [0, 0, 64], sizes = [2, 8, 64], strides = [1, 1, 1]} : vector<2x8x512xbf16> to vector<2x8x64xbf16>
    "tpu.trace_start"() <{level = 10 : i32, message = "bqd,bkd->bqk"}> : () -> ()
    %cst_21 = arith.constant dense<0.000000e+00> : vector<2x8x8xf32>
    %76 = tpu.matmul %73, %74, %cst_21 {dimension_numbers = #tpu.dot_dimension_numbers<[2], [2], [1], [1], [0, 0, 0, 1, 1, 1], [0], [0]>} : vector<2x8x64xbf16>, vector<2x8x64xbf16>, vector<2x8x8xf32> -> vector<2x8x8xf32>
    "tpu.trace_stop"() : () -> ()
    %cst_22 = arith.constant dense<0xFF800000> : vector<2x8xf32>
    %77 = vector.multi_reduction <maximumf>, %76, %cst_22 [2] : vector<2x8x8xf32> to vector<2x8xf32>
    %78 = vector.shape_cast %77 : vector<2x8xf32> to vector<2x8x1xf32>
    %79 = vector.broadcast %78 : vector<2x8x1xf32> to vector<2x8x8xf32>
    %80 = arith.subf %76, %79 : vector<2x8x8xf32>
    %81 = math.exp %80 : vector<2x8x8xf32>
    %cst_23 = arith.constant dense<0.000000e+00> : vector<2x8xf32>
    %82 = vector.multi_reduction <add>, %81, %cst_23 [2] : vector<2x8x8xf32> to vector<2x8xf32>
    %83 = vector.shape_cast %82 : vector<2x8xf32> to vector<2x8x1xf32>
    %84 = tpu.reciprocal %83 {approx = true} : vector<2x8x1xf32> -> vector<2x8x1xf32>
    %85 = arith.mulf %83, %84 : vector<2x8x1xf32>
    %cst_24 = arith.constant 2.000000e+00 : f32
    %86 = vector.broadcast %cst_24 : f32 to vector<2x8x1xf32>
    %87 = arith.subf %86, %85 : vector<2x8x1xf32>
    %88 = arith.mulf %84, %87 : vector<2x8x1xf32>
    %89 = vector.broadcast %88 : vector<2x8x1xf32> to vector<2x8x8xf32>
    %90 = arith.mulf %81, %89 : vector<2x8x8xf32>
    %91 = arith.truncf %90 : vector<2x8x8xf32> to vector<2x8x8xbf16>
    "tpu.trace_start"() <{level = 10 : i32, message = "bqk,bkd->bqd"}> : () -> ()
    %cst_25 = arith.constant dense<0.000000e+00> : vector<2x8x64xf32>
    %92 = tpu.matmul %91, %75, %cst_25 {dimension_numbers = #tpu.dot_dimension_numbers<[2], [1], [1], [2], [0, 0, 0, 1, 1, 2], [0], [0]>} : vector<2x8x8xbf16>, vector<2x8x64xbf16>, vector<2x8x64xf32> -> vector<2x8x64xf32>
    "tpu.trace_stop"() : () -> ()
    %93 = vector.shape_cast %92 : vector<2x8x64xf32> to vector<16x64xf32>
    %c0_26 = arith.constant 0 : index
    %c64 = arith.constant 64 : index
    %94 = vector.load %arg11[%c0_26, %c64] : memref<16x512xf32, #tpu.memory_space<vmem>>, vector<16x64xf32>
    tpu.vector_store %arg11[%c0_26, %c64], %93 {strides = array<i32>} : memref<16x512xf32, #tpu.memory_space<vmem>>, vector<16x64xf32>,
    %95 = vector.extract_strided_slice %44 {offsets = [0, 0, 128], sizes = [2, 8, 64], strides = [1, 1, 1]} : vector<2x8x512xbf16> to vector<2x8x64xbf16>
    %96 = vector.extract_strided_slice %47 {offsets = [0, 0, 128], sizes = [2, 8, 64], strides = [1, 1, 1]} : vector<2x8x512xbf16> to vector<2x8x64xbf16>
    %97 = vector.extract_strided_slice %50 {offsets = [0, 0, 128], sizes = [2, 8, 64], strides = [1, 1, 1]} : vector<2x8x512xbf16> to vector<2x8x64xbf16>
    "tpu.trace_start"() <{level = 10 : i32, message = "bqd,bkd->bqk"}> : () -> ()
    %cst_27 = arith.constant dense<0.000000e+00> : vector<2x8x8xf32>
    %98 = tpu.matmul %95, %96, %cst_27 {dimension_numbers = #tpu.dot_dimension_numbers<[2], [2], [1], [1], [0, 0, 0, 1, 1, 1], [0], [0]>} : vector<2x8x64xbf16>, vector<2x8x64xbf16>, vector<2x8x8xf32> -> vector<2x8x8xf32>
    "tpu.trace_stop"() : () -> ()
    %cst_28 = arith.constant dense<0xFF800000> : vector<2x8xf32>
    %99 = vector.multi_reduction <maximumf>, %98, %cst_28 [2] : vector<2x8x8xf32> to vector<2x8xf32>
    %100 = vector.shape_cast %99 : vector<2x8xf32> to vector<2x8x1xf32>
    %101 = vector.broadcast %100 : vector<2x8x1xf32> to vector<2x8x8xf32>
    %102 = arith.subf %98, %101 : vector<2x8x8xf32>
    %103 = math.exp %102 : vector<2x8x8xf32>
    %cst_29 = arith.constant dense<0.000000e+00> : vector<2x8xf32>
    %104 = vector.multi_reduction <add>, %103, %cst_29 [2] : vector<2x8x8xf32> to vector<2x8xf32>
    %105 = vector.shape_cast %104 : vector<2x8xf32> to vector<2x8x1xf32>
    %106 = tpu.reciprocal %105 {approx = true} : vector<2x8x1xf32> -> vector<2x8x1xf32>
    %107 = arith.mulf %105, %106 : vector<2x8x1xf32>
    %cst_30 = arith.constant 2.000000e+00 : f32
    %108 = vector.broadcast %cst_30 : f32 to vector<2x8x1xf32>
    %109 = arith.subf %108, %107 : vector<2x8x1xf32>
    %110 = arith.mulf %106, %109 : vector<2x8x1xf32>
    %111 = vector.broadcast %110 : vector<2x8x1xf32> to vector<2x8x8xf32>
    %112 = arith.mulf %103, %111 : vector<2x8x8xf32>
    %113 = arith.truncf %112 : vector<2x8x8xf32> to vector<2x8x8xbf16>
    "tpu.trace_start"() <{level = 10 : i32, message = "bqk,bkd->bqd"}> : () -> ()
    %cst_31 = arith.constant dense<0.000000e+00> : vector<2x8x64xf32>
    %114 = tpu.matmul %113, %97, %cst_31 {dimension_numbers = #tpu.dot_dimension_numbers<[2], [1], [1], [2], [0, 0, 0, 1, 1, 2], [0], [0]>} : vector<2x8x8xbf16>, vector<2x8x64xbf16>, vector<2x8x64xf32> -> vector<2x8x64xf32>
    "tpu.trace_stop"() : () -> ()
    %115 = vector.shape_cast %114 : vector<2x8x64xf32> to vector<16x64xf32>
    %c0_32 = arith.constant 0 : index
    %c128 = arith.constant 128 : index
    %116 = vector.load %arg11[%c0_32, %c128] : memref<16x512xf32, #tpu.memory_space<vmem>>, vector<16x64xf32>
    tpu.vector_store %arg11[%c0_32, %c128], %115 {strides = array<i32>} : memref<16x512xf32, #tpu.memory_space<vmem>>, vector<16x64xf32>,
    %117 = vector.extract_strided_slice %44 {offsets = [0, 0, 192], sizes = [2, 8, 64], strides = [1, 1, 1]} : vector<2x8x512xbf16> to vector<2x8x64xbf16>
    %118 = vector.extract_strided_slice %47 {offsets = [0, 0, 192], sizes = [2, 8, 64], strides = [1, 1, 1]} : vector<2x8x512xbf16> to vector<2x8x64xbf16>
    %119 = vector.extract_strided_slice %50 {offsets = [0, 0, 192], sizes = [2, 8, 64], strides = [1, 1, 1]} : vector<2x8x512xbf16> to vector<2x8x64xbf16>
    "tpu.trace_start"() <{level = 10 : i32, message = "bqd,bkd->bqk"}> : () -> ()
    %cst_33 = arith.constant dense<0.000000e+00> : vector<2x8x8xf32>
    %120 = tpu.matmul %117, %118, %cst_33 {dimension_numbers = #tpu.dot_dimension_numbers<[2], [2], [1], [1], [0, 0, 0, 1, 1, 1], [0], [0]>} : vector<2x8x64xbf16>, vector<2x8x64xbf16>, vector<2x8x8xf32> -> vector<2x8x8xf32>
    "tpu.trace_stop"() : () -> ()
    %cst_34 = arith.constant dense<0xFF800000> : vector<2x8xf32>
    %121 = vector.multi_reduction <maximumf>, %120, %cst_34 [2] : vector<2x8x8xf32> to vector<2x8xf32>
    %122 = vector.shape_cast %121 : vector<2x8xf32> to vector<2x8x1xf32>
    %123 = vector.broadcast %122 : vector<2x8x1xf32> to vector<2x8x8xf32>
    %124 = arith.subf %120, %123 : vector<2x8x8xf32>
    %125 = math.exp %124 : vector<2x8x8xf32>
    %cst_35 = arith.constant dense<0.000000e+00> : vector<2x8xf32>
    %126 = vector.multi_reduction <add>, %125, %cst_35 [2] : vector<2x8x8xf32> to vector<2x8xf32>
    %127 = vector.shape_cast %126 : vector<2x8xf32> to vector<2x8x1xf32>
    %128 = tpu.reciprocal %127 {approx = true} : vector<2x8x1xf32> -> vector<2x8x1xf32>
    %129 = arith.mulf %127, %128 : vector<2x8x1xf32>
    %cst_36 = arith.constant 2.000000e+00 : f32
    %130 = vector.broadcast %cst_36 : f32 to vector<2x8x1xf32>
    %131 = arith.subf %130, %129 : vector<2x8x1xf32>
    %132 = arith.mulf %128, %131 : vector<2x8x1xf32>
    %133 = vector.broadcast %132 : vector<2x8x1xf32> to vector<2x8x8xf32>
    %134 = arith.mulf %125, %133 : vector<2x8x8xf32>
    %135 = arith.truncf %134 : vector<2x8x8xf32> to vector<2x8x8xbf16>
    "tpu.trace_start"() <{level = 10 : i32, message = "bqk,bkd->bqd"}> : () -> ()
    %cst_37 = arith.constant dense<0.000000e+00> : vector<2x8x64xf32>
    %136 = tpu.matmul %135, %119, %cst_37 {dimension_numbers = #tpu.dot_dimension_numbers<[2], [1], [1], [2], [0, 0, 0, 1, 1, 2], [0], [0]>} : vector<2x8x8xbf16>, vector<2x8x64xbf16>, vector<2x8x64xf32> -> vector<2x8x64xf32>
    "tpu.trace_stop"() : () -> ()
    %137 = vector.shape_cast %136 : vector<2x8x64xf32> to vector<16x64xf32>
    %c0_38 = arith.constant 0 : index
    %c192 = arith.constant 192 : index
    %138 = vector.load %arg11[%c0_38, %c192] : memref<16x512xf32, #tpu.memory_space<vmem>>, vector<16x64xf32>
    tpu.vector_store %arg11[%c0_38, %c192], %137 {strides = array<i32>} : memref<16x512xf32, #tpu.memory_space<vmem>>, vector<16x64xf32>,
    %139 = vector.extract_strided_slice %44 {offsets = [0, 0, 256], sizes = [2, 8, 64], strides = [1, 1, 1]} : vector<2x8x512xbf16> to vector<2x8x64xbf16>
    %140 = vector.extract_strided_slice %47 {offsets = [0, 0, 256], sizes = [2, 8, 64], strides = [1, 1, 1]} : vector<2x8x512xbf16> to vector<2x8x64xbf16>
    %141 = vector.extract_strided_slice %50 {offsets = [0, 0, 256], sizes = [2, 8, 64], strides = [1, 1, 1]} : vector<2x8x512xbf16> to vector<2x8x64xbf16>
    "tpu.trace_start"() <{level = 10 : i32, message = "bqd,bkd->bqk"}> : () -> ()
    %cst_39 = arith.constant dense<0.000000e+00> : vector<2x8x8xf32>
    %142 = tpu.matmul %139, %140, %cst_39 {dimension_numbers = #tpu.dot_dimension_numbers<[2], [2], [1], [1], [0, 0, 0, 1, 1, 1], [0], [0]>} : vector<2x8x64xbf16>, vector<2x8x64xbf16>, vector<2x8x8xf32> -> vector<2x8x8xf32>
    "tpu.trace_stop"() : () -> ()
    %cst_40 = arith.constant dense<0xFF800000> : vector<2x8xf32>
    %143 = vector.multi_reduction <maximumf>, %142, %cst_40 [2] : vector<2x8x8xf32> to vector<2x8xf32>
    %144 = vector.shape_cast %143 : vector<2x8xf32> to vector<2x8x1xf32>
    %145 = vector.broadcast %144 : vector<2x8x1xf32> to vector<2x8x8xf32>
    %146 = arith.subf %142, %145 : vector<2x8x8xf32>
    %147 = math.exp %146 : vector<2x8x8xf32>
    %cst_41 = arith.constant dense<0.000000e+00> : vector<2x8xf32>
    %148 = vector.multi_reduction <add>, %147, %cst_41 [2] : vector<2x8x8xf32> to vector<2x8xf32>
    %149 = vector.shape_cast %148 : vector<2x8xf32> to vector<2x8x1xf32>
    %150 = tpu.reciprocal %149 {approx = true} : vector<2x8x1xf32> -> vector<2x8x1xf32>
    %151 = arith.mulf %149, %150 : vector<2x8x1xf32>
    %cst_42 = arith.constant 2.000000e+00 : f32
    %152 = vector.broadcast %cst_42 : f32 to vector<2x8x1xf32>
    %153 = arith.subf %152, %151 : vector<2x8x1xf32>
    %154 = arith.mulf %150, %153 : vector<2x8x1xf32>
    %155 = vector.broadcast %154 : vector<2x8x1xf32> to vector<2x8x8xf32>
    %156 = arith.mulf %147, %155 : vector<2x8x8xf32>
    %157 = arith.truncf %156 : vector<2x8x8xf32> to vector<2x8x8xbf16>
    "tpu.trace_start"() <{level = 10 : i32, message = "bqk,bkd->bqd"}> : () -> ()
    %cst_43 = arith.constant dense<0.000000e+00> : vector<2x8x64xf32>
    %158 = tpu.matmul %157, %141, %cst_43 {dimension_numbers = #tpu.dot_dimension_numbers<[2], [1], [1], [2], [0, 0, 0, 1, 1, 2], [0], [0]>} : vector<2x8x8xbf16>, vector<2x8x64xbf16>, vector<2x8x64xf32> -> vector<2x8x64xf32>
    "tpu.trace_stop"() : () -> ()
    %159 = vector.shape_cast %158 : vector<2x8x64xf32> to vector<16x64xf32>
    %c0_44 = arith.constant 0 : index
    %c256 = arith.constant 256 : index
    %160 = vector.load %arg11[%c0_44, %c256] : memref<16x512xf32, #tpu.memory_space<vmem>>, vector<16x64xf32>
    tpu.vector_store %arg11[%c0_44, %c256], %159 {strides = array<i32>} : memref<16x512xf32, #tpu.memory_space<vmem>>, vector<16x64xf32>,
    %161 = vector.extract_strided_slice %44 {offsets = [0, 0, 320], sizes = [2, 8, 64], strides = [1, 1, 1]} : vector<2x8x512xbf16> to vector<2x8x64xbf16>
    %162 = vector.extract_strided_slice %47 {offsets = [0, 0, 320], sizes = [2, 8, 64], strides = [1, 1, 1]} : vector<2x8x512xbf16> to vector<2x8x64xbf16>
    %163 = vector.extract_strided_slice %50 {offsets = [0, 0, 320], sizes = [2, 8, 64], strides = [1, 1, 1]} : vector<2x8x512xbf16> to vector<2x8x64xbf16>
    "tpu.trace_start"() <{level = 10 : i32, message = "bqd,bkd->bqk"}> : () -> ()
    %cst_45 = arith.constant dense<0.000000e+00> : vector<2x8x8xf32>
    %164 = tpu.matmul %161, %162, %cst_45 {dimension_numbers = #tpu.dot_dimension_numbers<[2], [2], [1], [1], [0, 0, 0, 1, 1, 1], [0], [0]>} : vector<2x8x64xbf16>, vector<2x8x64xbf16>, vector<2x8x8xf32> -> vector<2x8x8xf32>
    "tpu.trace_stop"() : () -> ()
    %cst_46 = arith.constant dense<0xFF800000> : vector<2x8xf32>
    %165 = vector.multi_reduction <maximumf>, %164, %cst_46 [2] : vector<2x8x8xf32> to vector<2x8xf32>
    %166 = vector.shape_cast %165 : vector<2x8xf32> to vector<2x8x1xf32>
    %167 = vector.broadcast %166 : vector<2x8x1xf32> to vector<2x8x8xf32>
    %168 = arith.subf %164, %167 : vector<2x8x8xf32>
    %169 = math.exp %168 : vector<2x8x8xf32>
    %cst_47 = arith.constant dense<0.000000e+00> : vector<2x8xf32>
    %170 = vector.multi_reduction <add>, %169, %cst_47 [2] : vector<2x8x8xf32> to vector<2x8xf32>
    %171 = vector.shape_cast %170 : vector<2x8xf32> to vector<2x8x1xf32>
    %172 = tpu.reciprocal %171 {approx = true} : vector<2x8x1xf32> -> vector<2x8x1xf32>
    %173 = arith.mulf %171, %172 : vector<2x8x1xf32>
    %cst_48 = arith.constant 2.000000e+00 : f32
    %174 = vector.broadcast %cst_48 : f32 to vector<2x8x1xf32>
    %175 = arith.subf %174, %173 : vector<2x8x1xf32>
    %176 = arith.mulf %172, %175 : vector<2x8x1xf32>
    %177 = vector.broadcast %176 : vector<2x8x1xf32> to vector<2x8x8xf32>
    %178 = arith.mulf %169, %177 : vector<2x8x8xf32>
    %179 = arith.truncf %178 : vector<2x8x8xf32> to vector<2x8x8xbf16>
    "tpu.trace_start"() <{level = 10 : i32, message = "bqk,bkd->bqd"}> : () -> ()
    %cst_49 = arith.constant dense<0.000000e+00> : vector<2x8x64xf32>
    %180 = tpu.matmul %179, %163, %cst_49 {dimension_numbers = #tpu.dot_dimension_numbers<[2], [1], [1], [2], [0, 0, 0, 1, 1, 2], [0], [0]>} : vector<2x8x8xbf16>, vector<2x8x64xbf16>, vector<2x8x64xf32> -> vector<2x8x64xf32>
    "tpu.trace_stop"() : () -> ()
    %181 = vector.shape_cast %180 : vector<2x8x64xf32> to vector<16x64xf32>
    %c0_50 = arith.constant 0 : index
    %c320 = arith.constant 320 : index
    %182 = vector.load %arg11[%c0_50, %c320] : memref<16x512xf32, #tpu.memory_space<vmem>>, vector<16x64xf32>
    tpu.vector_store %arg11[%c0_50, %c320], %181 {strides = array<i32>} : memref<16x512xf32, #tpu.memory_space<vmem>>, vector<16x64xf32>,
    %183 = vector.extract_strided_slice %44 {offsets = [0, 0, 384], sizes = [2, 8, 64], strides = [1, 1, 1]} : vector<2x8x512xbf16> to vector<2x8x64xbf16>
    %184 = vector.extract_strided_slice %47 {offsets = [0, 0, 384], sizes = [2, 8, 64], strides = [1, 1, 1]} : vector<2x8x512xbf16> to vector<2x8x64xbf16>
    %185 = vector.extract_strided_slice %50 {offsets = [0, 0, 384], sizes = [2, 8, 64], strides = [1, 1, 1]} : vector<2x8x512xbf16> to vector<2x8x64xbf16>
    "tpu.trace_start"() <{level = 10 : i32, message = "bqd,bkd->bqk"}> : () -> ()
    %cst_51 = arith.constant dense<0.000000e+00> : vector<2x8x8xf32>
    %186 = tpu.matmul %183, %184, %cst_51 {dimension_numbers = #tpu.dot_dimension_numbers<[2], [2], [1], [1], [0, 0, 0, 1, 1, 1], [0], [0]>} : vector<2x8x64xbf16>, vector<2x8x64xbf16>, vector<2x8x8xf32> -> vector<2x8x8xf32>
    "tpu.trace_stop"() : () -> ()
    %cst_52 = arith.constant dense<0xFF800000> : vector<2x8xf32>
    %187 = vector.multi_reduction <maximumf>, %186, %cst_52 [2] : vector<2x8x8xf32> to vector<2x8xf32>
    %188 = vector.shape_cast %187 : vector<2x8xf32> to vector<2x8x1xf32>
    %189 = vector.broadcast %188 : vector<2x8x1xf32> to vector<2x8x8xf32>
    %190 = arith.subf %186, %189 : vector<2x8x8xf32>
    %191 = math.exp %190 : vector<2x8x8xf32>
    %cst_53 = arith.constant dense<0.000000e+00> : vector<2x8xf32>
    %192 = vector.multi_reduction <add>, %191, %cst_53 [2] : vector<2x8x8xf32> to vector<2x8xf32>
    %193 = vector.shape_cast %192 : vector<2x8xf32> to vector<2x8x1xf32>
    %194 = tpu.reciprocal %193 {approx = true} : vector<2x8x1xf32> -> vector<2x8x1xf32>
    %195 = arith.mulf %193, %194 : vector<2x8x1xf32>
    %cst_54 = arith.constant 2.000000e+00 : f32
    %196 = vector.broadcast %cst_54 : f32 to vector<2x8x1xf32>
    %197 = arith.subf %196, %195 : vector<2x8x1xf32>
    %198 = arith.mulf %194, %197 : vector<2x8x1xf32>
    %199 = vector.broadcast %198 : vector<2x8x1xf32> to vector<2x8x8xf32>
    %200 = arith.mulf %191, %199 : vector<2x8x8xf32>
    %201 = arith.truncf %200 : vector<2x8x8xf32> to vector<2x8x8xbf16>
    "tpu.trace_start"() <{level = 10 : i32, message = "bqk,bkd->bqd"}> : () -> ()
    %cst_55 = arith.constant dense<0.000000e+00> : vector<2x8x64xf32>
    %202 = tpu.matmul %201, %185, %cst_55 {dimension_numbers = #tpu.dot_dimension_numbers<[2], [1], [1], [2], [0, 0, 0, 1, 1, 2], [0], [0]>} : vector<2x8x8xbf16>, vector<2x8x64xbf16>, vector<2x8x64xf32> -> vector<2x8x64xf32>
    "tpu.trace_stop"() : () -> ()
    %203 = vector.shape_cast %202 : vector<2x8x64xf32> to vector<16x64xf32>
    %c0_56 = arith.constant 0 : index
    %c384 = arith.constant 384 : index
    %204 = vector.load %arg11[%c0_56, %c384] : memref<16x512xf32, #tpu.memory_space<vmem>>, vector<16x64xf32>
    tpu.vector_store %arg11[%c0_56, %c384], %203 {strides = array<i32>} : memref<16x512xf32, #tpu.memory_space<vmem>>, vector<16x64xf32>,
    %205 = vector.extract_strided_slice %44 {offsets = [0, 0, 448], sizes = [2, 8, 64], strides = [1, 1, 1]} : vector<2x8x512xbf16> to vector<2x8x64xbf16>
    %206 = vector.extract_strided_slice %47 {offsets = [0, 0, 448], sizes = [2, 8, 64], strides = [1, 1, 1]} : vector<2x8x512xbf16> to vector<2x8x64xbf16>
    %207 = vector.extract_strided_slice %50 {offsets = [0, 0, 448], sizes = [2, 8, 64], strides = [1, 1, 1]} : vector<2x8x512xbf16> to vector<2x8x64xbf16>
    "tpu.trace_start"() <{level = 10 : i32, message = "bqd,bkd->bqk"}> : () -> ()
    %cst_57 = arith.constant dense<0.000000e+00> : vector<2x8x8xf32>
    %208 = tpu.matmul %205, %206, %cst_57 {dimension_numbers = #tpu.dot_dimension_numbers<[2], [2], [1], [1], [0, 0, 0, 1, 1, 1], [0], [0]>} : vector<2x8x64xbf16>, vector<2x8x64xbf16>, vector<2x8x8xf32> -> vector<2x8x8xf32>
    "tpu.trace_stop"() : () -> ()
    %cst_58 = arith.constant dense<0xFF800000> : vector<2x8xf32>
    %209 = vector.multi_reduction <maximumf>, %208, %cst_58 [2] : vector<2x8x8xf32> to vector<2x8xf32>
    %210 = vector.shape_cast %209 : vector<2x8xf32> to vector<2x8x1xf32>
    %211 = vector.broadcast %210 : vector<2x8x1xf32> to vector<2x8x8xf32>
    %212 = arith.subf %208, %211 : vector<2x8x8xf32>
    %213 = math.exp %212 : vector<2x8x8xf32>
    %cst_59 = arith.constant dense<0.000000e+00> : vector<2x8xf32>
    %214 = vector.multi_reduction <add>, %213, %cst_59 [2] : vector<2x8x8xf32> to vector<2x8xf32>
    %215 = vector.shape_cast %214 : vector<2x8xf32> to vector<2x8x1xf32>
    %216 = tpu.reciprocal %215 {approx = true} : vector<2x8x1xf32> -> vector<2x8x1xf32>
    %217 = arith.mulf %215, %216 : vector<2x8x1xf32>
    %cst_60 = arith.constant 2.000000e+00 : f32
    %218 = vector.broadcast %cst_60 : f32 to vector<2x8x1xf32>
    %219 = arith.subf %218, %217 : vector<2x8x1xf32>
    %220 = arith.mulf %216, %219 : vector<2x8x1xf32>
    %221 = vector.broadcast %220 : vector<2x8x1xf32> to vector<2x8x8xf32>
    %222 = arith.mulf %213, %221 : vector<2x8x8xf32>
    %223 = arith.truncf %222 : vector<2x8x8xf32> to vector<2x8x8xbf16>
    "tpu.trace_start"() <{level = 10 : i32, message = "bqk,bkd->bqd"}> : () -> ()
    %cst_61 = arith.constant dense<0.000000e+00> : vector<2x8x64xf32>
    %224 = tpu.matmul %223, %207, %cst_61 {dimension_numbers = #tpu.dot_dimension_numbers<[2], [1], [1], [2], [0, 0, 0, 1, 1, 2], [0], [0]>} : vector<2x8x8xbf16>, vector<2x8x64xbf16>, vector<2x8x64xf32> -> vector<2x8x64xf32>
    "tpu.trace_stop"() : () -> ()
    %225 = vector.shape_cast %224 : vector<2x8x64xf32> to vector<16x64xf32>
    %c0_62 = arith.constant 0 : index
    %c448 = arith.constant 448 : index
    %226 = vector.load %arg11[%c0_62, %c448] : memref<16x512xf32, #tpu.memory_space<vmem>>, vector<16x64xf32>
    tpu.vector_store %arg11[%c0_62, %c448], %225 {strides = array<i32>} : memref<16x512xf32, #tpu.memory_space<vmem>>, vector<16x64xf32>,
    %c0_63 = arith.constant 0 : index
    %c0_64 = arith.constant 0 : index
    %227 = vector.load %arg11[%c0_63, %c0_64] : memref<16x512xf32, #tpu.memory_space<vmem>>, vector<16x512xf32>
    %228 = arith.truncf %227 : vector<16x512xf32> to vector<16x512xbf16>
    %c0_65 = arith.constant 0 : index
    %c0_66 = arith.constant 0 : index
    %c0_67 = arith.constant 0 : index
    %229 = vector.load %arg7[%c0_65, %c0_66, %c0_67] : memref<1x512x64xbf16, #tpu.memory_space<vmem>>, vector<1x512x64xbf16>
    %230 = vector.shape_cast %229 : vector<1x512x64xbf16> to vector<512x64xbf16>
    %cst_68 = arith.constant dense<0.000000e+00> : vector<16x64xf32>
    %231 = tpu.matmul %228, %230, %cst_68 {dimension_numbers = #tpu.dot_dimension_numbers<[1], [0], [0], [1], [0, 0, 1, 1], [], []>} : vector<16x512xbf16>, vector<512x64xbf16>, vector<16x64xf32> -> vector<16x64xf32>
    %232 = vector.broadcast %11 : vector<1x64xf32> to vector<16x64xf32>
    %233 = arith.addf %231, %232 : vector<16x64xf32>
    %234 = arith.addf %3, %233 : vector<16x64xf32>
    %cst_69 = arith.constant dense<0.000000e+00> : vector<16xf32>
    %235 = vector.multi_reduction <add>, %234, %cst_69 [1] : vector<16x64xf32> to vector<16xf32>
    %236 = vector.shape_cast %235 : vector<16xf32> to vector<16x1xf32>
    %cst_70 = arith.constant 6.400000e+01 : f32
    %237 = vector.broadcast %cst_70 : f32 to vector<16x1xf32>
    %238 = arith.divf %236, %237 : vector<16x1xf32>
    %239 = vector.broadcast %238 : vector<16x1xf32> to vector<16x64xf32>
    %240 = arith.subf %234, %239 : vector<16x64xf32>
    %241 = arith.mulf %240, %240 : vector<16x64xf32>
    %cst_71 = arith.constant dense<0.000000e+00> : vector<16xf32>
    %242 = vector.multi_reduction <add>, %241, %cst_71 [1] : vector<16x64xf32> to vector<16xf32>
    %243 = vector.shape_cast %242 : vector<16xf32> to vector<16x1xf32>
    %cst_72 = arith.constant 6.400000e+01 : f32
    %244 = vector.broadcast %cst_72 : f32 to vector<16x1xf32>
    %245 = arith.divf %243, %244 : vector<16x1xf32>
    %cst_73 = arith.constant 9.99999974E-6 : f32
    %246 = vector.broadcast %cst_73 : f32 to vector<16x1xf32>
    %247 = arith.addf %245, %246 : vector<16x1xf32>
    %248 = math.rsqrt %247 : vector<16x1xf32>
    %249 = vector.broadcast %238 : vector<16x1xf32> to vector<16x64xf32>
    %250 = arith.subf %234, %249 : vector<16x64xf32>
    %251 = vector.broadcast %248 : vector<16x1xf32> to vector<16x64xf32>
    %252 = arith.mulf %250, %251 : vector<16x64xf32>
    %253 = vector.broadcast %9 : vector<1x64xf32> to vector<16x64xf32>
    %254 = arith.mulf %252, %253 : vector<16x64xf32>
    %255 = vector.broadcast %10 : vector<1x64xf32> to vector<16x64xf32>
    %256 = arith.addf %254, %255 : vector<16x64xf32>
    %257 = arith.truncf %256 : vector<16x64xf32> to vector<16x64xbf16>
    %c0_74 = arith.constant 0 : index
    %c0_75 = arith.constant 0 : index
    %c0_76 = arith.constant 0 : index
    %258 = vector.load %arg8[%c0_74, %c0_75, %c0_76] : memref<1x64x256xbf16, #tpu.memory_space<vmem>>, vector<1x64x256xbf16>
    %259 = vector.shape_cast %258 : vector<1x64x256xbf16> to vector<64x256xbf16>
    %cst_77 = arith.constant dense<0.000000e+00> : vector<16x256xf32>
    %260 = tpu.matmul %257, %259, %cst_77 {dimension_numbers = #tpu.dot_dimension_numbers<[1], [0], [0], [1], [0, 0, 1, 1], [], []>} : vector<16x64xbf16>, vector<64x256xbf16>, vector<16x256xf32> -> vector<16x256xf32>
    %261 = vector.broadcast %15 : vector<1x256xf32> to vector<16x256xf32>
    %262 = arith.addf %260, %261 : vector<16x256xf32>
    %cst_78 = arith.constant 5.000000e-01 : f32
    %263 = vector.broadcast %cst_78 : f32 to vector<16x256xf32>
    %264 = arith.mulf %263, %262 : vector<16x256xf32>
    %cst_79 = arith.constant 0.707106769 : f32
    %265 = vector.broadcast %cst_79 : f32 to vector<16x256xf32>
    %266 = arith.mulf %262, %265 : vector<16x256xf32>
    %cst_80 = arith.constant 0.000000e+00 : f32
    %267 = vector.broadcast %cst_80 : f32 to vector<16x256xf32>
    %268 = arith.cmpf oge, %266, %267 : vector<16x256xf32>
    %cst_81 = arith.constant 1.000000e+00 : f32
    %cst_82 = arith.constant -1.000000e+00 : f32
    %269 = vector.broadcast %cst_81 : f32 to vector<16x256xf32>
    %270 = vector.broadcast %cst_82 : f32 to vector<16x256xf32>
    %271 = arith.select %268, %269, %270 : vector<16x256xi1>, vector<16x256xf32>
    %272 = math.absf %266 : vector<16x256xf32>
    %cst_83 = arith.constant 0.327591091 : f32
    %273 = vector.broadcast %cst_83 : f32 to vector<16x256xf32>
    %274 = arith.mulf %273, %272 : vector<16x256xf32>
    %cst_84 = arith.constant 1.000000e+00 : f32
    %275 = vector.broadcast %cst_84 : f32 to vector<16x256xf32>
    %276 = arith.addf %275, %274 : vector<16x256xf32>
    %cst_85 = arith.constant 1.000000e+00 : f32
    %277 = vector.broadcast %cst_85 : f32 to vector<16x256xf32>
    %278 = arith.divf %277, %276 : vector<16x256xf32>
    %cst_86 = arith.constant 1.06140542 : f32
    %279 = vector.broadcast %cst_86 : f32 to vector<16x256xf32>
    %280 = arith.mulf %279, %278 : vector<16x256xf32>
    %cst_87 = arith.constant -1.45315206 : f32
    %281 = vector.broadcast %cst_87 : f32 to vector<16x256xf32>
    %282 = arith.addf %280, %281 : vector<16x256xf32>
    %283 = arith.mulf %282, %278 : vector<16x256xf32>
    %cst_88 = arith.constant 1.42141378 : f32
    %284 = vector.broadcast %cst_88 : f32 to vector<16x256xf32>
    %285 = arith.addf %283, %284 : vector<16x256xf32>
    %286 = arith.mulf %285, %278 : vector<16x256xf32>
    %cst_89 = arith.constant -0.284496725 : f32
    %287 = vector.broadcast %cst_89 : f32 to vector<16x256xf32>
    %288 = arith.addf %286, %287 : vector<16x256xf32>
    %289 = arith.mulf %288, %278 : vector<16x256xf32>
    %cst_90 = arith.constant 0.254829586 : f32
    %290 = vector.broadcast %cst_90 : f32 to vector<16x256xf32>
    %291 = arith.addf %289, %290 : vector<16x256xf32>
    %292 = arith.mulf %291, %278 : vector<16x256xf32>
    %cst_91 = arith.constant 0.000000e+00 : f32
    %293 = vector.broadcast %cst_91 : f32 to vector<16x256xf32>
    %294 = arith.subf %293, %272 : vector<16x256xf32>
    %295 = arith.mulf %294, %272 : vector<16x256xf32>
    %296 = math.exp %295 : vector<16x256xf32>
    %297 = arith.mulf %292, %296 : vector<16x256xf32>
    %cst_92 = arith.constant 1.000000e+00 : f32
    %298 = vector.broadcast %cst_92 : f32 to vector<16x256xf32>
    %299 = arith.subf %298, %297 : vector<16x256xf32>
    %300 = arith.mulf %271, %299 : vector<16x256xf32>
    %cst_93 = arith.constant 1.000000e+00 : f32
    %301 = vector.broadcast %cst_93 : f32 to vector<16x256xf32>
    %302 = arith.addf %301, %300 : vector<16x256xf32>
    %303 = arith.mulf %264, %302 : vector<16x256xf32>
    %304 = arith.truncf %303 : vector<16x256xf32> to vector<16x256xbf16>
    %c0_94 = arith.constant 0 : index
    %c0_95 = arith.constant 0 : index
    %c0_96 = arith.constant 0 : index
    %305 = vector.load %arg9[%c0_94, %c0_95, %c0_96] : memref<1x256x64xbf16, #tpu.memory_space<vmem>>, vector<1x256x64xbf16>
    %306 = vector.shape_cast %305 : vector<1x256x64xbf16> to vector<256x64xbf16>
    %cst_97 = arith.constant dense<0.000000e+00> : vector<16x64xf32>
    %307 = tpu.matmul %304, %306, %cst_97 {dimension_numbers = #tpu.dot_dimension_numbers<[1], [0], [0], [1], [0, 0, 1, 1], [], []>} : vector<16x256xbf16>, vector<256x64xbf16>, vector<16x64xf32> -> vector<16x64xf32>
    %308 = vector.broadcast %12 : vector<1x64xf32> to vector<16x64xf32>
    %309 = arith.addf %307, %308 : vector<16x64xf32>
    %310 = arith.addf %234, %309 : vector<16x64xf32>
    %c1_i32 = arith.constant 1 : i32
    %311 = arith.cmpi slt, %arg1, %c1_i32 : i32
    %312 = arith.extui %311 : i1 to i32
    %c0_i32_98 = arith.constant 0 : i32
    %313 = arith.cmpi ne, %312, %c0_i32_98 : i32
    scf.if %313 {
      %c0_101 = arith.constant 0 : index
      %c0_102 = arith.constant 0 : index
      %317 = vector.load %arg10[%c0_101, %c0_102] : memref<16x64xf32, #tpu.memory_space<vmem>>, vector<16x64xf32>
      tpu.vector_store %arg10[%c0_101, %c0_102], %310 {strides = array<i32>} : memref<16x64xf32, #tpu.memory_space<vmem>>, vector<16x64xf32>,
    } else {
    }
    %c1_i32_99 = arith.constant 1 : i32
    %314 = arith.cmpi eq, %arg1, %c1_i32_99 : i32
    %315 = arith.extui %314 : i1 to i32
    %c0_i32_100 = arith.constant 0 : i32
    %316 = arith.cmpi ne, %315, %c0_i32_100 : i32
    scf.if %316 {
      %c0_101 = arith.constant 0 : index
      %c0_102 = arith.constant 0 : index
      %317 = vector.load %arg5[%c0_101, %c0_102] : memref<2x64xf32, #tpu.memory_space<vmem>>, vector<1x64xf32>
      %c1 = arith.constant 1 : index
      %c0_103 = arith.constant 0 : index
      %318 = vector.load %arg5[%c1, %c0_103] : memref<2x64xf32, #tpu.memory_space<vmem>>, vector<1x64xf32>
      %cst_104 = arith.constant dense<0.000000e+00> : vector<16xf32>
      %319 = vector.multi_reduction <add>, %310, %cst_104 [1] : vector<16x64xf32> to vector<16xf32>
      %320 = vector.shape_cast %319 : vector<16xf32> to vector<16x1xf32>
      %cst_105 = arith.constant 6.400000e+01 : f32
      %321 = vector.broadcast %cst_105 : f32 to vector<16x1xf32>
      %322 = arith.divf %320, %321 : vector<16x1xf32>
      %323 = vector.broadcast %322 : vector<16x1xf32> to vector<16x64xf32>
      %324 = arith.subf %310, %323 : vector<16x64xf32>
      %325 = arith.mulf %324, %324 : vector<16x64xf32>
      %cst_106 = arith.constant dense<0.000000e+00> : vector<16xf32>
      %326 = vector.multi_reduction <add>, %325, %cst_106 [1] : vector<16x64xf32> to vector<16xf32>
      %327 = vector.shape_cast %326 : vector<16xf32> to vector<16x1xf32>
      %cst_107 = arith.constant 6.400000e+01 : f32
      %328 = vector.broadcast %cst_107 : f32 to vector<16x1xf32>
      %329 = arith.divf %327, %328 : vector<16x1xf32>
      %cst_108 = arith.constant 9.99999974E-6 : f32
      %330 = vector.broadcast %cst_108 : f32 to vector<16x1xf32>
      %331 = arith.addf %329, %330 : vector<16x1xf32>
      %332 = math.rsqrt %331 : vector<16x1xf32>
      %333 = vector.broadcast %322 : vector<16x1xf32> to vector<16x64xf32>
      %334 = arith.subf %310, %333 : vector<16x64xf32>
      %335 = vector.broadcast %332 : vector<16x1xf32> to vector<16x64xf32>
      %336 = arith.mulf %334, %335 : vector<16x64xf32>
      %337 = vector.broadcast %317 : vector<1x64xf32> to vector<16x64xf32>
      %338 = arith.mulf %336, %337 : vector<16x64xf32>
      %339 = vector.broadcast %318 : vector<1x64xf32> to vector<16x64xf32>
      %340 = arith.addf %338, %339 : vector<16x64xf32>
      %c0_109 = arith.constant 0 : index
      %c0_110 = arith.constant 0 : index
      %341 = vector.load %arg10[%c0_109, %c0_110] : memref<16x64xf32, #tpu.memory_space<vmem>>, vector<16x64xf32>
      tpu.vector_store %arg10[%c0_109, %c0_110], %340 {strides = array<i32>} : memref<16x64xf32, #tpu.memory_space<vmem>>, vector<16x64xf32>,
    } else {
    }
    return
  }
  func.func @transform_0(%arg0: i32, %arg1: i32) -> (i32, i32) {
    %c0_i32 = arith.constant 0 : i32
    %c0_i32_0 = arith.constant 0 : i32
    return %arg0, %c0_i32 : i32, i32
  }
  func.func @transform_1(%arg0: i32, %arg1: i32) -> (i32, i32, i32) {
    %c0_i32 = arith.constant 0 : i32
    %c0_i32_0 = arith.constant 0 : i32
    %c0_i32_1 = arith.constant 0 : i32
    %c0_i32_2 = arith.constant 0 : i32
    return %c0_i32, %c0_i32_0, %c0_i32_1 : i32, i32, i32
  }
  func.func @transform_2(%arg0: i32, %arg1: i32) -> (i32, i32, i32) {
    %c0_i32 = arith.constant 0 : i32
    %c0_i32_0 = arith.constant 0 : i32
    %c0_i32_1 = arith.constant 0 : i32
    %c0_i32_2 = arith.constant 0 : i32
    return %c0_i32, %c0_i32_0, %c0_i32_1 : i32, i32, i32
  }
  func.func @transform_3(%arg0: i32, %arg1: i32) -> (i32, i32) {
    %c0_i32 = arith.constant 0 : i32
    %c0_i32_0 = arith.constant 0 : i32
    %c0_i32_1 = arith.constant 0 : i32
    return %c0_i32, %c0_i32_0 : i32, i32
  }
  func.func @transform_4(%arg0: i32, %arg1: i32) -> (i32, i32, i32) {
    %c0_i32 = arith.constant 0 : i32
    %c0_i32_0 = arith.constant 0 : i32
    %c0_i32_1 = arith.constant 0 : i32
    return %arg1, %c0_i32, %c0_i32_0 : i32, i32, i32
  }
  func.func @transform_5(%arg0: i32, %arg1: i32) -> (i32, i32, i32) {
    %c0_i32 = arith.constant 0 : i32
    %c0_i32_0 = arith.constant 0 : i32
    %c0_i32_1 = arith.constant 0 : i32
    return %arg1, %c0_i32, %c0_i32_0 : i32, i32, i32
  }
  func.func @transform_6(%arg0: i32, %arg1: i32) -> (i32, i32, i32) {
    %c0_i32 = arith.constant 0 : i32
    %c0_i32_0 = arith.constant 0 : i32
    %c0_i32_1 = arith.constant 0 : i32
    return %arg1, %c0_i32, %c0_i32_0 : i32, i32, i32
  }
  func.func @transform_7(%arg0: i32, %arg1: i32) -> (i32, i32, i32) {
    %c0_i32 = arith.constant 0 : i32
    %c0_i32_0 = arith.constant 0 : i32
    %c0_i32_1 = arith.constant 0 : i32
    return %arg1, %c0_i32, %c0_i32_0 : i32, i32, i32
  }
  func.func @transform_8(%arg0: i32, %arg1: i32) -> (i32, i32) {
    %c0_i32 = arith.constant 0 : i32
    %c0_i32_0 = arith.constant 0 : i32
    return %arg0, %c0_i32 : i32, i32
  }
}

</mosaic_0001>

<llo_original>
// kernel: transformer_embedder_forward.1
$region0: #{transformer_embedder_forward.1}
  #allocation0 [shape = 'u32[]', space=smem, size = 0x4, offset = 0x4, fixed_abs, tag = 'smem constant byte address 0x4 - core index']
  #allocation1 [shape = 'u32[144,128]{1,0:T(1,128)}', space=vmem, size = 0x12000, scoped, tag = 'internal scratch']
  #allocation2 [shape = 'f32[16,512]{1,0:T(8,128)}', space=vmem, size = 0x8000, scoped, tag = 'scratch operand']
  %s0 = inlined_call_operand.vmem [shape: f32[16,64], index: 0, kind: input, shape index: {}]
  %s1 = inlined_call_operand.vmem [shape: f32[2,6,64], index: 1, kind: input, shape index: {}]
  %s2 = inlined_call_operand.vmem [shape: f32[2,1,256], index: 2, kind: input, shape index: {}]
  %s3 = inlined_call_operand.vmem [shape: f32[2,64], index: 3, kind: input, shape index: {}]
  %s4 = inlined_call_operand.vmem [shape: bf16[2,64,1536], index: 4, kind: input, shape index: {}]
  %s5 = inlined_call_operand.vmem [shape: bf16[2,512,64], index: 5, kind: input, shape index: {}]
  %s6 = inlined_call_operand.vmem [shape: bf16[2,64,256], index: 6, kind: input, shape index: {}]
  %s7 = inlined_call_operand.vmem [shape: bf16[2,256,64], index: 7, kind: input, shape index: {}]
  %s8 = inlined_call_operand.hbm [shape: f32[16,64], index: 8, kind: output, shape index: {}]
  %s9 = sld [smem:[#allocation0]]
  $region77: #{transformer_embedder_forward.1} parent=0
    _
  %s11 = ssub.s32 1, %s9
  %s12 = scalar_select 0, %s11, %s9
  $region1: #{transformer_embedder_forward.1} parent=0
    #allocation3 [shape = 'u8[8192]{0}', space=vmem, size = 0x2000, scoped, tag = 'output window, operand 0, single buffered']
    #allocation4 [shape = 's32[2]{0}', space=sflag, size = 0x8, scoped, tag = 'scoped memory for transformer_embedder_forward.1']
    %13 = vsyncpa [#allocation4], 0
    loop: start=0, step=1, limit=4
    $region2: #{transformer_embedder_forward.1} parent=1 // loop_pre_header
      _
    $region3: #{transformer_embedder_forward.1} parent=1 // loop_header
      %s15 = sphi 0, %s19
      %p16 = scmp.ge.s32.totalorder %s15, 4
      %s22 = sphi 0, %s34
      %s23 = sphi 0, %s30
      %s24 = sphi 0, %s22
      %s25 = sphi 0, %s23
      %s26 = sphi 0, %s24
      %s27 = sphi 0, %s25
      %s37 = sphi 0, %s39
      %s40 = sphi 0, %s37
      %s41 = sphi 0, %s40
      %s57 = sphi 0, %s41
      %s61 = sphi 0, %s61
      %s63 = sphi 0, %s61
      %s64 = sphi 0, %s63
      %s78 = sphi 0, %s64
      %s82 = sphi 0, %s82
      %s84 = sphi 0, %s82
      %s85 = sphi 0, %s84
      %s99 = sphi 0, %s85
      %s103 = sphi 0, %s103
      %s105 = sphi 0, %s103
      %s106 = sphi 0, %s105
      %s120 = sphi 0, %s106
      %s126 = sphi 0, %s128
      %s129 = sphi 0, %s126
      %s130 = sphi 0, %s129
      %s146 = sphi 0, %s130
      %s152 = sphi 0, %s154
      %s155 = sphi 0, %s152
      %s156 = sphi 0, %s155
      %s172 = sphi 0, %s156
      %s178 = sphi 0, %s180
      %s181 = sphi 0, %s178
      %s182 = sphi 0, %s181
      %s198 = sphi 0, %s182
      %s204 = sphi 0, %s206
      %s207 = sphi 0, %s204
      %s208 = sphi 0, %s207
      %s224 = sphi 0, %s208
      %s230 = sphi 0, %s232
      %s233 = sphi 0, %s230
      %s234 = sphi 0, %s233
      %s250 = sphi 0, %s234
    $region4: #{transformer_embedder_forward.1} parent=1 // loop_header_branch
      %18 = sbr.rel (%p16) target = $region8
    $region5: #{transformer_embedder_forward.1} parent=1 // loop_body
      %s20 = ssub.s32 %s15, 1
      %s21 = ssub.s32 %s15, 2
      %s28 = sadd.s32 1, %s23
      %p29 = scmp.ge.s32.totalorder %s28, 2
      %s30 = scalar_select %p29, 0, %s28
      %s31 = sadd.s32 1, %s22
      %s32 = scalar_select %p29, %s31, %s22
      %p33 = scmp.ge.s32.totalorder %s32, 1
      %s34 = scalar_select %p33, 0, %s32
      %s35 = ssub.s32 %s22, %s34
      %p36 = scmp.eq.s32.totalorder %s35, 0
      %s38 = sadd.s32 %s37, 1
      %s39 = scalar_select %p36, %s37, %s38
      %p42 = pneg %p36
      %p43 = scmp.eq.s32.totalorder %s15, 1
      %p44 = por %p42, %p43
      %p45 = scmp.ne.s32.totalorder %s37, %s40
      %p46 = scmp.eq.s32.totalorder %s15, 0
      %p47 = por %p45, %p46
      %p48 = scmp.ne.s32.totalorder %s37, %s40
      %p49 = scmp.eq.s32.totalorder %s20, 1
      %p50 = por %p48, %p49
      %p51 = scmp.ne.s32.totalorder %s40, %s41
      %p52 = scmp.eq.s32.totalorder %s20, 0
      %p53 = por %p51, %p52
      %p54 = scmp.ne.s32.totalorder %s40, %s41
      %p55 = scmp.eq.s32.totalorder %s21, 1
      %p56 = por %p54, %p55
      %p58 = scmp.ne.s32.totalorder %s41, %s57
      %p59 = scmp.eq.s32.totalorder %s21, 0
      %p60 = por %p58, %p59
      %s62 = sadd.s32 %s61, 1
      %p65 = scmp.eq.s32.totalorder %s15, 1
      %p66 = scmp.ne.s32.totalorder %s61, %s63
      %p67 = scmp.eq.s32.totalorder %s15, 0
      %p68 = por %p66, %p67
      %p69 = scmp.ne.s32.totalorder %s61, %s63
      %p70 = scmp.eq.s32.totalorder %s20, 1
      %p71 = por %p69, %p70
      %p72 = scmp.ne.s32.totalorder %s63, %s64
      %p73 = scmp.eq.s32.totalorder %s20, 0
      %p74 = por %p72, %p73
      %p75 = scmp.ne.s32.totalorder %s63, %s64
      %p76 = scmp.eq.s32.totalorder %s21, 1
      %p77 = por %p75, %p76
      %p79 = scmp.ne.s32.totalorder %s64, %s78
      %p80 = scmp.eq.s32.totalorder %s21, 0
      %p81 = por %p79, %p80
      %s83 = sadd.s32 %s82, 1
      %p86 = scmp.eq.s32.totalorder %s15, 1
      %p87 = scmp.ne.s32.totalorder %s82, %s84
      %p88 = scmp.eq.s32.totalorder %s15, 0
      %p89 = por %p87, %p88
      %p90 = scmp.ne.s32.totalorder %s82, %s84
      %p91 = scmp.eq.s32.totalorder %s20, 1
      %p92 = por %p90, %p91
      %p93 = scmp.ne.s32.totalorder %s84, %s85
      %p94 = scmp.eq.s32.totalorder %s20, 0
      %p95 = por %p93, %p94
      %p96 = scmp.ne.s32.totalorder %s84, %s85
      %p97 = scmp.eq.s32.totalorder %s21, 1
      %p98 = por %p96, %p97
      %p100 = scmp.ne.s32.totalorder %s85, %s99
      %p101 = scmp.eq.s32.totalorder %s21, 0
      %p102 = por %p100, %p101
      %s104 = sadd.s32 %s103, 1
      %p107 = scmp.eq.s32.totalorder %s15, 1
      %p108 = scmp.ne.s32.totalorder %s103, %s105
      %p109 = scmp.eq.s32.totalorder %s15, 0
      %p110 = por %p108, %p109
      %p111 = scmp.ne.s32.totalorder %s103, %s105
      %p112 = scmp.eq.s32.totalorder %s20, 1
      %p113 = por %p111, %p112
      %p114 = scmp.ne.s32.totalorder %s105, %s106
      %p115 = scmp.eq.s32.totalorder %s20, 0
      %p116 = por %p114, %p115
      %p117 = scmp.ne.s32.totalorder %s105, %s106
      %p118 = scmp.eq.s32.totalorder %s21, 1
      %p119 = por %p117, %p118
      %p121 = scmp.ne.s32.totalorder %s106, %s120
      %p122 = scmp.eq.s32.totalorder %s21, 0
      %p123 = por %p121, %p122
      %s124 = ssub.s32 %s23, %s30
      %p125 = scmp.eq.s32.totalorder %s124, 0
      %s127 = sadd.s32 %s126, 1
      %s128 = scalar_select %p125, %s126, %s127
      %p131 = pneg %p125
      %p132 = scmp.eq.s32.totalorder %s15, 1
      %p133 = por %p131, %p132
      %p134 = scmp.ne.s32.totalorder %s126, %s129
      %p135 = scmp.eq.s32.totalorder %s15, 0
      %p136 = por %p134, %p135
      %p137 = scmp.ne.s32.totalorder %s126, %s129
      %p138 = scmp.eq.s32.totalorder %s20, 1
      %p139 = por %p137, %p138
      %p140 = scmp.ne.s32.totalorder %s129, %s130
      %p141 = scmp.eq.s32.totalorder %s20, 0
      %p142 = por %p140, %p141
      %p143 = scmp.ne.s32.totalorder %s129, %s130
      %p144 = scmp.eq.s32.totalorder %s21, 1
      %p145 = por %p143, %p144
      %p147 = scmp.ne.s32.totalorder %s130, %s146
      %p148 = scmp.eq.s32.totalorder %s21, 0
      %p149 = por %p147, %p148
      %s150 = ssub.s32 %s23, %s30
      %p151 = scmp.eq.s32.totalorder %s150, 0
      %s153 = sadd.s32 %s152, 1
      %s154 = scalar_select %p151, %s152, %s153
      %p157 = pneg %p151
      %p158 = scmp.eq.s32.totalorder %s15, 1
      %p159 = por %p157, %p158
      %p160 = scmp.ne.s32.totalorder %s152, %s155
      %p161 = scmp.eq.s32.totalorder %s15, 0
      %p162 = por %p160, %p161
      %p163 = scmp.ne.s32.totalorder %s152, %s155
      %p164 = scmp.eq.s32.totalorder %s20, 1
      %p165 = por %p163, %p164
      %p166 = scmp.ne.s32.totalorder %s155, %s156
      %p167 = scmp.eq.s32.totalorder %s20, 0
      %p168 = por %p166, %p167
      %p169 = scmp.ne.s32.totalorder %s155, %s156
      %p170 = scmp.eq.s32.totalorder %s21, 1
      %p171 = por %p169, %p170
      %p173 = scmp.ne.s32.totalorder %s156, %s172
      %p174 = scmp.eq.s32.totalorder %s21, 0
      %p175 = por %p173, %p174
      %s176 = ssub.s32 %s23, %s30
      %p177 = scmp.eq.s32.totalorder %s176, 0
      %s179 = sadd.s32 %s178, 1
      %s180 = scalar_select %p177, %s178, %s179
      %p183 = pneg %p177
      %p184 = scmp.eq.s32.totalorder %s15, 1
      %p185 = por %p183, %p184
      %p186 = scmp.ne.s32.totalorder %s178, %s181
      %p187 = scmp.eq.s32.totalorder %s15, 0
      %p188 = por %p186, %p187
      %p189 = scmp.ne.s32.totalorder %s178, %s181
      %p190 = scmp.eq.s32.totalorder %s20, 1
      %p191 = por %p189, %p190
      %p192 = scmp.ne.s32.totalorder %s181, %s182
      %p193 = scmp.eq.s32.totalorder %s20, 0
      %p194 = por %p192, %p193
      %p195 = scmp.ne.s32.totalorder %s181, %s182
      %p196 = scmp.eq.s32.totalorder %s21, 1
      %p197 = por %p195, %p196
      %p199 = scmp.ne.s32.totalorder %s182, %s198
      %p200 = scmp.eq.s32.totalorder %s21, 0
      %p201 = por %p199, %p200
      %s202 = ssub.s32 %s23, %s30
      %p203 = scmp.eq.s32.totalorder %s202, 0
      %s205 = sadd.s32 %s204, 1
      %s206 = scalar_select %p203, %s204, %s205
      %p209 = pneg %p203
      %p210 = scmp.eq.s32.totalorder %s15, 1
      %p211 = por %p209, %p210
      %p212 = scmp.ne.s32.totalorder %s204, %s207
      %p213 = scmp.eq.s32.totalorder %s15, 0
      %p214 = por %p212, %p213
      %p215 = scmp.ne.s32.totalorder %s204, %s207
      %p216 = scmp.eq.s32.totalorder %s20, 1
      %p217 = por %p215, %p216
      %p218 = scmp.ne.s32.totalorder %s207, %s208
      %p219 = scmp.eq.s32.totalorder %s20, 0
      %p220 = por %p218, %p219
      %p221 = scmp.ne.s32.totalorder %s207, %s208
      %p222 = scmp.eq.s32.totalorder %s21, 1
      %p223 = por %p221, %p222
      %p225 = scmp.ne.s32.totalorder %s208, %s224
      %p226 = scmp.eq.s32.totalorder %s21, 0
      %p227 = por %p225, %p226
      %s228 = ssub.s32 %s22, %s34
      %p229 = scmp.eq.s32.totalorder %s228, 0
      %s231 = sadd.s32 %s230, 1
      %s232 = scalar_select %p229, %s230, %s231
      %p235 = pneg %p229
      %p236 = scmp.eq.s32.totalorder %s15, 1
      %p237 = por %p235, %p236
      %p238 = scmp.ne.s32.totalorder %s230, %s233
      %p239 = scmp.eq.s32.totalorder %s15, 0
      %p240 = por %p238, %p239
      %p241 = scmp.ne.s32.totalorder %s230, %s233
      %p242 = scmp.eq.s32.totalorder %s20, 1
      %p243 = por %p241, %p242
      %p244 = scmp.ne.s32.totalorder %s233, %s234
      %p245 = scmp.eq.s32.totalorder %s20, 0
      %p246 = por %p244, %p245
      %p247 = scmp.ne.s32.totalorder %s233, %s234
      %p248 = scmp.eq.s32.totalorder %s21, 1
      %p249 = por %p247, %p248
      %p251 = scmp.ne.s32.totalorder %s234, %s250
      %p252 = scmp.eq.s32.totalorder %s21, 0
      %p253 = por %p251, %p252
      %p254 = scmp.le.s32.totalorder 1, %s15
      %p255 = scmp.lt.s32.totalorder %s15, 3
      %p256 = pnand %p254, %p255
      %p257 = pneg %p256
      // Predicated region
      $region9: #{transformer_embedder_forward.1} parent=5 // pred_check
        _
      $region10: #{transformer_embedder_forward.1} parent=5 // pred_check_branch
        %259 = sbr.rel (%p256) target = $region12
      $region11: #{transformer_embedder_forward.1} parent=5 // pred_region
        %s260 = ssub.s32 %s15, 1
        // Predicated region
        $region13: #{transformer_embedder_forward.1} parent=11 // pred_check
          %p261 = pneg %p53
        $region14: #{transformer_embedder_forward.1} parent=11 // pred_check_branch
          %263 = sbr.rel (%p261) target = $region16
        $region15: #{transformer_embedder_forward.1} parent=11 // pred_region
          %s264 = smul.u32 2, %s24
          %p265 = scmp.lt.s32.totalorder %s264, 1
          %s266 = scalar_select %p265, %s264, 1
          %s267 = smul.addr %s266, 8
          %s268 = scalar_lea.vmem %s0, %s267
          %s269 = smul.u32 2, %s24
        $region16: #{transformer_embedder_forward.1} parent=11 // pred_fallthru
          _
        // Predicated region
        $region17: #{transformer_embedder_forward.1} parent=11 // pred_check
          %p270 = pneg %p74
        $region18: #{transformer_embedder_forward.1} parent=11 // pred_check_branch
          %272 = sbr.rel (%p270) target = $region20
        $region19: #{transformer_embedder_forward.1} parent=11 // pred_region
          _
        $region20: #{transformer_embedder_forward.1} parent=11 // pred_fallthru
          _
        // Predicated region
        $region21: #{transformer_embedder_forward.1} parent=11 // pred_check
          %p273 = pneg %p95
        $region22: #{transformer_embedder_forward.1} parent=11 // pred_check_branch
          %275 = sbr.rel (%p273) target = $region24
        $region23: #{transformer_embedder_forward.1} parent=11 // pred_region
          _
        $region24: #{transformer_embedder_forward.1} parent=11 // pred_fallthru
          _
        // Predicated region
        $region25: #{transformer_embedder_forward.1} parent=11 // pred_check
          %p276 = pneg %p116
        $region26: #{transformer_embedder_forward.1} parent=11 // pred_check_branch
          %278 = sbr.rel (%p276) target = $region28
        $region27: #{transformer_embedder_forward.1} parent=11 // pred_region
          _
        $region28: #{transformer_embedder_forward.1} parent=11 // pred_fallthru
          _
      $region12: #{transformer_embedder_forward.1} parent=5 // pred_fallthru
        _
      %p279 = scmp.lt.s32.totalorder %s15, 2
      // Predicated region
      $region29: #{transformer_embedder_forward.1} parent=5 // pred_check
        %p280 = pneg %p279
      $region30: #{transformer_embedder_forward.1} parent=5 // pred_check_branch
        %282 = sbr.rel (%p280) target = $region32
      $region31: #{transformer_embedder_forward.1} parent=5 // pred_region
        // Predicated region
        $region33: #{transformer_embedder_forward.1} parent=31 // pred_check
          %p283 = pneg %p136
        $region34: #{transformer_embedder_forward.1} parent=31 // pred_check_branch
          %285 = sbr.rel (%p283) target = $region36
        $region35: #{transformer_embedder_forward.1} parent=31 // pred_region
          %p286 = scmp.lt.s32.totalorder %s23, 1
          %s287 = scalar_select %p286, %s23, 1
          %s288 = smul.addr %s287, 96
          %s289 = smul.addr %s288, 4
          %s290 = scalar_lea.vmem %s4, %s289
        $region36: #{transformer_embedder_forward.1} parent=31 // pred_fallthru
          _
        // Predicated region
        $region37: #{transformer_embedder_forward.1} parent=31 // pred_check
          %p291 = pneg %p162
        $region38: #{transformer_embedder_forward.1} parent=31 // pred_check_branch
          %293 = sbr.rel (%p291) target = $region40
        $region39: #{transformer_embedder_forward.1} parent=31 // pred_region
          %p294 = scmp.lt.s32.totalorder %s23, 1
          %s295 = scalar_select %p294, %s23, 1
          %s296 = smul.addr %s295, 64
          %s297 = smul.addr %s296, 4
          %s298 = scalar_lea.vmem %s5, %s297
        $region40: #{transformer_embedder_forward.1} parent=31 // pred_fallthru
          _
        // Predicated region
        $region41: #{transformer_embedder_forward.1} parent=31 // pred_check
          %p299 = pneg %p188
        $region42: #{transformer_embedder_forward.1} parent=31 // pred_check_branch
          %301 = sbr.rel (%p299) target = $region44
        $region43: #{transformer_embedder_forward.1} parent=31 // pred_region
          %p302 = scmp.lt.s32.totalorder %s23, 1
          %s303 = scalar_select %p302, %s23, 1
          %s304 = smul.addr %s303, 16
          %s305 = smul.addr %s304, 4
          %s306 = scalar_lea.vmem %s6, %s305
        $region44: #{transformer_embedder_forward.1} parent=31 // pred_fallthru
          _
        // Predicated region
        $region45: #{transformer_embedder_forward.1} parent=31 // pred_check
          %p307 = pneg %p214
        $region46: #{transformer_embedder_forward.1} parent=31 // pred_check_branch
          %309 = sbr.rel (%p307) target = $region48
        $region47: #{transformer_embedder_forward.1} parent=31 // pred_region
          %p310 = scmp.lt.s32.totalorder %s23, 1
          %s311 = scalar_select %p310, %s23, 1
          %s312 = smul.addr %s311, 32
          %s313 = smul.addr %s312, 4
          %s314 = scalar_lea.vmem %s7, %s313
        $region48: #{transformer_embedder_forward.1} parent=31 // pred_fallthru
          _
      $region32: #{transformer_embedder_forward.1} parent=5 // pred_fallthru
        _
      %p315 = scmp.le.s32.totalorder 1, %s15
      %p316 = scmp.lt.s32.totalorder %s15, 3
      %p317 = pnand %p315, %p316
      %p318 = pneg %p317
      // Predicated region
      $region49: #{transformer_embedder_forward.1} parent=5 // pred_check
        _
      $region50: #{transformer_embedder_forward.1} parent=5 // pred_check_branch
        %320 = sbr.rel (%p317) target = $region52
      $region51: #{transformer_embedder_forward.1} parent=5 // pred_region
        %s321 = ssub.s32 %s15, 1
        %s322 = smul.u32 2, %s24
        %p323 = scmp.lt.s32.totalorder %s322, 1
        %s324 = scalar_select %p323, %s322, 1
        %s325 = smul.addr %s324, 8
        %s326 = scalar_lea.vmem %s0, %s325
        %p327 = pneg %p53
        %p328 = pneg %p50
        %p329 = pneg %p74
        %p330 = pneg %p71
        %p331 = pneg %p95
        %p332 = pneg %p92
        %p333 = pneg %p116
        %p334 = pneg %p113
        %p335 = scmp.lt.s32.totalorder %s25, 1
        %s336 = scalar_select %p335, %s25, 1
        %s337 = smul.addr %s336, 96
        %s338 = smul.addr %s337, 4
        %s339 = scalar_lea.vmem %s4, %s338
        %p340 = pneg %p142
        %p341 = pneg %p139
        %p342 = scmp.lt.s32.totalorder %s25, 1
        %s343 = scalar_select %p342, %s25, 1
        %s344 = smul.addr %s343, 64
        %s345 = smul.addr %s344, 4
        %s346 = scalar_lea.vmem %s5, %s345
        %p347 = pneg %p168
        %p348 = pneg %p165
        %p349 = scmp.lt.s32.totalorder %s25, 1
        %s350 = scalar_select %p349, %s25, 1
        %s351 = smul.addr %s350, 16
        %s352 = smul.addr %s351, 4
        %s353 = scalar_lea.vmem %s6, %s352
        %p354 = pneg %p194
        %p355 = pneg %p191
        %p356 = scmp.lt.s32.totalorder %s25, 1
        %s357 = scalar_select %p356, %s25, 1
        %s358 = smul.addr %s357, 32
        %s359 = smul.addr %s358, 4
        %s360 = scalar_lea.vmem %s7, %s359
        %p361 = pneg %p220
        %p362 = pneg %p217
        %p363 = pneg %p246
        %p364 = pneg %p243
        %s365 = smul.u32 2, %s24
        %p366 = scmp.lt.s32.totalorder %s365, 1
        %s367 = scalar_select %p366, %s365, 1
        %s368 = smul.addr %s367, 8
        %s369 = scalar_lea.vmem %s0, %s368
        %s370 = smul.u32 2, %s24
        %p371 = scmp.lt.s32.totalorder %s25, 1
        %s372 = scalar_select %p371, %s25, 1
        %s373 = smul.addr %s372, 96
        %s374 = smul.addr %s373, 4
        %s375 = scalar_lea.vmem %s4, %s374
        %p376 = scmp.lt.s32.totalorder %s25, 1
        %s377 = scalar_select %p376, %s25, 1
        %s378 = smul.addr %s377, 64
        %s379 = smul.addr %s378, 4
        %s380 = scalar_lea.vmem %s5, %s379
        %p381 = scmp.lt.s32.totalorder %s25, 1
        %s382 = scalar_select %p381, %s25, 1
        %s383 = smul.addr %s382, 16
        %s384 = smul.addr %s383, 4
        %s385 = scalar_lea.vmem %s6, %s384
        %p386 = scmp.lt.s32.totalorder %s25, 1
        %s387 = scalar_select %p386, %s25, 1
        %s388 = smul.addr %s387, 32
        %s389 = smul.addr %s388, 4
        %s390 = scalar_lea.vmem %s7, %s389
        %s391 = smul.u32 2, %s24
        %p393 = scmp.eq.s32.totalorder %s25, 0
        // Predicated region
        $region53: #{transformer_embedder_forward.1} parent=51 // pred_check
          %p394 = pneg %p393
        $region54: #{transformer_embedder_forward.1} parent=51 // pred_check_branch
          %396 = sbr.rel (%p394) target = $region56
        $region55: #{transformer_embedder_forward.1} parent=51 // pred_region
          %v397 = vld [vmem:[%s369] sm:$0xff]
          %v398 = vld [vmem:[%s369 + $0x8] sm:$0xff]
          %vm399 = vcmask 523264
          %400 = vst.msk [vmem:[#allocation3] sm:$0xff] %vm399, %v397
          %401 = vst.msk [vmem:[#allocation3 + $0x8] sm:$0xff] %vm399, %v398
        $region56: #{transformer_embedder_forward.1} parent=51 // pred_fallthru
          _
        %v402 = vld [vmem:[#allocation3] sm:$0xff]
        %v403 = vld [vmem:[#allocation3 + $0x8] sm:$0xff]
        %s404 = smul.u32 %s25, 8
        %s405 = scalar_lea.vmem %s1, %s404
        %v406 = vld [vmem:[%s405] sm:$0x3f]
        %s407 = smul.u32 %s25, 2
        %s408 = scalar_lea.vmem %s2, %s407
        %v409 = vld [vmem:[%s408] sm:$0x3]
        %vm410 = vcmask 523264
        %v411 = vsel %vm410, %v402, 0.0
        %412 = vadd.xlane.f32.xlu0 %v411
        %v413 = vpop.xlane.xlu0 %412
        %v414 = vsel %vm410, %v403, 0.0
        %415 = vadd.xlane.f32.xlu0 %v414
        %v416 = vpop.xlane.xlu0 %415
        %v417 = vrcp.pop 64.0
        %v418 = vmul.f32 %v413, %v417
        %v419 = vmul.f32 %v416, %v417
        %v420 = vsub.f32 %v402, %v418
        %v421 = vsub.f32 %v403, %v419
        %v422 = vmul.f32 %v420, %v420
        %v423 = vmul.f32 %v421, %v421
        %v424 = vsel %vm410, %v422, 0.0
        %425 = vadd.xlane.f32.xlu0 %v424
        %v426 = vpop.xlane.xlu0 %425
        %v427 = vsel %vm410, %v423, 0.0
        %428 = vadd.xlane.f32.xlu0 %v427
        %v429 = vpop.xlane.xlu0 %428
        %v430 = vmul.f32 %v426, %v417
        %v431 = vmul.f32 %v429, %v417
        %v432 = vadd.f32 %v430, 1e-05
        %v433 = vadd.f32 %v431, 1e-05
        %v434 = vrsqrt.pop %v432
        %v435 = vrsqrt.pop %v433
        %v436 = vmul.f32 %v420, %v434
        %v437 = vmul.f32 %v421, %v435
        %v438 = vlaneseq
        %v439 = vshrl.u32 %v438, 7
        %v440 = vsub.s32 0, %v439
        %v441 = vrot.slane %v406, %v440
        %v442 = vmul.f32 %v436, %v441
        %v443 = vmul.f32 %v437, %v441
        %v444 = vlaneseq
        %v445 = vshrl.u32 %v444, 7
        %v446 = vsub.s32 1, %v445
        %v447 = vrot.slane %v406, %v446
        %v448 = vadd.f32 %v442, %v447
        %v449 = vadd.f32 %v443, %v447
        %v450 = vpack.c.bf16 %v449, %v448
        %v451 = vld [vmem:[%s375] sm:$0xff]
        %v452 = vld [vmem:[%s375 + $0x8] sm:$0xff]
        %v453 = vld [vmem:[%s375 + $0x10] sm:$0xff]
        %v454 = vld [vmem:[%s375 + $0x18] sm:$0xff]
        %v455 = vld [vmem:[%s375 + $0x20] sm:$0xff]
        %v456 = vld [vmem:[%s375 + $0x28] sm:$0xff]
        %v457 = vld [vmem:[%s375 + $0x30] sm:$0xff]
        %v458 = vld [vmem:[%s375 + $0x38] sm:$0xff]
        %v459 = vld [vmem:[%s375 + $0x40] sm:$0xff]
        %v460 = vld [vmem:[%s375 + $0x48] sm:$0xff]
        %v461 = vld [vmem:[%s375 + $0x50] sm:$0xff]
        %v462 = vld [vmem:[%s375 + $0x58] sm:$0xff]
        %v463 = vld [vmem:[%s375 + $0x60] sm:$0xff]
        %v464 = vld [vmem:[%s375 + $0x68] sm:$0xff]
        %v465 = vld [vmem:[%s375 + $0x70] sm:$0xff]
        %v466 = vld [vmem:[%s375 + $0x78] sm:$0xff]
        %v467 = vld [vmem:[%s375 + $0x80] sm:$0xff]
        %v468 = vld [vmem:[%s375 + $0x88] sm:$0xff]
        %v469 = vld [vmem:[%s375 + $0x90] sm:$0xff]
        %v470 = vld [vmem:[%s375 + $0x98] sm:$0xff]
        %v471 = vld [vmem:[%s375 + $0xa0] sm:$0xff]
        %v472 = vld [vmem:[%s375 + $0xa8] sm:$0xff]
        %v473 = vld [vmem:[%s375 + $0xb0] sm:$0xff]
        %v474 = vld [vmem:[%s375 + $0xb8] sm:$0xff]
        %v475 = vld [vmem:[%s375 + $0xc0] sm:$0xff]
        %v476 = vld [vmem:[%s375 + $0xc8] sm:$0xff]
        %v477 = vld [vmem:[%s375 + $0xd0] sm:$0xff]
        %v478 = vld [vmem:[%s375 + $0xd8] sm:$0xff]
        %v479 = vld [vmem:[%s375 + $0xe0] sm:$0xff]
        %v480 = vld [vmem:[%s375 + $0xe8] sm:$0xff]
        %v481 = vld [vmem:[%s375 + $0xf0] sm:$0xff]
        %v482 = vld [vmem:[%s375 + $0xf8] sm:$0xff]
        %v483 = vld [vmem:[%s375 + $0x100] sm:$0xff]
        %v484 = vld [vmem:[%s375 + $0x108] sm:$0xff]
        %v485 = vld [vmem:[%s375 + $0x110] sm:$0xff]
        %v486 = vld [vmem:[%s375 + $0x118] sm:$0xff]
        %v487 = vld [vmem:[%s375 + $0x120] sm:$0xff]
        %v488 = vld [vmem:[%s375 + $0x128] sm:$0xff]
        %v489 = vld [vmem:[%s375 + $0x130] sm:$0xff]
        %v490 = vld [vmem:[%s375 + $0x138] sm:$0xff]
        %v491 = vld [vmem:[%s375 + $0x140] sm:$0xff]
        %v492 = vld [vmem:[%s375 + $0x148] sm:$0xff]
        %v493 = vld [vmem:[%s375 + $0x150] sm:$0xff]
        %v494 = vld [vmem:[%s375 + $0x158] sm:$0xff]
        %v495 = vld [vmem:[%s375 + $0x160] sm:$0xff]
        %v496 = vld [vmem:[%s375 + $0x168] sm:$0xff]
        %v497 = vld [vmem:[%s375 + $0x170] sm:$0xff]
        %v498 = vld [vmem:[%s375 + $0x178] sm:$0xff]
        %v547 = vunpack.c.l.b16 %v451
        %v548 = vunpack.c.h.b16 %v451
        %v549 = vunpack.c.l.b16 %v452
        %v550 = vunpack.c.h.b16 %v452
        %v551 = vunpack.c.l.b16 %v453
        %v552 = vunpack.c.h.b16 %v453
        %v553 = vunpack.c.l.b16 %v454
        %v554 = vunpack.c.h.b16 %v454
        %v555 = vunpack.c.l.b16 %v455
        %v556 = vunpack.c.h.b16 %v455
        %v557 = vunpack.c.l.b16 %v456
        %v558 = vunpack.c.h.b16 %v456
        %v559 = vunpack.c.l.b16 %v457
        %v560 = vunpack.c.h.b16 %v457
        %v561 = vunpack.c.l.b16 %v458
        %v562 = vunpack.c.h.b16 %v458
        %v563 = vunpack.c.l.b16 %v459
        %v564 = vunpack.c.h.b16 %v459
        %v565 = vunpack.c.l.b16 %v460
        %v566 = vunpack.c.h.b16 %v460
        %v567 = vunpack.c.l.b16 %v461
        %v568 = vunpack.c.h.b16 %v461
        %v569 = vunpack.c.l.b16 %v462
        %v570 = vunpack.c.h.b16 %v462
        %v571 = vunpack.c.l.b16 %v463
        %v572 = vunpack.c.h.b16 %v463
        %v573 = vunpack.c.l.b16 %v464
        %v574 = vunpack.c.h.b16 %v464
        %v575 = vunpack.c.l.b16 %v465
        %v576 = vunpack.c.h.b16 %v465
        %v577 = vunpack.c.l.b16 %v466
        %v578 = vunpack.c.h.b16 %v466
        %v579 = vunpack.c.l.b16 %v467
        %v580 = vunpack.c.h.b16 %v467
        %v581 = vunpack.c.l.b16 %v468
        %v582 = vunpack.c.h.b16 %v468
        %v583 = vunpack.c.l.b16 %v469
        %v584 = vunpack.c.h.b16 %v469
        %v585 = vunpack.c.l.b16 %v470
        %v586 = vunpack.c.h.b16 %v470
        %v587 = vunpack.c.l.b16 %v471
        %v588 = vunpack.c.h.b16 %v471
        %v589 = vunpack.c.l.b16 %v472
        %v590 = vunpack.c.h.b16 %v472
        %v591 = vunpack.c.l.b16 %v473
        %v592 = vunpack.c.h.b16 %v473
        %v593 = vunpack.c.l.b16 %v474
        %v594 = vunpack.c.h.b16 %v474
        %v595 = vunpack.c.l.b16 %v475
        %v596 = vunpack.c.h.b16 %v475
        %v597 = vunpack.c.l.b16 %v476
        %v598 = vunpack.c.h.b16 %v476
        %v599 = vunpack.c.l.b16 %v477
        %v600 = vunpack.c.h.b16 %v477
        %v601 = vunpack.c.l.b16 %v478
        %v602 = vunpack.c.h.b16 %v478
        %v603 = vunpack.c.l.b16 %v479
        %v604 = vunpack.c.h.b16 %v479
        %v605 = vunpack.c.l.b16 %v480
        %v606 = vunpack.c.h.b16 %v480
        %v607 = vunpack.c.l.b16 %v481
        %v608 = vunpack.c.h.b16 %v481
        %v609 = vunpack.c.l.b16 %v482
        %v610 = vunpack.c.h.b16 %v482
        %v611 = vunpack.c.l.b16 %v483
        %v612 = vunpack.c.h.b16 %v483
        %v613 = vunpack.c.l.b16 %v484
        %v614 = vunpack.c.h.b16 %v484
        %v615 = vunpack.c.l.b16 %v485
        %v616 = vunpack.c.h.b16 %v485
        %v617 = vunpack.c.l.b16 %v486
        %v618 = vunpack.c.h.b16 %v486
        %v619 = vunpack.c.l.b16 %v487
        %v620 = vunpack.c.h.b16 %v487
        %v621 = vunpack.c.l.b16 %v488
        %v622 = vunpack.c.h.b16 %v488
        %v623 = vunpack.c.l.b16 %v489
        %v624 = vunpack.c.h.b16 %v489
        %v625 = vunpack.c.l.b16 %v490
        %v626 = vunpack.c.h.b16 %v490
        %v627 = vunpack.c.l.b16 %v491
        %v628 = vunpack.c.h.b16 %v491
        %v629 = vunpack.c.l.b16 %v492
        %v630 = vunpack.c.h.b16 %v492
        %v631 = vunpack.c.l.b16 %v493
        %v632 = vunpack.c.h.b16 %v493
        %v633 = vunpack.c.l.b16 %v494
        %v634 = vunpack.c.h.b16 %v494
        %v635 = vunpack.c.l.b16 %v495
        %v636 = vunpack.c.h.b16 %v495
        %v637 = vunpack.c.l.b16 %v496
        %v638 = vunpack.c.h.b16 %v496
        %v639 = vunpack.c.l.b16 %v497
        %v640 = vunpack.c.h.b16 %v497
        %v641 = vunpack.c.l.b16 %v498
        %v642 = vunpack.c.h.b16 %v498
        %v643 = vpack.c.b16 %v559, %v547
        %v644 = vpack.c.b16 %v560, %v548
        %v645 = vpack.c.b16 %v561, %v549
        %v646 = vpack.c.b16 %v562, %v550
        %v647 = vpack.c.b16 %v563, %v551
        %v648 = vpack.c.b16 %v564, %v552
        %v649 = vpack.c.b16 %v565, %v553
        %v650 = vpack.c.b16 %v566, %v554
        %v651 = vpack.c.b16 %v567, %v555
        %v652 = vpack.c.b16 %v568, %v556
        %v653 = vpack.c.b16 %v569, %v557
        %v654 = vpack.c.b16 %v570, %v558
        %v655 = vpack.c.b16 %v583, %v571
        %v656 = vpack.c.b16 %v584, %v572
        %v657 = vpack.c.b16 %v585, %v573
        %v658 = vpack.c.b16 %v586, %v574
        %v659 = vpack.c.b16 %v587, %v575
        %v660 = vpack.c.b16 %v588, %v576
        %v661 = vpack.c.b16 %v589, %v577
        %v662 = vpack.c.b16 %v590, %v578
        %v663 = vpack.c.b16 %v591, %v579
        %v664 = vpack.c.b16 %v592, %v580
        %v665 = vpack.c.b16 %v593, %v581
        %v666 = vpack.c.b16 %v594, %v582
        %v667 = vpack.c.b16 %v607, %v595
        %v668 = vpack.c.b16 %v608, %v596
        %v669 = vpack.c.b16 %v609, %v597
        %v670 = vpack.c.b16 %v610, %v598
        %v671 = vpack.c.b16 %v611, %v599
        %v672 = vpack.c.b16 %v612, %v600
        %v673 = vpack.c.b16 %v613, %v601
        %v674 = vpack.c.b16 %v614, %v602
        %v675 = vpack.c.b16 %v615, %v603
        %v676 = vpack.c.b16 %v616, %v604
        %v677 = vpack.c.b16 %v617, %v605
        %v678 = vpack.c.b16 %v618, %v606
        %v679 = vpack.c.b16 %v631, %v619
        %v680 = vpack.c.b16 %v632, %v620
        %v681 = vpack.c.b16 %v633, %v621
        %v682 = vpack.c.b16 %v634, %v622
        %v683 = vpack.c.b16 %v635, %v623
        %v684 = vpack.c.b16 %v636, %v624
        %v685 = vpack.c.b16 %v637, %v625
        %v686 = vpack.c.b16 %v638, %v626
        %v687 = vpack.c.b16 %v639, %v627
        %v688 = vpack.c.b16 %v640, %v628
        %v689 = vpack.c.b16 %v641, %v629
        %v690 = vpack.c.b16 %v642, %v630
        %v740 = vsel %vm410, %v450, 0
        %742 = vmatprep.subr.bf16.mxu0 0
        %743 = vmatpush1.bf16.msra.mxu0 0
        %744 = vmatprep.subr.bf16.mxu0 0
        %745 = vmatpush1.bf16.msra.mxu0 0
        %746 = vmatprep.subr.bf16.mxu0 0
        %747 = vmatpush1.bf16.msra.mxu0 0
        %748 = vmatprep.subr.bf16.mxu0 0
        %749 = vmatpush1.bf16.msra.mxu0 0
        %750 = vmatprep.subr.bf16.mxu0 %v680
        %751 = vmatpush1.bf16.msra.mxu0 %v679
        %752 = vmatprep.subr.bf16.mxu0 %v668
        %753 = vmatpush1.bf16.msra.mxu0 %v667
        %754 = vmatprep.subr.bf16.mxu0 %v656
        %755 = vmatpush1.bf16.msra.mxu0 %v655
        %756 = vmatprep.subr.bf16.mxu0 %v644
        %757 = vmatpush1.bf16.msra.mxu0 %v643
        %758 = vmatprep.subr.bf16.mxu0 0
        %759 = vmatpush2.bf16.msra.mxu0 0
        %760 = vmatprep.subr.bf16.mxu0 0
        %761 = vmatpush2.bf16.msra.mxu0 0
        %762 = vmatprep.subr.bf16.mxu0 0
        %763 = vmatpush2.bf16.msra.mxu0 0
        %764 = vmatprep.subr.bf16.mxu0 0
        %765 = vmatpush2.bf16.msra.mxu0 0
        %766 = vmatprep.subr.bf16.mxu0 0
        %767 = vmatpush2.bf16.msra.mxu0 0
        %768 = vmatprep.subr.bf16.mxu0 0
        %769 = vmatpush2.bf16.msra.mxu0 0
        %770 = vmatprep.subr.bf16.mxu0 0
        %771 = vmatpush2.bf16.msra.mxu0 0
        %772 = vmatprep.subr.bf16.mxu0 0
        %773 = vmatpush2.bf16.msra.mxu0 0
        %774 = vmatprep.mubr.bf16.mxu0 0
        %775 = vmatmul.mubr.bf16.gmra.mxu0 %v740
        %v776 = vpop.f32.mrf.mxu0
        %v777 = vadd.f32 0.0, %v776
        %v778 = vpop.f32.mrf.mxu0
        %v779 = vadd.f32 0.0, %v778
        %v780 = vpop.f32.mrf.mxu0
        %v781 = vadd.f32 0.0, %v780
        %v782 = vpop.f32.mrf.mxu0
        %v783 = vadd.f32 0.0, %v782
        %784 = vdwg.mxu0
        %785 = vmatprep.subr.bf16.mxu0 0
        %786 = vmatpush1.bf16.msra.mxu0 0
        %787 = vmatprep.subr.bf16.mxu0 0
        %788 = vmatpush1.bf16.msra.mxu0 0
        %789 = vmatprep.subr.bf16.mxu0 0
        %790 = vmatpush1.bf16.msra.mxu0 0
        %791 = vmatprep.subr.bf16.mxu0 0
        %792 = vmatpush1.bf16.msra.mxu0 0
        %793 = vmatprep.subr.bf16.mxu0 %v682
        %794 = vmatpush1.bf16.msra.mxu0 %v681
        %795 = vmatprep.subr.bf16.mxu0 %v670
        %796 = vmatpush1.bf16.msra.mxu0 %v669
        %797 = vmatprep.subr.bf16.mxu0 %v658
        %798 = vmatpush1.bf16.msra.mxu0 %v657
        %799 = vmatprep.subr.bf16.mxu0 %v646
        %800 = vmatpush1.bf16.msra.mxu0 %v645
        %801 = vmatprep.subr.bf16.mxu0 0
        %802 = vmatpush2.bf16.msra.mxu0 0
        %803 = vmatprep.subr.bf16.mxu0 0
        %804 = vmatpush2.bf16.msra.mxu0 0
        %805 = vmatprep.subr.bf16.mxu0 0
        %806 = vmatpush2.bf16.msra.mxu0 0
        %807 = vmatprep.subr.bf16.mxu0 0
        %808 = vmatpush2.bf16.msra.mxu0 0
        %809 = vmatprep.subr.bf16.mxu0 0
        %810 = vmatpush2.bf16.msra.mxu0 0
        %811 = vmatprep.subr.bf16.mxu0 0
        %812 = vmatpush2.bf16.msra.mxu0 0
        %813 = vmatprep.subr.bf16.mxu0 0
        %814 = vmatpush2.bf16.msra.mxu0 0
        %815 = vmatprep.subr.bf16.mxu0 0
        %816 = vmatpush2.bf16.msra.mxu0 0
        %817 = vmatprep.mubr.bf16.mxu0 0
        %818 = vmatmul.mubr.bf16.gmra.mxu0 %v740
        %v819 = vpop.f32.mrf.mxu0
        %v820 = vadd.f32 0.0, %v819
        %v821 = vpop.f32.mrf.mxu0
        %v822 = vadd.f32 0.0, %v821
        %v823 = vpop.f32.mrf.mxu0
        %v824 = vadd.f32 0.0, %v823
        %v825 = vpop.f32.mrf.mxu0
        %v826 = vadd.f32 0.0, %v825
        %827 = vdwg.mxu0
        %828 = vmatprep.subr.bf16.mxu0 0
        %829 = vmatpush1.bf16.msra.mxu0 0
        %830 = vmatprep.subr.bf16.mxu0 0
        %831 = vmatpush1.bf16.msra.mxu0 0
        %832 = vmatprep.subr.bf16.mxu0 0
        %833 = vmatpush1.bf16.msra.mxu0 0
        %834 = vmatprep.subr.bf16.mxu0 0
        %835 = vmatpush1.bf16.msra.mxu0 0
        %836 = vmatprep.subr.bf16.mxu0 %v684
        %837 = vmatpush1.bf16.msra.mxu0 %v683
        %838 = vmatprep.subr.bf16.mxu0 %v672
        %839 = vmatpush1.bf16.msra.mxu0 %v671
        %840 = vmatprep.subr.bf16.mxu0 %v660
        %841 = vmatpush1.bf16.msra.mxu0 %v659
        %842 = vmatprep.subr.bf16.mxu0 %v648
        %843 = vmatpush1.bf16.msra.mxu0 %v647
        %844 = vmatprep.subr.bf16.mxu0 0
        %845 = vmatpush2.bf16.msra.mxu0 0
        %846 = vmatprep.subr.bf16.mxu0 0
        %847 = vmatpush2.bf16.msra.mxu0 0
        %848 = vmatprep.subr.bf16.mxu0 0
        %849 = vmatpush2.bf16.msra.mxu0 0
        %850 = vmatprep.subr.bf16.mxu0 0
        %851 = vmatpush2.bf16.msra.mxu0 0
        %852 = vmatprep.subr.bf16.mxu0 0
        %853 = vmatpush2.bf16.msra.mxu0 0
        %854 = vmatprep.subr.bf16.mxu0 0
        %855 = vmatpush2.bf16.msra.mxu0 0
        %856 = vmatprep.subr.bf16.mxu0 0
        %857 = vmatpush2.bf16.msra.mxu0 0
        %858 = vmatprep.subr.bf16.mxu0 0
        %859 = vmatpush2.bf16.msra.mxu0 0
        %860 = vmatprep.mubr.bf16.mxu0 0
        %861 = vmatmul.mubr.bf16.gmra.mxu0 %v740
        %v862 = vpop.f32.mrf.mxu0
        %v863 = vadd.f32 0.0, %v862
        %v864 = vpop.f32.mrf.mxu0
        %v865 = vadd.f32 0.0, %v864
        %v866 = vpop.f32.mrf.mxu0
        %v867 = vadd.f32 0.0, %v866
        %v868 = vpop.f32.mrf.mxu0
        %v869 = vadd.f32 0.0, %v868
        %870 = vdwg.mxu0
        %871 = vmatprep.subr.bf16.mxu0 0
        %872 = vmatpush1.bf16.msra.mxu0 0
        %873 = vmatprep.subr.bf16.mxu0 0
        %874 = vmatpush1.bf16.msra.mxu0 0
        %875 = vmatprep.subr.bf16.mxu0 0
        %876 = vmatpush1.bf16.msra.mxu0 0
        %877 = vmatprep.subr.bf16.mxu0 0
        %878 = vmatpush1.bf16.msra.mxu0 0
        %879 = vmatprep.subr.bf16.mxu0 %v686
        %880 = vmatpush1.bf16.msra.mxu0 %v685
        %881 = vmatprep.subr.bf16.mxu0 %v674
        %882 = vmatpush1.bf16.msra.mxu0 %v673
        %883 = vmatprep.subr.bf16.mxu0 %v662
        %884 = vmatpush1.bf16.msra.mxu0 %v661
        %885 = vmatprep.subr.bf16.mxu0 %v650
        %886 = vmatpush1.bf16.msra.mxu0 %v649
        %887 = vmatprep.subr.bf16.mxu0 0
        %888 = vmatpush2.bf16.msra.mxu0 0
        %889 = vmatprep.subr.bf16.mxu0 0
        %890 = vmatpush2.bf16.msra.mxu0 0
        %891 = vmatprep.subr.bf16.mxu0 0
        %892 = vmatpush2.bf16.msra.mxu0 0
        %893 = vmatprep.subr.bf16.mxu0 0
        %894 = vmatpush2.bf16.msra.mxu0 0
        %895 = vmatprep.subr.bf16.mxu0 0
        %896 = vmatpush2.bf16.msra.mxu0 0
        %897 = vmatprep.subr.bf16.mxu0 0
        %898 = vmatpush2.bf16.msra.mxu0 0
        %899 = vmatprep.subr.bf16.mxu0 0
        %900 = vmatpush2.bf16.msra.mxu0 0
        %901 = vmatprep.subr.bf16.mxu0 0
        %902 = vmatpush2.bf16.msra.mxu0 0
        %903 = vmatprep.mubr.bf16.mxu0 0
        %904 = vmatmul.mubr.bf16.gmra.mxu0 %v740
        %v905 = vpop.f32.mrf.mxu0
        %v906 = vadd.f32 0.0, %v905
        %v907 = vpop.f32.mrf.mxu0
        %v908 = vadd.f32 0.0, %v907
        %v909 = vpop.f32.mrf.mxu0
        %v910 = vadd.f32 0.0, %v909
        %v911 = vpop.f32.mrf.mxu0
        %v912 = vadd.f32 0.0, %v911
        %913 = vdwg.mxu0
        %914 = vmatprep.subr.bf16.mxu0 0
        %915 = vmatpush1.bf16.msra.mxu0 0
        %916 = vmatprep.subr.bf16.mxu0 0
        %917 = vmatpush1.bf16.msra.mxu0 0
        %918 = vmatprep.subr.bf16.mxu0 0
        %919 = vmatpush1.bf16.msra.mxu0 0
        %920 = vmatprep.subr.bf16.mxu0 0
        %921 = vmatpush1.bf16.msra.mxu0 0
        %922 = vmatprep.subr.bf16.mxu0 %v688
        %923 = vmatpush1.bf16.msra.mxu0 %v687
        %924 = vmatprep.subr.bf16.mxu0 %v676
        %925 = vmatpush1.bf16.msra.mxu0 %v675
        %926 = vmatprep.subr.bf16.mxu0 %v664
        %927 = vmatpush1.bf16.msra.mxu0 %v663
        %928 = vmatprep.subr.bf16.mxu0 %v652
        %929 = vmatpush1.bf16.msra.mxu0 %v651
        %930 = vmatprep.subr.bf16.mxu0 0
        %931 = vmatpush2.bf16.msra.mxu0 0
        %932 = vmatprep.subr.bf16.mxu0 0
        %933 = vmatpush2.bf16.msra.mxu0 0
        %934 = vmatprep.subr.bf16.mxu0 0
        %935 = vmatpush2.bf16.msra.mxu0 0
        %936 = vmatprep.subr.bf16.mxu0 0
        %937 = vmatpush2.bf16.msra.mxu0 0
        %938 = vmatprep.subr.bf16.mxu0 0
        %939 = vmatpush2.bf16.msra.mxu0 0
        %940 = vmatprep.subr.bf16.mxu0 0
        %941 = vmatpush2.bf16.msra.mxu0 0
        %942 = vmatprep.subr.bf16.mxu0 0
        %943 = vmatpush2.bf16.msra.mxu0 0
        %944 = vmatprep.subr.bf16.mxu0 0
        %945 = vmatpush2.bf16.msra.mxu0 0
        %946 = vmatprep.mubr.bf16.mxu0 0
        %947 = vmatmul.mubr.bf16.gmra.mxu0 %v740
        %v948 = vpop.f32.mrf.mxu0
        %v949 = vadd.f32 0.0, %v948
        %v950 = vpop.f32.mrf.mxu0
        %v951 = vadd.f32 0.0, %v950
        %v952 = vpop.f32.mrf.mxu0
        %v953 = vadd.f32 0.0, %v952
        %v954 = vpop.f32.mrf.mxu0
        %v955 = vadd.f32 0.0, %v954
        %956 = vdwg.mxu0
        %957 = vmatprep.subr.bf16.mxu0 0
        %958 = vmatpush1.bf16.msra.mxu0 0
        %959 = vmatprep.subr.bf16.mxu0 0
        %960 = vmatpush1.bf16.msra.mxu0 0
        %961 = vmatprep.subr.bf16.mxu0 0
        %962 = vmatpush1.bf16.msra.mxu0 0
        %963 = vmatprep.subr.bf16.mxu0 0
        %964 = vmatpush1.bf16.msra.mxu0 0
        %965 = vmatprep.subr.bf16.mxu0 %v690
        %966 = vmatpush1.bf16.msra.mxu0 %v689
        %967 = vmatprep.subr.bf16.mxu0 %v678
        %968 = vmatpush1.bf16.msra.mxu0 %v677
        %969 = vmatprep.subr.bf16.mxu0 %v666
        %970 = vmatpush1.bf16.msra.mxu0 %v665
        %971 = vmatprep.subr.bf16.mxu0 %v654
        %972 = vmatpush1.bf16.msra.mxu0 %v653
        %973 = vmatprep.subr.bf16.mxu0 0
        %974 = vmatpush2.bf16.msra.mxu0 0
        %975 = vmatprep.subr.bf16.mxu0 0
        %976 = vmatpush2.bf16.msra.mxu0 0
        %977 = vmatprep.subr.bf16.mxu0 0
        %978 = vmatpush2.bf16.msra.mxu0 0
        %979 = vmatprep.subr.bf16.mxu0 0
        %980 = vmatpush2.bf16.msra.mxu0 0
        %981 = vmatprep.subr.bf16.mxu0 0
        %982 = vmatpush2.bf16.msra.mxu0 0
        %983 = vmatprep.subr.bf16.mxu0 0
        %984 = vmatpush2.bf16.msra.mxu0 0
        %985 = vmatprep.subr.bf16.mxu0 0
        %986 = vmatpush2.bf16.msra.mxu0 0
        %987 = vmatprep.subr.bf16.mxu0 0
        %988 = vmatpush2.bf16.msra.mxu0 0
        %989 = vmatprep.mubr.bf16.mxu0 0
        %990 = vmatmul.mubr.bf16.gmra.mxu0 %v740
        %v991 = vpop.f32.mrf.mxu0
        %v992 = vadd.f32 0.0, %v991
        %v993 = vpop.f32.mrf.mxu0
        %v994 = vadd.f32 0.0, %v993
        %v995 = vpop.f32.mrf.mxu0
        %v996 = vadd.f32 0.0, %v995
        %v997 = vpop.f32.mrf.mxu0
        %v998 = vadd.f32 0.0, %v997
        %999 = vdwg.mxu0
        %v1000 = vpack.c.bf16 %v777, %v777
        %v1001 = vpack.c.bf16 %v779, %v779
        %v1002 = vpack.c.bf16 %v820, %v820
        %v1003 = vpack.c.bf16 %v822, %v822
        %v1004 = vpack.c.bf16 %v781, %v781
        %v1005 = vpack.c.bf16 %v783, %v783
        %v1006 = vpack.c.bf16 %v824, %v824
        %v1007 = vpack.c.bf16 %v826, %v826
        %v1008 = vpack.c.bf16 %v863, %v863
        %v1009 = vpack.c.bf16 %v865, %v865
        %v1010 = vpack.c.bf16 %v906, %v906
        %v1011 = vpack.c.bf16 %v908, %v908
        %v1012 = vpack.c.bf16 %v867, %v867
        %v1013 = vpack.c.bf16 %v869, %v869
        %v1014 = vpack.c.bf16 %v910, %v910
        %v1015 = vpack.c.bf16 %v912, %v912
        %v1016 = vpack.c.bf16 %v949, %v949
        %v1017 = vpack.c.bf16 %v951, %v951
        %v1018 = vpack.c.bf16 %v992, %v992
        %v1019 = vpack.c.bf16 %v994, %v994
        %v1020 = vpack.c.bf16 %v953, %v953
        %v1021 = vpack.c.bf16 %v955, %v955
        %v1022 = vpack.c.bf16 %v996, %v996
        %v1023 = vpack.c.bf16 %v998, %v998
        %v1025 = vsel %vm410, %v1000, 0
        %v1028 = vsel %vm410, %v1008, 0
        %1030 = vmatprep.subr.bf16.mxu0 0
        %1031 = vmatpush1.bf16.xpose.msra.mxu0 0
        %1032 = vmatprep.subr.bf16.mxu0 0
        %1033 = vmatpush1.bf16.xpose.msra.mxu0 0
        %1034 = vmatprep.subr.bf16.mxu0 0
        %1035 = vmatpush1.bf16.xpose.msra.mxu0 0
        %1036 = vmatprep.subr.bf16.mxu0 0
        %1037 = vmatpush1.bf16.xpose.msra.mxu0 0
        %1038 = vmatprep.subr.bf16.mxu0 0
        %1039 = vmatpush1.bf16.xpose.msra.mxu0 0
        %1040 = vmatprep.subr.bf16.mxu0 0
        %1041 = vmatpush1.bf16.xpose.msra.mxu0 0
        %1042 = vmatprep.subr.bf16.mxu0 0
        %1043 = vmatpush1.bf16.xpose.msra.mxu0 0
        %1044 = vmatprep.subr.bf16.mxu0 0
        %1045 = vmatpush1.bf16.xpose.msra.mxu0 %v1028
        %1046 = vmatprep.subr.bf16.mxu0 0
        %1047 = vmatpush2.bf16.xpose.msra.mxu0 0
        %1048 = vmatprep.subr.bf16.mxu0 0
        %1049 = vmatpush2.bf16.xpose.msra.mxu0 0
        %1050 = vmatprep.subr.bf16.mxu0 0
        %1051 = vmatpush2.bf16.xpose.msra.mxu0 0
        %1052 = vmatprep.subr.bf16.mxu0 0
        %1053 = vmatpush2.bf16.xpose.msra.mxu0 0
        %1054 = vmatprep.subr.bf16.mxu0 0
        %1055 = vmatpush2.bf16.xpose.msra.mxu0 0
        %1056 = vmatprep.subr.bf16.mxu0 0
        %1057 = vmatpush2.bf16.xpose.msra.mxu0 0
        %1058 = vmatprep.subr.bf16.mxu0 0
        %1059 = vmatpush2.bf16.xpose.msra.mxu0 0
        %1060 = vmatprep.subr.bf16.mxu0 0
        %1061 = vmatpush2.bf16.xpose.msra.mxu0 0
        %1062 = vmatprep.mubr.bf16.mxu0 0
        %1063 = vmatmul.mubr.bf16.gmra.mxu0 %v1025
        %v1064 = vpop.f32.mrf.mxu0
        %v1065 = vadd.f32 0.0, %v1064
        %v1066 = vpop.f32.mrf.mxu0
        %v1067 = vpop.f32.mrf.mxu0
        %v1068 = vpop.f32.mrf.mxu0
        %1069 = vdwg.mxu0
        %v1071 = vsel %vm410, %v1004, 0
        %v1074 = vsel %vm410, %v1012, 0
        %1076 = vmatprep.subr.bf16.mxu0 0
        %1077 = vmatpush1.bf16.xpose.msra.mxu0 0
        %1078 = vmatprep.subr.bf16.mxu0 0
        %1079 = vmatpush1.bf16.xpose.msra.mxu0 0
        %1080 = vmatprep.subr.bf16.mxu0 0
        %1081 = vmatpush1.bf16.xpose.msra.mxu0 0
        %1082 = vmatprep.subr.bf16.mxu0 0
        %1083 = vmatpush1.bf16.xpose.msra.mxu0 0
        %1084 = vmatprep.subr.bf16.mxu0 0
        %1085 = vmatpush1.bf16.xpose.msra.mxu0 0
        %1086 = vmatprep.subr.bf16.mxu0 0
        %1087 = vmatpush1.bf16.xpose.msra.mxu0 0
        %1088 = vmatprep.subr.bf16.mxu0 0
        %1089 = vmatpush1.bf16.xpose.msra.mxu0 0
        %1090 = vmatprep.subr.bf16.mxu0 0
        %1091 = vmatpush1.bf16.xpose.msra.mxu0 %v1074
        %1092 = vmatprep.subr.bf16.mxu0 0
        %1093 = vmatpush2.bf16.xpose.msra.mxu0 0
        %1094 = vmatprep.subr.bf16.mxu0 0
        %1095 = vmatpush2.bf16.xpose.msra.mxu0 0
        %1096 = vmatprep.subr.bf16.mxu0 0
        %1097 = vmatpush2.bf16.xpose.msra.mxu0 0
        %1098 = vmatprep.subr.bf16.mxu0 0
        %1099 = vmatpush2.bf16.xpose.msra.mxu0 0
        %1100 = vmatprep.subr.bf16.mxu0 0
        %1101 = vmatpush2.bf16.xpose.msra.mxu0 0
        %1102 = vmatprep.subr.bf16.mxu0 0
        %1103 = vmatpush2.bf16.xpose.msra.mxu0 0
        %1104 = vmatprep.subr.bf16.mxu0 0
        %1105 = vmatpush2.bf16.xpose.msra.mxu0 0
        %1106 = vmatprep.subr.bf16.mxu0 0
        %1107 = vmatpush2.bf16.xpose.msra.mxu0 0
        %1108 = vmatprep.mubr.bf16.mxu0 0
        %1109 = vmatmul.mubr.bf16.gmra.mxu0 %v1071
        %v1110 = vpop.f32.mrf.mxu0
        %v1111 = vadd.f32 0.0, %v1110
        %v1112 = vpop.f32.mrf.mxu0
        %v1113 = vpop.f32.mrf.mxu0
        %v1114 = vpop.f32.mrf.mxu0
        %1115 = vdwg.mxu0
        %vm1116 = vcmask 64512
        %v1117 = vsel %vm1116, %v1065, -inf
        %1118 = vmax.xlane.f32.xlu0 %v1117
        %v1119 = vpop.xlane.xlu0 %1118
        %v1120 = vsel %vm1116, %v1111, -inf
        %1121 = vmax.xlane.f32.xlu0 %v1120
        %v1122 = vpop.xlane.xlu0 %1121
        %v1123 = vsub.f32 %v1065, %v1119
        %v1124 = vsub.f32 %v1111, %v1122
        %v1125 = vmul.f32 %v1123, 1.442695
        %v1126 = vpow.pop %v1125
        %v1127 = vmul.f32 %v1124, 1.442695
        %v1128 = vpow.pop %v1127
        %v1129 = vsel %vm1116, %v1126, 0.0
        %1130 = vadd.xlane.f32.xlu0 %v1129
        %v1131 = vpop.xlane.xlu0 %1130
        %v1132 = vsel %vm1116, %v1128, 0.0
        %1133 = vadd.xlane.f32.xlu0 %v1132
        %v1134 = vpop.xlane.xlu0 %1133
        %v1135 = vrcp.pop %v1131
        %v1136 = vrcp.pop %v1134
        %v1137 = vmul.f32 %v1131, %v1135
        %v1138 = vmul.f32 %v1134, %v1136
        %v1139 = vsub.f32 2.0, %v1137
        %v1140 = vsub.f32 2.0, %v1138
        %v1141 = vmul.f32 %v1135, %v1139
        %v1142 = vmul.f32 %v1136, %v1140
        %v1143 = vmul.f32 %v1126, %v1141
        %v1144 = vmul.f32 %v1128, %v1142
        %v1145 = vpack.c.bf16 %v1143, %v1143
        %v1146 = vpack.c.bf16 %v1144, %v1144
        %v1148 = vsel %vm1116, %v1145, 0
        %vm1150 = vcmask 1043456
        %v1152 = vsel %vm1150, %v1016, 0
        %1154 = vmatprep.subr.bf16.mxu0 0
        %1155 = vmatpush1.bf16.msra.mxu0 0
        %1156 = vmatprep.subr.bf16.mxu0 0
        %1157 = vmatpush1.bf16.msra.mxu0 0
        %1158 = vmatprep.subr.bf16.mxu0 0
        %1159 = vmatpush1.bf16.msra.mxu0 0
        %1160 = vmatprep.subr.bf16.mxu0 0
        %1161 = vmatpush1.bf16.msra.mxu0 0
        %1162 = vmatprep.subr.bf16.mxu0 0
        %1163 = vmatpush1.bf16.msra.mxu0 0
        %1164 = vmatprep.subr.bf16.mxu0 0
        %1165 = vmatpush1.bf16.msra.mxu0 0
        %1166 = vmatprep.subr.bf16.mxu0 0
        %1167 = vmatpush1.bf16.msra.mxu0 0
        %1168 = vmatprep.subr.bf16.mxu0 0
        %1169 = vmatpush1.bf16.msra.mxu0 %v1152
        %1170 = vmatprep.subr.bf16.mxu0 0
        %1171 = vmatpush2.bf16.msra.mxu0 0
        %1172 = vmatprep.subr.bf16.mxu0 0
        %1173 = vmatpush2.bf16.msra.mxu0 0
        %1174 = vmatprep.subr.bf16.mxu0 0
        %1175 = vmatpush2.bf16.msra.mxu0 0
        %1176 = vmatprep.subr.bf16.mxu0 0
        %1177 = vmatpush2.bf16.msra.mxu0 0
        %1178 = vmatprep.subr.bf16.mxu0 0
        %1179 = vmatpush2.bf16.msra.mxu0 0
        %1180 = vmatprep.subr.bf16.mxu0 0
        %1181 = vmatpush2.bf16.msra.mxu0 0
        %1182 = vmatprep.subr.bf16.mxu0 0
        %1183 = vmatpush2.bf16.msra.mxu0 0
        %1184 = vmatprep.subr.bf16.mxu0 0
        %1185 = vmatpush2.bf16.msra.mxu0 0
        %1186 = vmatprep.mubr.bf16.mxu0 0
        %1187 = vmatmul.mubr.bf16.gmra.mxu0 %v1148
        %v1188 = vpop.f32.mrf.mxu0
        %v1189 = vadd.f32 0.0, %v1188
        %v1190 = vpop.f32.mrf.mxu0
        %v1191 = vpop.f32.mrf.mxu0
        %v1192 = vpop.f32.mrf.mxu0
        %1193 = vdwg.mxu0
        %v1195 = vsel %vm1116, %v1146, 0
        %v1198 = vsel %vm1150, %v1020, 0
        %1200 = vmatprep.subr.bf16.mxu0 0
        %1201 = vmatpush1.bf16.msra.mxu0 0
        %1202 = vmatprep.subr.bf16.mxu0 0
        %1203 = vmatpush1.bf16.msra.mxu0 0
        %1204 = vmatprep.subr.bf16.mxu0 0
        %1205 = vmatpush1.bf16.msra.mxu0 0
        %1206 = vmatprep.subr.bf16.mxu0 0
        %1207 = vmatpush1.bf16.msra.mxu0 0
        %1208 = vmatprep.subr.bf16.mxu0 0
        %1209 = vmatpush1.bf16.msra.mxu0 0
        %1210 = vmatprep.subr.bf16.mxu0 0
        %1211 = vmatpush1.bf16.msra.mxu0 0
        %1212 = vmatprep.subr.bf16.mxu0 0
        %1213 = vmatpush1.bf16.msra.mxu0 0
        %1214 = vmatprep.subr.bf16.mxu0 0
        %1215 = vmatpush1.bf16.msra.mxu0 %v1198
        %1216 = vmatprep.subr.bf16.mxu0 0
        %1217 = vmatpush2.bf16.msra.mxu0 0
        %1218 = vmatprep.subr.bf16.mxu0 0
        %1219 = vmatpush2.bf16.msra.mxu0 0
        %1220 = vmatprep.subr.bf16.mxu0 0
        %1221 = vmatpush2.bf16.msra.mxu0 0
        %1222 = vmatprep.subr.bf16.mxu0 0
        %1223 = vmatpush2.bf16.msra.mxu0 0
        %1224 = vmatprep.subr.bf16.mxu0 0
        %1225 = vmatpush2.bf16.msra.mxu0 0
        %1226 = vmatprep.subr.bf16.mxu0 0
        %1227 = vmatpush2.bf16.msra.mxu0 0
        %1228 = vmatprep.subr.bf16.mxu0 0
        %1229 = vmatpush2.bf16.msra.mxu0 0
        %1230 = vmatprep.subr.bf16.mxu0 0
        %1231 = vmatpush2.bf16.msra.mxu0 0
        %1232 = vmatprep.mubr.bf16.mxu0 0
        %1233 = vmatmul.mubr.bf16.gmra.mxu0 %v1195
        %v1234 = vpop.f32.mrf.mxu0
        %v1235 = vadd.f32 0.0, %v1234
        %v1236 = vpop.f32.mrf.mxu0
        %v1237 = vpop.f32.mrf.mxu0
        %v1238 = vpop.f32.mrf.mxu0
        %1239 = vdwg.mxu0
        %1240 = vst.msk [vmem:[#allocation2] sm:$0xff] %vm410, %v1189
        %1241 = vst.msk [vmem:[#allocation2 + $0x20] sm:$0xff] %vm410, %v1235
        %1243 = vrot.lane.b32.xlu0 %v1000, 64
        %v1244 = vpop.permute.xlu0 %1243
        %1246 = vrot.lane.b32.xlu0 %v1008, 64
        %v1247 = vpop.permute.xlu0 %1246
        %v1249 = vsel %vm410, %v1244, 0
        %v1252 = vsel %vm410, %v1247, 0
        %1254 = vmatprep.subr.bf16.mxu0 0
        %1255 = vmatpush1.bf16.xpose.msra.mxu0 0
        %1256 = vmatprep.subr.bf16.mxu0 0
        %1257 = vmatpush1.bf16.xpose.msra.mxu0 0
        %1258 = vmatprep.subr.bf16.mxu0 0
        %1259 = vmatpush1.bf16.xpose.msra.mxu0 0
        %1260 = vmatprep.subr.bf16.mxu0 0
        %1261 = vmatpush1.bf16.xpose.msra.mxu0 0
        %1262 = vmatprep.subr.bf16.mxu0 0
        %1263 = vmatpush1.bf16.xpose.msra.mxu0 0
        %1264 = vmatprep.subr.bf16.mxu0 0
        %1265 = vmatpush1.bf16.xpose.msra.mxu0 0
        %1266 = vmatprep.subr.bf16.mxu0 0
        %1267 = vmatpush1.bf16.xpose.msra.mxu0 0
        %1268 = vmatprep.subr.bf16.mxu0 0
        %1269 = vmatpush1.bf16.xpose.msra.mxu0 %v1252
        %1270 = vmatprep.subr.bf16.mxu0 0
        %1271 = vmatpush2.bf16.xpose.msra.mxu0 0
        %1272 = vmatprep.subr.bf16.mxu0 0
        %1273 = vmatpush2.bf16.xpose.msra.mxu0 0
        %1274 = vmatprep.subr.bf16.mxu0 0
        %1275 = vmatpush2.bf16.xpose.msra.mxu0 0
        %1276 = vmatprep.subr.bf16.mxu0 0
        %1277 = vmatpush2.bf16.xpose.msra.mxu0 0
        %1278 = vmatprep.subr.bf16.mxu0 0
        %1279 = vmatpush2.bf16.xpose.msra.mxu0 0
        %1280 = vmatprep.subr.bf16.mxu0 0
        %1281 = vmatpush2.bf16.xpose.msra.mxu0 0
        %1282 = vmatprep.subr.bf16.mxu0 0
        %1283 = vmatpush2.bf16.xpose.msra.mxu0 0
        %1284 = vmatprep.subr.bf16.mxu0 0
        %1285 = vmatpush2.bf16.xpose.msra.mxu0 0
        %1286 = vmatprep.mubr.bf16.mxu0 0
        %1287 = vmatmul.mubr.bf16.gmra.mxu0 %v1249
        %v1288 = vpop.f32.mrf.mxu0
        %v1289 = vadd.f32 0.0, %v1288
        %v1290 = vpop.f32.mrf.mxu0
        %v1291 = vpop.f32.mrf.mxu0
        %v1292 = vpop.f32.mrf.mxu0
        %1293 = vdwg.mxu0
        %1295 = vrot.lane.b32.xlu0 %v1004, 64
        %v1296 = vpop.permute.xlu0 %1295
        %1298 = vrot.lane.b32.xlu0 %v1012, 64
        %v1299 = vpop.permute.xlu0 %1298
        %v1301 = vsel %vm410, %v1296, 0
        %v1304 = vsel %vm410, %v1299, 0
        %1306 = vmatprep.subr.bf16.mxu0 0
        %1307 = vmatpush1.bf16.xpose.msra.mxu0 0
        %1308 = vmatprep.subr.bf16.mxu0 0
        %1309 = vmatpush1.bf16.xpose.msra.mxu0 0
        %1310 = vmatprep.subr.bf16.mxu0 0
        %1311 = vmatpush1.bf16.xpose.msra.mxu0 0
        %1312 = vmatprep.subr.bf16.mxu0 0
        %1313 = vmatpush1.bf16.xpose.msra.mxu0 0
        %1314 = vmatprep.subr.bf16.mxu0 0
        %1315 = vmatpush1.bf16.xpose.msra.mxu0 0
        %1316 = vmatprep.subr.bf16.mxu0 0
        %1317 = vmatpush1.bf16.xpose.msra.mxu0 0
        %1318 = vmatprep.subr.bf16.mxu0 0
        %1319 = vmatpush1.bf16.xpose.msra.mxu0 0
        %1320 = vmatprep.subr.bf16.mxu0 0
        %1321 = vmatpush1.bf16.xpose.msra.mxu0 %v1304
        %1322 = vmatprep.subr.bf16.mxu0 0
        %1323 = vmatpush2.bf16.xpose.msra.mxu0 0
        %1324 = vmatprep.subr.bf16.mxu0 0
        %1325 = vmatpush2.bf16.xpose.msra.mxu0 0
        %1326 = vmatprep.subr.bf16.mxu0 0
        %1327 = vmatpush2.bf16.xpose.msra.mxu0 0
        %1328 = vmatprep.subr.bf16.mxu0 0
        %1329 = vmatpush2.bf16.xpose.msra.mxu0 0
        %1330 = vmatprep.subr.bf16.mxu0 0
        %1331 = vmatpush2.bf16.xpose.msra.mxu0 0
        %1332 = vmatprep.subr.bf16.mxu0 0
        %1333 = vmatpush2.bf16.xpose.msra.mxu0 0
        %1334 = vmatprep.subr.bf16.mxu0 0
        %1335 = vmatpush2.bf16.xpose.msra.mxu0 0
        %1336 = vmatprep.subr.bf16.mxu0 0
        %1337 = vmatpush2.bf16.xpose.msra.mxu0 0
        %1338 = vmatprep.mubr.bf16.mxu0 0
        %1339 = vmatmul.mubr.bf16.gmra.mxu0 %v1301
        %v1340 = vpop.f32.mrf.mxu0
        %v1341 = vadd.f32 0.0, %v1340
        %v1342 = vpop.f32.mrf.mxu0
        %v1343 = vpop.f32.mrf.mxu0
        %v1344 = vpop.f32.mrf.mxu0
        %1345 = vdwg.mxu0
        %v1346 = vsel %vm1116, %v1289, -inf
        %1347 = vmax.xlane.f32.xlu0 %v1346
        %v1348 = vpop.xlane.xlu0 %1347
        %v1349 = vsel %vm1116, %v1341, -inf
        %1350 = vmax.xlane.f32.xlu0 %v1349
        %v1351 = vpop.xlane.xlu0 %1350
        %v1352 = vsub.f32 %v1289, %v1348
        %v1353 = vsub.f32 %v1341, %v1351
        %v1354 = vmul.f32 %v1352, 1.442695
        %v1355 = vpow.pop %v1354
        %v1356 = vmul.f32 %v1353, 1.442695
        %v1357 = vpow.pop %v1356
        %v1358 = vsel %vm1116, %v1355, 0.0
        %1359 = vadd.xlane.f32.xlu0 %v1358
        %v1360 = vpop.xlane.xlu0 %1359
        %v1361 = vsel %vm1116, %v1357, 0.0
        %1362 = vadd.xlane.f32.xlu0 %v1361
        %v1363 = vpop.xlane.xlu0 %1362
        %v1364 = vrcp.pop %v1360
        %v1365 = vrcp.pop %v1363
        %v1366 = vmul.f32 %v1360, %v1364
        %v1367 = vmul.f32 %v1363, %v1365
        %v1368 = vsub.f32 2.0, %v1366
        %v1369 = vsub.f32 2.0, %v1367
        %v1370 = vmul.f32 %v1364, %v1368
        %v1371 = vmul.f32 %v1365, %v1369
        %v1372 = vmul.f32 %v1355, %v1370
        %v1373 = vmul.f32 %v1357, %v1371
        %v1374 = vpack.c.bf16 %v1372, %v1372
        %v1375 = vpack.c.bf16 %v1373, %v1373
        %1377 = vrot.lane.b32.xlu0 %v1016, 64
        %v1378 = vpop.permute.xlu0 %1377
        %v1380 = vsel %vm1116, %v1374, 0
        %v1383 = vsel %vm1150, %v1378, 0
        %1385 = vmatprep.subr.bf16.mxu0 0
        %1386 = vmatpush1.bf16.msra.mxu0 0
        %1387 = vmatprep.subr.bf16.mxu0 0
        %1388 = vmatpush1.bf16.msra.mxu0 0
        %1389 = vmatprep.subr.bf16.mxu0 0
        %1390 = vmatpush1.bf16.msra.mxu0 0
        %1391 = vmatprep.subr.bf16.mxu0 0
        %1392 = vmatpush1.bf16.msra.mxu0 0
        %1393 = vmatprep.subr.bf16.mxu0 0
        %1394 = vmatpush1.bf16.msra.mxu0 0
        %1395 = vmatprep.subr.bf16.mxu0 0
        %1396 = vmatpush1.bf16.msra.mxu0 0
        %1397 = vmatprep.subr.bf16.mxu0 0
        %1398 = vmatpush1.bf16.msra.mxu0 0
        %1399 = vmatprep.subr.bf16.mxu0 0
        %1400 = vmatpush1.bf16.msra.mxu0 %v1383
        %1401 = vmatprep.subr.bf16.mxu0 0
        %1402 = vmatpush2.bf16.msra.mxu0 0
        %1403 = vmatprep.subr.bf16.mxu0 0
        %1404 = vmatpush2.bf16.msra.mxu0 0
        %1405 = vmatprep.subr.bf16.mxu0 0
        %1406 = vmatpush2.bf16.msra.mxu0 0
        %1407 = vmatprep.subr.bf16.mxu0 0
        %1408 = vmatpush2.bf16.msra.mxu0 0
        %1409 = vmatprep.subr.bf16.mxu0 0
        %1410 = vmatpush2.bf16.msra.mxu0 0
        %1411 = vmatprep.subr.bf16.mxu0 0
        %1412 = vmatpush2.bf16.msra.mxu0 0
        %1413 = vmatprep.subr.bf16.mxu0 0
        %1414 = vmatpush2.bf16.msra.mxu0 0
        %1415 = vmatprep.subr.bf16.mxu0 0
        %1416 = vmatpush2.bf16.msra.mxu0 0
        %1417 = vmatprep.mubr.bf16.mxu0 0
        %1418 = vmatmul.mubr.bf16.gmra.mxu0 %v1380
        %v1419 = vpop.f32.mrf.mxu0
        %v1420 = vadd.f32 0.0, %v1419
        %v1421 = vpop.f32.mrf.mxu0
        %v1422 = vpop.f32.mrf.mxu0
        %v1423 = vpop.f32.mrf.mxu0
        %1424 = vdwg.mxu0
        %1426 = vrot.lane.b32.xlu0 %v1020, 64
        %v1427 = vpop.permute.xlu0 %1426
        %v1429 = vsel %vm1116, %v1375, 0
        %v1432 = vsel %vm1150, %v1427, 0
        %1434 = vmatprep.subr.bf16.mxu0 0
        %1435 = vmatpush1.bf16.msra.mxu0 0
        %1436 = vmatprep.subr.bf16.mxu0 0
        %1437 = vmatpush1.bf16.msra.mxu0 0
        %1438 = vmatprep.subr.bf16.mxu0 0
        %1439 = vmatpush1.bf16.msra.mxu0 0
        %1440 = vmatprep.subr.bf16.mxu0 0
        %1441 = vmatpush1.bf16.msra.mxu0 0
        %1442 = vmatprep.subr.bf16.mxu0 0
        %1443 = vmatpush1.bf16.msra.mxu0 0
        %1444 = vmatprep.subr.bf16.mxu0 0
        %1445 = vmatpush1.bf16.msra.mxu0 0
        %1446 = vmatprep.subr.bf16.mxu0 0
        %1447 = vmatpush1.bf16.msra.mxu0 0
        %1448 = vmatprep.subr.bf16.mxu0 0
        %1449 = vmatpush1.bf16.msra.mxu0 %v1432
        %1450 = vmatprep.subr.bf16.mxu0 0
        %1451 = vmatpush2.bf16.msra.mxu0 0
        %1452 = vmatprep.subr.bf16.mxu0 0
        %1453 = vmatpush2.bf16.msra.mxu0 0
        %1454 = vmatprep.subr.bf16.mxu0 0
        %1455 = vmatpush2.bf16.msra.mxu0 0
        %1456 = vmatprep.subr.bf16.mxu0 0
        %1457 = vmatpush2.bf16.msra.mxu0 0
        %1458 = vmatprep.subr.bf16.mxu0 0
        %1459 = vmatpush2.bf16.msra.mxu0 0
        %1460 = vmatprep.subr.bf16.mxu0 0
        %1461 = vmatpush2.bf16.msra.mxu0 0
        %1462 = vmatprep.subr.bf16.mxu0 0
        %1463 = vmatpush2.bf16.msra.mxu0 0
        %1464 = vmatprep.subr.bf16.mxu0 0
        %1465 = vmatpush2.bf16.msra.mxu0 0
        %1466 = vmatprep.mubr.bf16.mxu0 0
        %1467 = vmatmul.mubr.bf16.gmra.mxu0 %v1429
        %v1468 = vpop.f32.mrf.mxu0
        %v1469 = vadd.f32 0.0, %v1468
        %v1470 = vpop.f32.mrf.mxu0
        %v1471 = vpop.f32.mrf.mxu0
        %v1472 = vpop.f32.mrf.mxu0
        %1473 = vdwg.mxu0
        %1476 = vrot.lane.b32.xlu0 %v1420, 64
        %v1477 = vpop.permute.xlu0 %1476
        %1478 = vrot.lane.b32.xlu0 %v1469, 64
        %v1479 = vpop.permute.xlu0 %1478
        %vm1482 = vcmask 1048064
        %1483 = vst.msk [vmem:[#allocation2] sm:$0xff] %vm1482, %v1477
        %1484 = vst.msk [vmem:[#allocation2 + $0x20] sm:$0xff] %vm1482, %v1479
        %v1486 = vsel %vm410, %v1001, 0
        %v1489 = vsel %vm410, %v1009, 0
        %1491 = vmatprep.subr.bf16.mxu0 0
        %1492 = vmatpush1.bf16.xpose.msra.mxu0 0
        %1493 = vmatprep.subr.bf16.mxu0 0
        %1494 = vmatpush1.bf16.xpose.msra.mxu0 0
        %1495 = vmatprep.subr.bf16.mxu0 0
        %1496 = vmatpush1.bf16.xpose.msra.mxu0 0
        %1497 = vmatprep.subr.bf16.mxu0 0
        %1498 = vmatpush1.bf16.xpose.msra.mxu0 0
        %1499 = vmatprep.subr.bf16.mxu0 0
        %1500 = vmatpush1.bf16.xpose.msra.mxu0 0
        %1501 = vmatprep.subr.bf16.mxu0 0
        %1502 = vmatpush1.bf16.xpose.msra.mxu0 0
        %1503 = vmatprep.subr.bf16.mxu0 0
        %1504 = vmatpush1.bf16.xpose.msra.mxu0 0
        %1505 = vmatprep.subr.bf16.mxu0 0
        %1506 = vmatpush1.bf16.xpose.msra.mxu0 %v1489
        %1507 = vmatprep.subr.bf16.mxu0 0
        %1508 = vmatpush2.bf16.xpose.msra.mxu0 0
        %1509 = vmatprep.subr.bf16.mxu0 0
        %1510 = vmatpush2.bf16.xpose.msra.mxu0 0
        %1511 = vmatprep.subr.bf16.mxu0 0
        %1512 = vmatpush2.bf16.xpose.msra.mxu0 0
        %1513 = vmatprep.subr.bf16.mxu0 0
        %1514 = vmatpush2.bf16.xpose.msra.mxu0 0
        %1515 = vmatprep.subr.bf16.mxu0 0
        %1516 = vmatpush2.bf16.xpose.msra.mxu0 0
        %1517 = vmatprep.subr.bf16.mxu0 0
        %1518 = vmatpush2.bf16.xpose.msra.mxu0 0
        %1519 = vmatprep.subr.bf16.mxu0 0
        %1520 = vmatpush2.bf16.xpose.msra.mxu0 0
        %1521 = vmatprep.subr.bf16.mxu0 0
        %1522 = vmatpush2.bf16.xpose.msra.mxu0 0
        %1523 = vmatprep.mubr.bf16.mxu0 0
        %1524 = vmatmul.mubr.bf16.gmra.mxu0 %v1486
        %v1525 = vpop.f32.mrf.mxu0
        %v1526 = vadd.f32 0.0, %v1525
        %v1527 = vpop.f32.mrf.mxu0
        %v1528 = vpop.f32.mrf.mxu0
        %v1529 = vpop.f32.mrf.mxu0
        %1530 = vdwg.mxu0
        %v1532 = vsel %vm410, %v1005, 0
        %v1535 = vsel %vm410, %v1013, 0
        %1537 = vmatprep.subr.bf16.mxu0 0
        %1538 = vmatpush1.bf16.xpose.msra.mxu0 0
        %1539 = vmatprep.subr.bf16.mxu0 0
        %1540 = vmatpush1.bf16.xpose.msra.mxu0 0
        %1541 = vmatprep.subr.bf16.mxu0 0
        %1542 = vmatpush1.bf16.xpose.msra.mxu0 0
        %1543 = vmatprep.subr.bf16.mxu0 0
        %1544 = vmatpush1.bf16.xpose.msra.mxu0 0
        %1545 = vmatprep.subr.bf16.mxu0 0
        %1546 = vmatpush1.bf16.xpose.msra.mxu0 0
        %1547 = vmatprep.subr.bf16.mxu0 0
        %1548 = vmatpush1.bf16.xpose.msra.mxu0 0
        %1549 = vmatprep.subr.bf16.mxu0 0
        %1550 = vmatpush1.bf16.xpose.msra.mxu0 0
        %1551 = vmatprep.subr.bf16.mxu0 0
        %1552 = vmatpush1.bf16.xpose.msra.mxu0 %v1535
        %1553 = vmatprep.subr.bf16.mxu0 0
        %1554 = vmatpush2.bf16.xpose.msra.mxu0 0
        %1555 = vmatprep.subr.bf16.mxu0 0
        %1556 = vmatpush2.bf16.xpose.msra.mxu0 0
        %1557 = vmatprep.subr.bf16.mxu0 0
        %1558 = vmatpush2.bf16.xpose.msra.mxu0 0
        %1559 = vmatprep.subr.bf16.mxu0 0
        %1560 = vmatpush2.bf16.xpose.msra.mxu0 0
        %1561 = vmatprep.subr.bf16.mxu0 0
        %1562 = vmatpush2.bf16.xpose.msra.mxu0 0
        %1563 = vmatprep.subr.bf16.mxu0 0
        %1564 = vmatpush2.bf16.xpose.msra.mxu0 0
        %1565 = vmatprep.subr.bf16.mxu0 0
        %1566 = vmatpush2.bf16.xpose.msra.mxu0 0
        %1567 = vmatprep.subr.bf16.mxu0 0
        %1568 = vmatpush2.bf16.xpose.msra.mxu0 0
        %1569 = vmatprep.mubr.bf16.mxu0 0
        %1570 = vmatmul.mubr.bf16.gmra.mxu0 %v1532
        %v1571 = vpop.f32.mrf.mxu0
        %v1572 = vadd.f32 0.0, %v1571
        %v1573 = vpop.f32.mrf.mxu0
        %v1574 = vpop.f32.mrf.mxu0
        %v1575 = vpop.f32.mrf.mxu0
        %1576 = vdwg.mxu0
        %v1577 = vsel %vm1116, %v1526, -inf
        %1578 = vmax.xlane.f32.xlu0 %v1577
        %v1579 = vpop.xlane.xlu0 %1578
        %v1580 = vsel %vm1116, %v1572, -inf
        %1581 = vmax.xlane.f32.xlu0 %v1580
        %v1582 = vpop.xlane.xlu0 %1581
        %v1583 = vsub.f32 %v1526, %v1579
        %v1584 = vsub.f32 %v1572, %v1582
        %v1585 = vmul.f32 %v1583, 1.442695
        %v1586 = vpow.pop %v1585
        %v1587 = vmul.f32 %v1584, 1.442695
        %v1588 = vpow.pop %v1587
        %v1589 = vsel %vm1116, %v1586, 0.0
        %1590 = vadd.xlane.f32.xlu0 %v1589
        %v1591 = vpop.xlane.xlu0 %1590
        %v1592 = vsel %vm1116, %v1588, 0.0
        %1593 = vadd.xlane.f32.xlu0 %v1592
        %v1594 = vpop.xlane.xlu0 %1593
        %v1595 = vrcp.pop %v1591
        %v1596 = vrcp.pop %v1594
        %v1597 = vmul.f32 %v1591, %v1595
        %v1598 = vmul.f32 %v1594, %v1596
        %v1599 = vsub.f32 2.0, %v1597
        %v1600 = vsub.f32 2.0, %v1598
        %v1601 = vmul.f32 %v1595, %v1599
        %v1602 = vmul.f32 %v1596, %v1600
        %v1603 = vmul.f32 %v1586, %v1601
        %v1604 = vmul.f32 %v1588, %v1602
        %v1605 = vpack.c.bf16 %v1603, %v1603
        %v1606 = vpack.c.bf16 %v1604, %v1604
        %v1608 = vsel %vm1116, %v1605, 0
        %v1611 = vsel %vm1150, %v1017, 0
        %1613 = vmatprep.subr.bf16.mxu0 0
        %1614 = vmatpush1.bf16.msra.mxu0 0
        %1615 = vmatprep.subr.bf16.mxu0 0
        %1616 = vmatpush1.bf16.msra.mxu0 0
        %1617 = vmatprep.subr.bf16.mxu0 0
        %1618 = vmatpush1.bf16.msra.mxu0 0
        %1619 = vmatprep.subr.bf16.mxu0 0
        %1620 = vmatpush1.bf16.msra.mxu0 0
        %1621 = vmatprep.subr.bf16.mxu0 0
        %1622 = vmatpush1.bf16.msra.mxu0 0
        %1623 = vmatprep.subr.bf16.mxu0 0
        %1624 = vmatpush1.bf16.msra.mxu0 0
        %1625 = vmatprep.subr.bf16.mxu0 0
        %1626 = vmatpush1.bf16.msra.mxu0 0
        %1627 = vmatprep.subr.bf16.mxu0 0
        %1628 = vmatpush1.bf16.msra.mxu0 %v1611
        %1629 = vmatprep.subr.bf16.mxu0 0
        %1630 = vmatpush2.bf16.msra.mxu0 0
        %1631 = vmatprep.subr.bf16.mxu0 0
        %1632 = vmatpush2.bf16.msra.mxu0 0
        %1633 = vmatprep.subr.bf16.mxu0 0
        %1634 = vmatpush2.bf16.msra.mxu0 0
        %1635 = vmatprep.subr.bf16.mxu0 0
        %1636 = vmatpush2.bf16.msra.mxu0 0
        %1637 = vmatprep.subr.bf16.mxu0 0
        %1638 = vmatpush2.bf16.msra.mxu0 0
        %1639 = vmatprep.subr.bf16.mxu0 0
        %1640 = vmatpush2.bf16.msra.mxu0 0
        %1641 = vmatprep.subr.bf16.mxu0 0
        %1642 = vmatpush2.bf16.msra.mxu0 0
        %1643 = vmatprep.subr.bf16.mxu0 0
        %1644 = vmatpush2.bf16.msra.mxu0 0
        %1645 = vmatprep.mubr.bf16.mxu0 0
        %1646 = vmatmul.mubr.bf16.gmra.mxu0 %v1608
        %v1647 = vpop.f32.mrf.mxu0
        %v1648 = vadd.f32 0.0, %v1647
        %v1649 = vpop.f32.mrf.mxu0
        %v1650 = vpop.f32.mrf.mxu0
        %v1651 = vpop.f32.mrf.mxu0
        %1652 = vdwg.mxu0
        %v1654 = vsel %vm1116, %v1606, 0
        %v1657 = vsel %vm1150, %v1021, 0
        %1659 = vmatprep.subr.bf16.mxu0 0
        %1660 = vmatpush1.bf16.msra.mxu0 0
        %1661 = vmatprep.subr.bf16.mxu0 0
        %1662 = vmatpush1.bf16.msra.mxu0 0
        %1663 = vmatprep.subr.bf16.mxu0 0
        %1664 = vmatpush1.bf16.msra.mxu0 0
        %1665 = vmatprep.subr.bf16.mxu0 0
        %1666 = vmatpush1.bf16.msra.mxu0 0
        %1667 = vmatprep.subr.bf16.mxu0 0
        %1668 = vmatpush1.bf16.msra.mxu0 0
        %1669 = vmatprep.subr.bf16.mxu0 0
        %1670 = vmatpush1.bf16.msra.mxu0 0
        %1671 = vmatprep.subr.bf16.mxu0 0
        %1672 = vmatpush1.bf16.msra.mxu0 0
        %1673 = vmatprep.subr.bf16.mxu0 0
        %1674 = vmatpush1.bf16.msra.mxu0 %v1657
        %1675 = vmatprep.subr.bf16.mxu0 0
        %1676 = vmatpush2.bf16.msra.mxu0 0
        %1677 = vmatprep.subr.bf16.mxu0 0
        %1678 = vmatpush2.bf16.msra.mxu0 0
        %1679 = vmatprep.subr.bf16.mxu0 0
        %1680 = vmatpush2.bf16.msra.mxu0 0
        %1681 = vmatprep.subr.bf16.mxu0 0
        %1682 = vmatpush2.bf16.msra.mxu0 0
        %1683 = vmatprep.subr.bf16.mxu0 0
        %1684 = vmatpush2.bf16.msra.mxu0 0
        %1685 = vmatprep.subr.bf16.mxu0 0
        %1686 = vmatpush2.bf16.msra.mxu0 0
        %1687 = vmatprep.subr.bf16.mxu0 0
        %1688 = vmatpush2.bf16.msra.mxu0 0
        %1689 = vmatprep.subr.bf16.mxu0 0
        %1690 = vmatpush2.bf16.msra.mxu0 0
        %1691 = vmatprep.mubr.bf16.mxu0 0
        %1692 = vmatmul.mubr.bf16.gmra.mxu0 %v1654
        %v1693 = vpop.f32.mrf.mxu0
        %v1694 = vadd.f32 0.0, %v1693
        %v1695 = vpop.f32.mrf.mxu0
        %v1696 = vpop.f32.mrf.mxu0
        %v1697 = vpop.f32.mrf.mxu0
        %1698 = vdwg.mxu0
        %1699 = vst.msk [vmem:[#allocation2 + $0x8] sm:$0xff] %vm410, %v1648
        %1700 = vst.msk [vmem:[#allocation2 + $0x28] sm:$0xff] %vm410, %v1694
        %1702 = vrot.lane.b32.xlu0 %v1001, 64
        %v1703 = vpop.permute.xlu0 %1702
        %1705 = vrot.lane.b32.xlu0 %v1009, 64
        %v1706 = vpop.permute.xlu0 %1705
        %v1708 = vsel %vm410, %v1703, 0
        %v1711 = vsel %vm410, %v1706, 0
        %1713 = vmatprep.subr.bf16.mxu0 0
        %1714 = vmatpush1.bf16.xpose.msra.mxu0 0
        %1715 = vmatprep.subr.bf16.mxu0 0
        %1716 = vmatpush1.bf16.xpose.msra.mxu0 0
        %1717 = vmatprep.subr.bf16.mxu0 0
        %1718 = vmatpush1.bf16.xpose.msra.mxu0 0
        %1719 = vmatprep.subr.bf16.mxu0 0
        %1720 = vmatpush1.bf16.xpose.msra.mxu0 0
        %1721 = vmatprep.subr.bf16.mxu0 0
        %1722 = vmatpush1.bf16.xpose.msra.mxu0 0
        %1723 = vmatprep.subr.bf16.mxu0 0
        %1724 = vmatpush1.bf16.xpose.msra.mxu0 0
        %1725 = vmatprep.subr.bf16.mxu0 0
        %1726 = vmatpush1.bf16.xpose.msra.mxu0 0
        %1727 = vmatprep.subr.bf16.mxu0 0
        %1728 = vmatpush1.bf16.xpose.msra.mxu0 %v1711
        %1729 = vmatprep.subr.bf16.mxu0 0
        %1730 = vmatpush2.bf16.xpose.msra.mxu0 0
        %1731 = vmatprep.subr.bf16.mxu0 0
        %1732 = vmatpush2.bf16.xpose.msra.mxu0 0
        %1733 = vmatprep.subr.bf16.mxu0 0
        %1734 = vmatpush2.bf16.xpose.msra.mxu0 0
        %1735 = vmatprep.subr.bf16.mxu0 0
        %1736 = vmatpush2.bf16.xpose.msra.mxu0 0
        %1737 = vmatprep.subr.bf16.mxu0 0
        %1738 = vmatpush2.bf16.xpose.msra.mxu0 0
        %1739 = vmatprep.subr.bf16.mxu0 0
        %1740 = vmatpush2.bf16.xpose.msra.mxu0 0
        %1741 = vmatprep.subr.bf16.mxu0 0
        %1742 = vmatpush2.bf16.xpose.msra.mxu0 0
        %1743 = vmatprep.subr.bf16.mxu0 0
        %1744 = vmatpush2.bf16.xpose.msra.mxu0 0
        %1745 = vmatprep.mubr.bf16.mxu0 0
        %1746 = vmatmul.mubr.bf16.gmra.mxu0 %v1708
        %v1747 = vpop.f32.mrf.mxu0
        %v1748 = vadd.f32 0.0, %v1747
        %v1749 = vpop.f32.mrf.mxu0
        %v1750 = vpop.f32.mrf.mxu0
        %v1751 = vpop.f32.mrf.mxu0
        %1752 = vdwg.mxu0
        %1754 = vrot.lane.b32.xlu0 %v1005, 64
        %v1755 = vpop.permute.xlu0 %1754
        %1757 = vrot.lane.b32.xlu0 %v1013, 64
        %v1758 = vpop.permute.xlu0 %1757
        %v1760 = vsel %vm410, %v1755, 0
        %v1763 = vsel %vm410, %v1758, 0
        %1765 = vmatprep.subr.bf16.mxu0 0
        %1766 = vmatpush1.bf16.xpose.msra.mxu0 0
        %1767 = vmatprep.subr.bf16.mxu0 0
        %1768 = vmatpush1.bf16.xpose.msra.mxu0 0
        %1769 = vmatprep.subr.bf16.mxu0 0
        %1770 = vmatpush1.bf16.xpose.msra.mxu0 0
        %1771 = vmatprep.subr.bf16.mxu0 0
        %1772 = vmatpush1.bf16.xpose.msra.mxu0 0
        %1773 = vmatprep.subr.bf16.mxu0 0
        %1774 = vmatpush1.bf16.xpose.msra.mxu0 0
        %1775 = vmatprep.subr.bf16.mxu0 0
        %1776 = vmatpush1.bf16.xpose.msra.mxu0 0
        %1777 = vmatprep.subr.bf16.mxu0 0
        %1778 = vmatpush1.bf16.xpose.msra.mxu0 0
        %1779 = vmatprep.subr.bf16.mxu0 0
        %1780 = vmatpush1.bf16.xpose.msra.mxu0 %v1763
        %1781 = vmatprep.subr.bf16.mxu0 0
        %1782 = vmatpush2.bf16.xpose.msra.mxu0 0
        %1783 = vmatprep.subr.bf16.mxu0 0
        %1784 = vmatpush2.bf16.xpose.msra.mxu0 0
        %1785 = vmatprep.subr.bf16.mxu0 0
        %1786 = vmatpush2.bf16.xpose.msra.mxu0 0
        %1787 = vmatprep.subr.bf16.mxu0 0
        %1788 = vmatpush2.bf16.xpose.msra.mxu0 0
        %1789 = vmatprep.subr.bf16.mxu0 0
        %1790 = vmatpush2.bf16.xpose.msra.mxu0 0
        %1791 = vmatprep.subr.bf16.mxu0 0
        %1792 = vmatpush2.bf16.xpose.msra.mxu0 0
        %1793 = vmatprep.subr.bf16.mxu0 0
        %1794 = vmatpush2.bf16.xpose.msra.mxu0 0
        %1795 = vmatprep.subr.bf16.mxu0 0
        %1796 = vmatpush2.bf16.xpose.msra.mxu0 0
        %1797 = vmatprep.mubr.bf16.mxu0 0
        %1798 = vmatmul.mubr.bf16.gmra.mxu0 %v1760
        %v1799 = vpop.f32.mrf.mxu0
        %v1800 = vadd.f32 0.0, %v1799
        %v1801 = vpop.f32.mrf.mxu0
        %v1802 = vpop.f32.mrf.mxu0
        %v1803 = vpop.f32.mrf.mxu0
        %1804 = vdwg.mxu0
        %v1805 = vsel %vm1116, %v1748, -inf
        %1806 = vmax.xlane.f32.xlu0 %v1805
        %v1807 = vpop.xlane.xlu0 %1806
        %v1808 = vsel %vm1116, %v1800, -inf
        %1809 = vmax.xlane.f32.xlu0 %v1808
        %v1810 = vpop.xlane.xlu0 %1809
        %v1811 = vsub.f32 %v1748, %v1807
        %v1812 = vsub.f32 %v1800, %v1810
        %v1813 = vmul.f32 %v1811, 1.442695
        %v1814 = vpow.pop %v1813
        %v1815 = vmul.f32 %v1812, 1.442695
        %v1816 = vpow.pop %v1815
        %v1817 = vsel %vm1116, %v1814, 0.0
        %1818 = vadd.xlane.f32.xlu0 %v1817
        %v1819 = vpop.xlane.xlu0 %1818
        %v1820 = vsel %vm1116, %v1816, 0.0
        %1821 = vadd.xlane.f32.xlu0 %v1820
        %v1822 = vpop.xlane.xlu0 %1821
        %v1823 = vrcp.pop %v1819
        %v1824 = vrcp.pop %v1822
        %v1825 = vmul.f32 %v1819, %v1823
        %v1826 = vmul.f32 %v1822, %v1824
        %v1827 = vsub.f32 2.0, %v1825
        %v1828 = vsub.f32 2.0, %v1826
        %v1829 = vmul.f32 %v1823, %v1827
        %v1830 = vmul.f32 %v1824, %v1828
        %v1831 = vmul.f32 %v1814, %v1829
        %v1832 = vmul.f32 %v1816, %v1830
        %v1833 = vpack.c.bf16 %v1831, %v1831
        %v1834 = vpack.c.bf16 %v1832, %v1832
        %1836 = vrot.lane.b32.xlu0 %v1017, 64
        %v1837 = vpop.permute.xlu0 %1836
        %v1839 = vsel %vm1116, %v1833, 0
        %v1842 = vsel %vm1150, %v1837, 0
        %1844 = vmatprep.subr.bf16.mxu0 0
        %1845 = vmatpush1.bf16.msra.mxu0 0
        %1846 = vmatprep.subr.bf16.mxu0 0
        %1847 = vmatpush1.bf16.msra.mxu0 0
        %1848 = vmatprep.subr.bf16.mxu0 0
        %1849 = vmatpush1.bf16.msra.mxu0 0
        %1850 = vmatprep.subr.bf16.mxu0 0
        %1851 = vmatpush1.bf16.msra.mxu0 0
        %1852 = vmatprep.subr.bf16.mxu0 0
        %1853 = vmatpush1.bf16.msra.mxu0 0
        %1854 = vmatprep.subr.bf16.mxu0 0
        %1855 = vmatpush1.bf16.msra.mxu0 0
        %1856 = vmatprep.subr.bf16.mxu0 0
        %1857 = vmatpush1.bf16.msra.mxu0 0
        %1858 = vmatprep.subr.bf16.mxu0 0
        %1859 = vmatpush1.bf16.msra.mxu0 %v1842
        %1860 = vmatprep.subr.bf16.mxu0 0
        %1861 = vmatpush2.bf16.msra.mxu0 0
        %1862 = vmatprep.subr.bf16.mxu0 0
        %1863 = vmatpush2.bf16.msra.mxu0 0
        %1864 = vmatprep.subr.bf16.mxu0 0
        %1865 = vmatpush2.bf16.msra.mxu0 0
        %1866 = vmatprep.subr.bf16.mxu0 0
        %1867 = vmatpush2.bf16.msra.mxu0 0
        %1868 = vmatprep.subr.bf16.mxu0 0
        %1869 = vmatpush2.bf16.msra.mxu0 0
        %1870 = vmatprep.subr.bf16.mxu0 0
        %1871 = vmatpush2.bf16.msra.mxu0 0
        %1872 = vmatprep.subr.bf16.mxu0 0
        %1873 = vmatpush2.bf16.msra.mxu0 0
        %1874 = vmatprep.subr.bf16.mxu0 0
        %1875 = vmatpush2.bf16.msra.mxu0 0
        %1876 = vmatprep.mubr.bf16.mxu0 0
        %1877 = vmatmul.mubr.bf16.gmra.mxu0 %v1839
        %v1878 = vpop.f32.mrf.mxu0
        %v1879 = vadd.f32 0.0, %v1878
        %v1880 = vpop.f32.mrf.mxu0
        %v1881 = vpop.f32.mrf.mxu0
        %v1882 = vpop.f32.mrf.mxu0
        %1883 = vdwg.mxu0
        %1885 = vrot.lane.b32.xlu0 %v1021, 64
        %v1886 = vpop.permute.xlu0 %1885
        %v1888 = vsel %vm1116, %v1834, 0
        %v1891 = vsel %vm1150, %v1886, 0
        %1893 = vmatprep.subr.bf16.mxu0 0
        %1894 = vmatpush1.bf16.msra.mxu0 0
        %1895 = vmatprep.subr.bf16.mxu0 0
        %1896 = vmatpush1.bf16.msra.mxu0 0
        %1897 = vmatprep.subr.bf16.mxu0 0
        %1898 = vmatpush1.bf16.msra.mxu0 0
        %1899 = vmatprep.subr.bf16.mxu0 0
        %1900 = vmatpush1.bf16.msra.mxu0 0
        %1901 = vmatprep.subr.bf16.mxu0 0
        %1902 = vmatpush1.bf16.msra.mxu0 0
        %1903 = vmatprep.subr.bf16.mxu0 0
        %1904 = vmatpush1.bf16.msra.mxu0 0
        %1905 = vmatprep.subr.bf16.mxu0 0
        %1906 = vmatpush1.bf16.msra.mxu0 0
        %1907 = vmatprep.subr.bf16.mxu0 0
        %1908 = vmatpush1.bf16.msra.mxu0 %v1891
        %1909 = vmatprep.subr.bf16.mxu0 0
        %1910 = vmatpush2.bf16.msra.mxu0 0
        %1911 = vmatprep.subr.bf16.mxu0 0
        %1912 = vmatpush2.bf16.msra.mxu0 0
        %1913 = vmatprep.subr.bf16.mxu0 0
        %1914 = vmatpush2.bf16.msra.mxu0 0
        %1915 = vmatprep.subr.bf16.mxu0 0
        %1916 = vmatpush2.bf16.msra.mxu0 0
        %1917 = vmatprep.subr.bf16.mxu0 0
        %1918 = vmatpush2.bf16.msra.mxu0 0
        %1919 = vmatprep.subr.bf16.mxu0 0
        %1920 = vmatpush2.bf16.msra.mxu0 0
        %1921 = vmatprep.subr.bf16.mxu0 0
        %1922 = vmatpush2.bf16.msra.mxu0 0
        %1923 = vmatprep.subr.bf16.mxu0 0
        %1924 = vmatpush2.bf16.msra.mxu0 0
        %1925 = vmatprep.mubr.bf16.mxu0 0
        %1926 = vmatmul.mubr.bf16.gmra.mxu0 %v1888
        %v1927 = vpop.f32.mrf.mxu0
        %v1928 = vadd.f32 0.0, %v1927
        %v1929 = vpop.f32.mrf.mxu0
        %v1930 = vpop.f32.mrf.mxu0
        %v1931 = vpop.f32.mrf.mxu0
        %1932 = vdwg.mxu0
        %1935 = vrot.lane.b32.xlu0 %v1879, 64
        %v1936 = vpop.permute.xlu0 %1935
        %1937 = vrot.lane.b32.xlu0 %v1928, 64
        %v1938 = vpop.permute.xlu0 %1937
        %1941 = vst.msk [vmem:[#allocation2 + $0x8] sm:$0xff] %vm1482, %v1936
        %1942 = vst.msk [vmem:[#allocation2 + $0x28] sm:$0xff] %vm1482, %v1938
        %v1944 = vsel %vm410, %v1002, 0
        %v1947 = vsel %vm410, %v1010, 0
        %1949 = vmatprep.subr.bf16.mxu0 0
        %1950 = vmatpush1.bf16.xpose.msra.mxu0 0
        %1951 = vmatprep.subr.bf16.mxu0 0
        %1952 = vmatpush1.bf16.xpose.msra.mxu0 0
        %1953 = vmatprep.subr.bf16.mxu0 0
        %1954 = vmatpush1.bf16.xpose.msra.mxu0 0
        %1955 = vmatprep.subr.bf16.mxu0 0
        %1956 = vmatpush1.bf16.xpose.msra.mxu0 0
        %1957 = vmatprep.subr.bf16.mxu0 0
        %1958 = vmatpush1.bf16.xpose.msra.mxu0 0
        %1959 = vmatprep.subr.bf16.mxu0 0
        %1960 = vmatpush1.bf16.xpose.msra.mxu0 0
        %1961 = vmatprep.subr.bf16.mxu0 0
        %1962 = vmatpush1.bf16.xpose.msra.mxu0 0
        %1963 = vmatprep.subr.bf16.mxu0 0
        %1964 = vmatpush1.bf16.xpose.msra.mxu0 %v1947
        %1965 = vmatprep.subr.bf16.mxu0 0
        %1966 = vmatpush2.bf16.xpose.msra.mxu0 0
        %1967 = vmatprep.subr.bf16.mxu0 0
        %1968 = vmatpush2.bf16.xpose.msra.mxu0 0
        %1969 = vmatprep.subr.bf16.mxu0 0
        %1970 = vmatpush2.bf16.xpose.msra.mxu0 0
        %1971 = vmatprep.subr.bf16.mxu0 0
        %1972 = vmatpush2.bf16.xpose.msra.mxu0 0
        %1973 = vmatprep.subr.bf16.mxu0 0
        %1974 = vmatpush2.bf16.xpose.msra.mxu0 0
        %1975 = vmatprep.subr.bf16.mxu0 0
        %1976 = vmatpush2.bf16.xpose.msra.mxu0 0
        %1977 = vmatprep.subr.bf16.mxu0 0
        %1978 = vmatpush2.bf16.xpose.msra.mxu0 0
        %1979 = vmatprep.subr.bf16.mxu0 0
        %1980 = vmatpush2.bf16.xpose.msra.mxu0 0
        %1981 = vmatprep.mubr.bf16.mxu0 0
        %1982 = vmatmul.mubr.bf16.gmra.mxu0 %v1944
        %v1983 = vpop.f32.mrf.mxu0
        %v1984 = vadd.f32 0.0, %v1983
        %v1985 = vpop.f32.mrf.mxu0
        %v1986 = vpop.f32.mrf.mxu0
        %v1987 = vpop.f32.mrf.mxu0
        %1988 = vdwg.mxu0
        %v1990 = vsel %vm410, %v1006, 0
        %v1993 = vsel %vm410, %v1014, 0
        %1995 = vmatprep.subr.bf16.mxu0 0
        %1996 = vmatpush1.bf16.xpose.msra.mxu0 0
        %1997 = vmatprep.subr.bf16.mxu0 0
        %1998 = vmatpush1.bf16.xpose.msra.mxu0 0
        %1999 = vmatprep.subr.bf16.mxu0 0
        %2000 = vmatpush1.bf16.xpose.msra.mxu0 0
        %2001 = vmatprep.subr.bf16.mxu0 0
        %2002 = vmatpush1.bf16.xpose.msra.mxu0 0
        %2003 = vmatprep.subr.bf16.mxu0 0
        %2004 = vmatpush1.bf16.xpose.msra.mxu0 0
        %2005 = vmatprep.subr.bf16.mxu0 0
        %2006 = vmatpush1.bf16.xpose.msra.mxu0 0
        %2007 = vmatprep.subr.bf16.mxu0 0
        %2008 = vmatpush1.bf16.xpose.msra.mxu0 0
        %2009 = vmatprep.subr.bf16.mxu0 0
        %2010 = vmatpush1.bf16.xpose.msra.mxu0 %v1993
        %2011 = vmatprep.subr.bf16.mxu0 0
        %2012 = vmatpush2.bf16.xpose.msra.mxu0 0
        %2013 = vmatprep.subr.bf16.mxu0 0
        %2014 = vmatpush2.bf16.xpose.msra.mxu0 0
        %2015 = vmatprep.subr.bf16.mxu0 0
        %2016 = vmatpush2.bf16.xpose.msra.mxu0 0
        %2017 = vmatprep.subr.bf16.mxu0 0
        %2018 = vmatpush2.bf16.xpose.msra.mxu0 0
        %2019 = vmatprep.subr.bf16.mxu0 0
        %2020 = vmatpush2.bf16.xpose.msra.mxu0 0
        %2021 = vmatprep.subr.bf16.mxu0 0
        %2022 = vmatpush2.bf16.xpose.msra.mxu0 0
        %2023 = vmatprep.subr.bf16.mxu0 0
        %2024 = vmatpush2.bf16.xpose.msra.mxu0 0
        %2025 = vmatprep.subr.bf16.mxu0 0
        %2026 = vmatpush2.bf16.xpose.msra.mxu0 0
        %2027 = vmatprep.mubr.bf16.mxu0 0
        %2028 = vmatmul.mubr.bf16.gmra.mxu0 %v1990
        %v2029 = vpop.f32.mrf.mxu0
        %v2030 = vadd.f32 0.0, %v2029
        %v2031 = vpop.f32.mrf.mxu0
        %v2032 = vpop.f32.mrf.mxu0
        %v2033 = vpop.f32.mrf.mxu0
        %2034 = vdwg.mxu0
        %v2035 = vsel %vm1116, %v1984, -inf
        %2036 = vmax.xlane.f32.xlu0 %v2035
        %v2037 = vpop.xlane.xlu0 %2036
        %v2038 = vsel %vm1116, %v2030, -inf
        %2039 = vmax.xlane.f32.xlu0 %v2038
        %v2040 = vpop.xlane.xlu0 %2039
        %v2041 = vsub.f32 %v1984, %v2037
        %v2042 = vsub.f32 %v2030, %v2040
        %v2043 = vmul.f32 %v2041, 1.442695
        %v2044 = vpow.pop %v2043
        %v2045 = vmul.f32 %v2042, 1.442695
        %v2046 = vpow.pop %v2045
        %v2047 = vsel %vm1116, %v2044, 0.0
        %2048 = vadd.xlane.f32.xlu0 %v2047
        %v2049 = vpop.xlane.xlu0 %2048
        %v2050 = vsel %vm1116, %v2046, 0.0
        %2051 = vadd.xlane.f32.xlu0 %v2050
        %v2052 = vpop.xlane.xlu0 %2051
        %v2053 = vrcp.pop %v2049
        %v2054 = vrcp.pop %v2052
        %v2055 = vmul.f32 %v2049, %v2053
        %v2056 = vmul.f32 %v2052, %v2054
        %v2057 = vsub.f32 2.0, %v2055
        %v2058 = vsub.f32 2.0, %v2056
        %v2059 = vmul.f32 %v2053, %v2057
        %v2060 = vmul.f32 %v2054, %v2058
        %v2061 = vmul.f32 %v2044, %v2059
        %v2062 = vmul.f32 %v2046, %v2060
        %v2063 = vpack.c.bf16 %v2061, %v2061
        %v2064 = vpack.c.bf16 %v2062, %v2062
        %v2066 = vsel %vm1116, %v2063, 0
        %v2069 = vsel %vm1150, %v1018, 0
        %2071 = vmatprep.subr.bf16.mxu0 0
        %2072 = vmatpush1.bf16.msra.mxu0 0
        %2073 = vmatprep.subr.bf16.mxu0 0
        %2074 = vmatpush1.bf16.msra.mxu0 0
        %2075 = vmatprep.subr.bf16.mxu0 0
        %2076 = vmatpush1.bf16.msra.mxu0 0
        %2077 = vmatprep.subr.bf16.mxu0 0
        %2078 = vmatpush1.bf16.msra.mxu0 0
        %2079 = vmatprep.subr.bf16.mxu0 0
        %2080 = vmatpush1.bf16.msra.mxu0 0
        %2081 = vmatprep.subr.bf16.mxu0 0
        %2082 = vmatpush1.bf16.msra.mxu0 0
        %2083 = vmatprep.subr.bf16.mxu0 0
        %2084 = vmatpush1.bf16.msra.mxu0 0
        %2085 = vmatprep.subr.bf16.mxu0 0
        %2086 = vmatpush1.bf16.msra.mxu0 %v2069
        %2087 = vmatprep.subr.bf16.mxu0 0
        %2088 = vmatpush2.bf16.msra.mxu0 0
        %2089 = vmatprep.subr.bf16.mxu0 0
        %2090 = vmatpush2.bf16.msra.mxu0 0
        %2091 = vmatprep.subr.bf16.mxu0 0
        %2092 = vmatpush2.bf16.msra.mxu0 0
        %2093 = vmatprep.subr.bf16.mxu0 0
        %2094 = vmatpush2.bf16.msra.mxu0 0
        %2095 = vmatprep.subr.bf16.mxu0 0
        %2096 = vmatpush2.bf16.msra.mxu0 0
        %2097 = vmatprep.subr.bf16.mxu0 0
        %2098 = vmatpush2.bf16.msra.mxu0 0
        %2099 = vmatprep.subr.bf16.mxu0 0
        %2100 = vmatpush2.bf16.msra.mxu0 0
        %2101 = vmatprep.subr.bf16.mxu0 0
        %2102 = vmatpush2.bf16.msra.mxu0 0
        %2103 = vmatprep.mubr.bf16.mxu0 0
        %2104 = vmatmul.mubr.bf16.gmra.mxu0 %v2066
        %v2105 = vpop.f32.mrf.mxu0
        %v2106 = vadd.f32 0.0, %v2105
        %v2107 = vpop.f32.mrf.mxu0
        %v2108 = vpop.f32.mrf.mxu0
        %v2109 = vpop.f32.mrf.mxu0
        %2110 = vdwg.mxu0
        %v2112 = vsel %vm1116, %v2064, 0
        %v2115 = vsel %vm1150, %v1022, 0
        %2117 = vmatprep.subr.bf16.mxu0 0
        %2118 = vmatpush1.bf16.msra.mxu0 0
        %2119 = vmatprep.subr.bf16.mxu0 0
        %2120 = vmatpush1.bf16.msra.mxu0 0
        %2121 = vmatprep.subr.bf16.mxu0 0
        %2122 = vmatpush1.bf16.msra.mxu0 0
        %2123 = vmatprep.subr.bf16.mxu0 0
        %2124 = vmatpush1.bf16.msra.mxu0 0
        %2125 = vmatprep.subr.bf16.mxu0 0
        %2126 = vmatpush1.bf16.msra.mxu0 0
        %2127 = vmatprep.subr.bf16.mxu0 0
        %2128 = vmatpush1.bf16.msra.mxu0 0
        %2129 = vmatprep.subr.bf16.mxu0 0
        %2130 = vmatpush1.bf16.msra.mxu0 0
        %2131 = vmatprep.subr.bf16.mxu0 0
        %2132 = vmatpush1.bf16.msra.mxu0 %v2115
        %2133 = vmatprep.subr.bf16.mxu0 0
        %2134 = vmatpush2.bf16.msra.mxu0 0
        %2135 = vmatprep.subr.bf16.mxu0 0
        %2136 = vmatpush2.bf16.msra.mxu0 0
        %2137 = vmatprep.subr.bf16.mxu0 0
        %2138 = vmatpush2.bf16.msra.mxu0 0
        %2139 = vmatprep.subr.bf16.mxu0 0
        %2140 = vmatpush2.bf16.msra.mxu0 0
        %2141 = vmatprep.subr.bf16.mxu0 0
        %2142 = vmatpush2.bf16.msra.mxu0 0
        %2143 = vmatprep.subr.bf16.mxu0 0
        %2144 = vmatpush2.bf16.msra.mxu0 0
        %2145 = vmatprep.subr.bf16.mxu0 0
        %2146 = vmatpush2.bf16.msra.mxu0 0
        %2147 = vmatprep.subr.bf16.mxu0 0
        %2148 = vmatpush2.bf16.msra.mxu0 0
        %2149 = vmatprep.mubr.bf16.mxu0 0
        %2150 = vmatmul.mubr.bf16.gmra.mxu0 %v2112
        %v2151 = vpop.f32.mrf.mxu0
        %v2152 = vadd.f32 0.0, %v2151
        %v2153 = vpop.f32.mrf.mxu0
        %v2154 = vpop.f32.mrf.mxu0
        %v2155 = vpop.f32.mrf.mxu0
        %2156 = vdwg.mxu0
        %2157 = vst.msk [vmem:[#allocation2 + $0x10] sm:$0xff] %vm410, %v2106
        %2158 = vst.msk [vmem:[#allocation2 + $0x30] sm:$0xff] %vm410, %v2152
        %2160 = vrot.lane.b32.xlu0 %v1002, 64
        %v2161 = vpop.permute.xlu0 %2160
        %2163 = vrot.lane.b32.xlu0 %v1010, 64
        %v2164 = vpop.permute.xlu0 %2163
        %v2166 = vsel %vm410, %v2161, 0
        %v2169 = vsel %vm410, %v2164, 0
        %2171 = vmatprep.subr.bf16.mxu0 0
        %2172 = vmatpush1.bf16.xpose.msra.mxu0 0
        %2173 = vmatprep.subr.bf16.mxu0 0
        %2174 = vmatpush1.bf16.xpose.msra.mxu0 0
        %2175 = vmatprep.subr.bf16.mxu0 0
        %2176 = vmatpush1.bf16.xpose.msra.mxu0 0
        %2177 = vmatprep.subr.bf16.mxu0 0
        %2178 = vmatpush1.bf16.xpose.msra.mxu0 0
        %2179 = vmatprep.subr.bf16.mxu0 0
        %2180 = vmatpush1.bf16.xpose.msra.mxu0 0
        %2181 = vmatprep.subr.bf16.mxu0 0
        %2182 = vmatpush1.bf16.xpose.msra.mxu0 0
        %2183 = vmatprep.subr.bf16.mxu0 0
        %2184 = vmatpush1.bf16.xpose.msra.mxu0 0
        %2185 = vmatprep.subr.bf16.mxu0 0
        %2186 = vmatpush1.bf16.xpose.msra.mxu0 %v2169
        %2187 = vmatprep.subr.bf16.mxu0 0
        %2188 = vmatpush2.bf16.xpose.msra.mxu0 0
        %2189 = vmatprep.subr.bf16.mxu0 0
        %2190 = vmatpush2.bf16.xpose.msra.mxu0 0
        %2191 = vmatprep.subr.bf16.mxu0 0
        %2192 = vmatpush2.bf16.xpose.msra.mxu0 0
        %2193 = vmatprep.subr.bf16.mxu0 0
        %2194 = vmatpush2.bf16.xpose.msra.mxu0 0
        %2195 = vmatprep.subr.bf16.mxu0 0
        %2196 = vmatpush2.bf16.xpose.msra.mxu0 0
        %2197 = vmatprep.subr.bf16.mxu0 0
        %2198 = vmatpush2.bf16.xpose.msra.mxu0 0
        %2199 = vmatprep.subr.bf16.mxu0 0
        %2200 = vmatpush2.bf16.xpose.msra.mxu0 0
        %2201 = vmatprep.subr.bf16.mxu0 0
        %2202 = vmatpush2.bf16.xpose.msra.mxu0 0
        %2203 = vmatprep.mubr.bf16.mxu0 0
        %2204 = vmatmul.mubr.bf16.gmra.mxu0 %v2166
        %v2205 = vpop.f32.mrf.mxu0
        %v2206 = vadd.f32 0.0, %v2205
        %v2207 = vpop.f32.mrf.mxu0
        %v2208 = vpop.f32.mrf.mxu0
        %v2209 = vpop.f32.mrf.mxu0
        %2210 = vdwg.mxu0
        %2212 = vrot.lane.b32.xlu0 %v1006, 64
        %v2213 = vpop.permute.xlu0 %2212
        %2215 = vrot.lane.b32.xlu0 %v1014, 64
        %v2216 = vpop.permute.xlu0 %2215
        %v2218 = vsel %vm410, %v2213, 0
        %v2221 = vsel %vm410, %v2216, 0
        %2223 = vmatprep.subr.bf16.mxu0 0
        %2224 = vmatpush1.bf16.xpose.msra.mxu0 0
        %2225 = vmatprep.subr.bf16.mxu0 0
        %2226 = vmatpush1.bf16.xpose.msra.mxu0 0
        %2227 = vmatprep.subr.bf16.mxu0 0
        %2228 = vmatpush1.bf16.xpose.msra.mxu0 0
        %2229 = vmatprep.subr.bf16.mxu0 0
        %2230 = vmatpush1.bf16.xpose.msra.mxu0 0
        %2231 = vmatprep.subr.bf16.mxu0 0
        %2232 = vmatpush1.bf16.xpose.msra.mxu0 0
        %2233 = vmatprep.subr.bf16.mxu0 0
        %2234 = vmatpush1.bf16.xpose.msra.mxu0 0
        %2235 = vmatprep.subr.bf16.mxu0 0
        %2236 = vmatpush1.bf16.xpose.msra.mxu0 0
        %2237 = vmatprep.subr.bf16.mxu0 0
        %2238 = vmatpush1.bf16.xpose.msra.mxu0 %v2221
        %2239 = vmatprep.subr.bf16.mxu0 0
        %2240 = vmatpush2.bf16.xpose.msra.mxu0 0
        %2241 = vmatprep.subr.bf16.mxu0 0
        %2242 = vmatpush2.bf16.xpose.msra.mxu0 0
        %2243 = vmatprep.subr.bf16.mxu0 0
        %2244 = vmatpush2.bf16.xpose.msra.mxu0 0
        %2245 = vmatprep.subr.bf16.mxu0 0
        %2246 = vmatpush2.bf16.xpose.msra.mxu0 0
        %2247 = vmatprep.subr.bf16.mxu0 0
        %2248 = vmatpush2.bf16.xpose.msra.mxu0 0
        %2249 = vmatprep.subr.bf16.mxu0 0
        %2250 = vmatpush2.bf16.xpose.msra.mxu0 0
        %2251 = vmatprep.subr.bf16.mxu0 0
        %2252 = vmatpush2.bf16.xpose.msra.mxu0 0
        %2253 = vmatprep.subr.bf16.mxu0 0
        %2254 = vmatpush2.bf16.xpose.msra.mxu0 0
        %2255 = vmatprep.mubr.bf16.mxu0 0
        %2256 = vmatmul.mubr.bf16.gmra.mxu0 %v2218
        %v2257 = vpop.f32.mrf.mxu0
        %v2258 = vadd.f32 0.0, %v2257
        %v2259 = vpop.f32.mrf.mxu0
        %v2260 = vpop.f32.mrf.mxu0
        %v2261 = vpop.f32.mrf.mxu0
        %2262 = vdwg.mxu0
        %v2263 = vsel %vm1116, %v2206, -inf
        %2264 = vmax.xlane.f32.xlu0 %v2263
        %v2265 = vpop.xlane.xlu0 %2264
        %v2266 = vsel %vm1116, %v2258, -inf
        %2267 = vmax.xlane.f32.xlu0 %v2266
        %v2268 = vpop.xlane.xlu0 %2267
        %v2269 = vsub.f32 %v2206, %v2265
        %v2270 = vsub.f32 %v2258, %v2268
        %v2271 = vmul.f32 %v2269, 1.442695
        %v2272 = vpow.pop %v2271
        %v2273 = vmul.f32 %v2270, 1.442695
        %v2274 = vpow.pop %v2273
        %v2275 = vsel %vm1116, %v2272, 0.0
        %2276 = vadd.xlane.f32.xlu0 %v2275
        %v2277 = vpop.xlane.xlu0 %2276
        %v2278 = vsel %vm1116, %v2274, 0.0
        %2279 = vadd.xlane.f32.xlu0 %v2278
        %v2280 = vpop.xlane.xlu0 %2279
        %v2281 = vrcp.pop %v2277
        %v2282 = vrcp.pop %v2280
        %v2283 = vmul.f32 %v2277, %v2281
        %v2284 = vmul.f32 %v2280, %v2282
        %v2285 = vsub.f32 2.0, %v2283
        %v2286 = vsub.f32 2.0, %v2284
        %v2287 = vmul.f32 %v2281, %v2285
        %v2288 = vmul.f32 %v2282, %v2286
        %v2289 = vmul.f32 %v2272, %v2287
        %v2290 = vmul.f32 %v2274, %v2288
        %v2291 = vpack.c.bf16 %v2289, %v2289
        %v2292 = vpack.c.bf16 %v2290, %v2290
        %2294 = vrot.lane.b32.xlu0 %v1018, 64
        %v2295 = vpop.permute.xlu0 %2294
        %v2297 = vsel %vm1116, %v2291, 0
        %v2300 = vsel %vm1150, %v2295, 0
        %2302 = vmatprep.subr.bf16.mxu0 0
        %2303 = vmatpush1.bf16.msra.mxu0 0
        %2304 = vmatprep.subr.bf16.mxu0 0
        %2305 = vmatpush1.bf16.msra.mxu0 0
        %2306 = vmatprep.subr.bf16.mxu0 0
        %2307 = vmatpush1.bf16.msra.mxu0 0
        %2308 = vmatprep.subr.bf16.mxu0 0
        %2309 = vmatpush1.bf16.msra.mxu0 0
        %2310 = vmatprep.subr.bf16.mxu0 0
        %2311 = vmatpush1.bf16.msra.mxu0 0
        %2312 = vmatprep.subr.bf16.mxu0 0
        %2313 = vmatpush1.bf16.msra.mxu0 0
        %2314 = vmatprep.subr.bf16.mxu0 0
        %2315 = vmatpush1.bf16.msra.mxu0 0
        %2316 = vmatprep.subr.bf16.mxu0 0
        %2317 = vmatpush1.bf16.msra.mxu0 %v2300
        %2318 = vmatprep.subr.bf16.mxu0 0
        %2319 = vmatpush2.bf16.msra.mxu0 0
        %2320 = vmatprep.subr.bf16.mxu0 0
        %2321 = vmatpush2.bf16.msra.mxu0 0
        %2322 = vmatprep.subr.bf16.mxu0 0
        %2323 = vmatpush2.bf16.msra.mxu0 0
        %2324 = vmatprep.subr.bf16.mxu0 0
        %2325 = vmatpush2.bf16.msra.mxu0 0
        %2326 = vmatprep.subr.bf16.mxu0 0
        %2327 = vmatpush2.bf16.msra.mxu0 0
        %2328 = vmatprep.subr.bf16.mxu0 0
        %2329 = vmatpush2.bf16.msra.mxu0 0
        %2330 = vmatprep.subr.bf16.mxu0 0
        %2331 = vmatpush2.bf16.msra.mxu0 0
        %2332 = vmatprep.subr.bf16.mxu0 0
        %2333 = vmatpush2.bf16.msra.mxu0 0
        %2334 = vmatprep.mubr.bf16.mxu0 0
        %2335 = vmatmul.mubr.bf16.gmra.mxu0 %v2297
        %v2336 = vpop.f32.mrf.mxu0
        %v2337 = vadd.f32 0.0, %v2336
        %v2338 = vpop.f32.mrf.mxu0
        %v2339 = vpop.f32.mrf.mxu0
        %v2340 = vpop.f32.mrf.mxu0
        %2341 = vdwg.mxu0
        %2343 = vrot.lane.b32.xlu0 %v1022, 64
        %v2344 = vpop.permute.xlu0 %2343
        %v2346 = vsel %vm1116, %v2292, 0
        %v2349 = vsel %vm1150, %v2344, 0
        %2351 = vmatprep.subr.bf16.mxu0 0
        %2352 = vmatpush1.bf16.msra.mxu0 0
        %2353 = vmatprep.subr.bf16.mxu0 0
        %2354 = vmatpush1.bf16.msra.mxu0 0
        %2355 = vmatprep.subr.bf16.mxu0 0
        %2356 = vmatpush1.bf16.msra.mxu0 0
        %2357 = vmatprep.subr.bf16.mxu0 0
        %2358 = vmatpush1.bf16.msra.mxu0 0
        %2359 = vmatprep.subr.bf16.mxu0 0
        %2360 = vmatpush1.bf16.msra.mxu0 0
        %2361 = vmatprep.subr.bf16.mxu0 0
        %2362 = vmatpush1.bf16.msra.mxu0 0
        %2363 = vmatprep.subr.bf16.mxu0 0
        %2364 = vmatpush1.bf16.msra.mxu0 0
        %2365 = vmatprep.subr.bf16.mxu0 0
        %2366 = vmatpush1.bf16.msra.mxu0 %v2349
        %2367 = vmatprep.subr.bf16.mxu0 0
        %2368 = vmatpush2.bf16.msra.mxu0 0
        %2369 = vmatprep.subr.bf16.mxu0 0
        %2370 = vmatpush2.bf16.msra.mxu0 0
        %2371 = vmatprep.subr.bf16.mxu0 0
        %2372 = vmatpush2.bf16.msra.mxu0 0
        %2373 = vmatprep.subr.bf16.mxu0 0
        %2374 = vmatpush2.bf16.msra.mxu0 0
        %2375 = vmatprep.subr.bf16.mxu0 0
        %2376 = vmatpush2.bf16.msra.mxu0 0
        %2377 = vmatprep.subr.bf16.mxu0 0
        %2378 = vmatpush2.bf16.msra.mxu0 0
        %2379 = vmatprep.subr.bf16.mxu0 0
        %2380 = vmatpush2.bf16.msra.mxu0 0
        %2381 = vmatprep.subr.bf16.mxu0 0
        %2382 = vmatpush2.bf16.msra.mxu0 0
        %2383 = vmatprep.mubr.bf16.mxu0 0
        %2384 = vmatmul.mubr.bf16.gmra.mxu0 %v2346
        %v2385 = vpop.f32.mrf.mxu0
        %v2386 = vadd.f32 0.0, %v2385
        %v2387 = vpop.f32.mrf.mxu0
        %v2388 = vpop.f32.mrf.mxu0
        %v2389 = vpop.f32.mrf.mxu0
        %2390 = vdwg.mxu0
        %2393 = vrot.lane.b32.xlu0 %v2337, 64
        %v2394 = vpop.permute.xlu0 %2393
        %2395 = vrot.lane.b32.xlu0 %v2386, 64
        %v2396 = vpop.permute.xlu0 %2395
        %2399 = vst.msk [vmem:[#allocation2 + $0x10] sm:$0xff] %vm1482, %v2394
        %2400 = vst.msk [vmem:[#allocation2 + $0x30] sm:$0xff] %vm1482, %v2396
        %v2402 = vsel %vm410, %v1003, 0
        %v2405 = vsel %vm410, %v1011, 0
        %2407 = vmatprep.subr.bf16.mxu0 0
        %2408 = vmatpush1.bf16.xpose.msra.mxu0 0
        %2409 = vmatprep.subr.bf16.mxu0 0
        %2410 = vmatpush1.bf16.xpose.msra.mxu0 0
        %2411 = vmatprep.subr.bf16.mxu0 0
        %2412 = vmatpush1.bf16.xpose.msra.mxu0 0
        %2413 = vmatprep.subr.bf16.mxu0 0
        %2414 = vmatpush1.bf16.xpose.msra.mxu0 0
        %2415 = vmatprep.subr.bf16.mxu0 0
        %2416 = vmatpush1.bf16.xpose.msra.mxu0 0
        %2417 = vmatprep.subr.bf16.mxu0 0
        %2418 = vmatpush1.bf16.xpose.msra.mxu0 0
        %2419 = vmatprep.subr.bf16.mxu0 0
        %2420 = vmatpush1.bf16.xpose.msra.mxu0 0
        %2421 = vmatprep.subr.bf16.mxu0 0
        %2422 = vmatpush1.bf16.xpose.msra.mxu0 %v2405
        %2423 = vmatprep.subr.bf16.mxu0 0
        %2424 = vmatpush2.bf16.xpose.msra.mxu0 0
        %2425 = vmatprep.subr.bf16.mxu0 0
        %2426 = vmatpush2.bf16.xpose.msra.mxu0 0
        %2427 = vmatprep.subr.bf16.mxu0 0
        %2428 = vmatpush2.bf16.xpose.msra.mxu0 0
        %2429 = vmatprep.subr.bf16.mxu0 0
        %2430 = vmatpush2.bf16.xpose.msra.mxu0 0
        %2431 = vmatprep.subr.bf16.mxu0 0
        %2432 = vmatpush2.bf16.xpose.msra.mxu0 0
        %2433 = vmatprep.subr.bf16.mxu0 0
        %2434 = vmatpush2.bf16.xpose.msra.mxu0 0
        %2435 = vmatprep.subr.bf16.mxu0 0
        %2436 = vmatpush2.bf16.xpose.msra.mxu0 0
        %2437 = vmatprep.subr.bf16.mxu0 0
        %2438 = vmatpush2.bf16.xpose.msra.mxu0 0
        %2439 = vmatprep.mubr.bf16.mxu0 0
        %2440 = vmatmul.mubr.bf16.gmra.mxu0 %v2402
        %v2441 = vpop.f32.mrf.mxu0
        %v2442 = vadd.f32 0.0, %v2441
        %v2443 = vpop.f32.mrf.mxu0
        %v2444 = vpop.f32.mrf.mxu0
        %v2445 = vpop.f32.mrf.mxu0
        %2446 = vdwg.mxu0
        %v2448 = vsel %vm410, %v1007, 0
        %v2451 = vsel %vm410, %v1015, 0
        %2453 = vmatprep.subr.bf16.mxu0 0
        %2454 = vmatpush1.bf16.xpose.msra.mxu0 0
        %2455 = vmatprep.subr.bf16.mxu0 0
        %2456 = vmatpush1.bf16.xpose.msra.mxu0 0
        %2457 = vmatprep.subr.bf16.mxu0 0
        %2458 = vmatpush1.bf16.xpose.msra.mxu0 0
        %2459 = vmatprep.subr.bf16.mxu0 0
        %2460 = vmatpush1.bf16.xpose.msra.mxu0 0
        %2461 = vmatprep.subr.bf16.mxu0 0
        %2462 = vmatpush1.bf16.xpose.msra.mxu0 0
        %2463 = vmatprep.subr.bf16.mxu0 0
        %2464 = vmatpush1.bf16.xpose.msra.mxu0 0
        %2465 = vmatprep.subr.bf16.mxu0 0
        %2466 = vmatpush1.bf16.xpose.msra.mxu0 0
        %2467 = vmatprep.subr.bf16.mxu0 0
        %2468 = vmatpush1.bf16.xpose.msra.mxu0 %v2451
        %2469 = vmatprep.subr.bf16.mxu0 0
        %2470 = vmatpush2.bf16.xpose.msra.mxu0 0
        %2471 = vmatprep.subr.bf16.mxu0 0
        %2472 = vmatpush2.bf16.xpose.msra.mxu0 0
        %2473 = vmatprep.subr.bf16.mxu0 0
        %2474 = vmatpush2.bf16.xpose.msra.mxu0 0
        %2475 = vmatprep.subr.bf16.mxu0 0
        %2476 = vmatpush2.bf16.xpose.msra.mxu0 0
        %2477 = vmatprep.subr.bf16.mxu0 0
        %2478 = vmatpush2.bf16.xpose.msra.mxu0 0
        %2479 = vmatprep.subr.bf16.mxu0 0
        %2480 = vmatpush2.bf16.xpose.msra.mxu0 0
        %2481 = vmatprep.subr.bf16.mxu0 0
        %2482 = vmatpush2.bf16.xpose.msra.mxu0 0
        %2483 = vmatprep.subr.bf16.mxu0 0
        %2484 = vmatpush2.bf16.xpose.msra.mxu0 0
        %2485 = vmatprep.mubr.bf16.mxu0 0
        %2486 = vmatmul.mubr.bf16.gmra.mxu0 %v2448
        %v2487 = vpop.f32.mrf.mxu0
        %v2488 = vadd.f32 0.0, %v2487
        %v2489 = vpop.f32.mrf.mxu0
        %v2490 = vpop.f32.mrf.mxu0
        %v2491 = vpop.f32.mrf.mxu0
        %2492 = vdwg.mxu0
        %v2493 = vsel %vm1116, %v2442, -inf
        %2494 = vmax.xlane.f32.xlu0 %v2493
        %v2495 = vpop.xlane.xlu0 %2494
        %v2496 = vsel %vm1116, %v2488, -inf
        %2497 = vmax.xlane.f32.xlu0 %v2496
        %v2498 = vpop.xlane.xlu0 %2497
        %v2499 = vsub.f32 %v2442, %v2495
        %v2500 = vsub.f32 %v2488, %v2498
        %v2501 = vmul.f32 %v2499, 1.442695
        %v2502 = vpow.pop %v2501
        %v2503 = vmul.f32 %v2500, 1.442695
        %v2504 = vpow.pop %v2503
        %v2505 = vsel %vm1116, %v2502, 0.0
        %2506 = vadd.xlane.f32.xlu0 %v2505
        %v2507 = vpop.xlane.xlu0 %2506
        %v2508 = vsel %vm1116, %v2504, 0.0
        %2509 = vadd.xlane.f32.xlu0 %v2508
        %v2510 = vpop.xlane.xlu0 %2509
        %v2511 = vrcp.pop %v2507
        %v2512 = vrcp.pop %v2510
        %v2513 = vmul.f32 %v2507, %v2511
        %v2514 = vmul.f32 %v2510, %v2512
        %v2515 = vsub.f32 2.0, %v2513
        %v2516 = vsub.f32 2.0, %v2514
        %v2517 = vmul.f32 %v2511, %v2515
        %v2518 = vmul.f32 %v2512, %v2516
        %v2519 = vmul.f32 %v2502, %v2517
        %v2520 = vmul.f32 %v2504, %v2518
        %v2521 = vpack.c.bf16 %v2519, %v2519
        %v2522 = vpack.c.bf16 %v2520, %v2520
        %v2524 = vsel %vm1116, %v2521, 0
        %v2527 = vsel %vm1150, %v1019, 0
        %2529 = vmatprep.subr.bf16.mxu0 0
        %2530 = vmatpush1.bf16.msra.mxu0 0
        %2531 = vmatprep.subr.bf16.mxu0 0
        %2532 = vmatpush1.bf16.msra.mxu0 0
        %2533 = vmatprep.subr.bf16.mxu0 0
        %2534 = vmatpush1.bf16.msra.mxu0 0
        %2535 = vmatprep.subr.bf16.mxu0 0
        %2536 = vmatpush1.bf16.msra.mxu0 0
        %2537 = vmatprep.subr.bf16.mxu0 0
        %2538 = vmatpush1.bf16.msra.mxu0 0
        %2539 = vmatprep.subr.bf16.mxu0 0
        %2540 = vmatpush1.bf16.msra.mxu0 0
        %2541 = vmatprep.subr.bf16.mxu0 0
        %2542 = vmatpush1.bf16.msra.mxu0 0
        %2543 = vmatprep.subr.bf16.mxu0 0
        %2544 = vmatpush1.bf16.msra.mxu0 %v2527
        %2545 = vmatprep.subr.bf16.mxu0 0
        %2546 = vmatpush2.bf16.msra.mxu0 0
        %2547 = vmatprep.subr.bf16.mxu0 0
        %2548 = vmatpush2.bf16.msra.mxu0 0
        %2549 = vmatprep.subr.bf16.mxu0 0
        %2550 = vmatpush2.bf16.msra.mxu0 0
        %2551 = vmatprep.subr.bf16.mxu0 0
        %2552 = vmatpush2.bf16.msra.mxu0 0
        %2553 = vmatprep.subr.bf16.mxu0 0
        %2554 = vmatpush2.bf16.msra.mxu0 0
        %2555 = vmatprep.subr.bf16.mxu0 0
        %2556 = vmatpush2.bf16.msra.mxu0 0
        %2557 = vmatprep.subr.bf16.mxu0 0
        %2558 = vmatpush2.bf16.msra.mxu0 0
        %2559 = vmatprep.subr.bf16.mxu0 0
        %2560 = vmatpush2.bf16.msra.mxu0 0
        %2561 = vmatprep.mubr.bf16.mxu0 0
        %2562 = vmatmul.mubr.bf16.gmra.mxu0 %v2524
        %v2563 = vpop.f32.mrf.mxu0
        %v2564 = vadd.f32 0.0, %v2563
        %v2565 = vpop.f32.mrf.mxu0
        %v2566 = vpop.f32.mrf.mxu0
        %v2567 = vpop.f32.mrf.mxu0
        %2568 = vdwg.mxu0
        %v2570 = vsel %vm1116, %v2522, 0
        %v2573 = vsel %vm1150, %v1023, 0
        %2575 = vmatprep.subr.bf16.mxu0 0
        %2576 = vmatpush1.bf16.msra.mxu0 0
        %2577 = vmatprep.subr.bf16.mxu0 0
        %2578 = vmatpush1.bf16.msra.mxu0 0
        %2579 = vmatprep.subr.bf16.mxu0 0
        %2580 = vmatpush1.bf16.msra.mxu0 0
        %2581 = vmatprep.subr.bf16.mxu0 0
        %2582 = vmatpush1.bf16.msra.mxu0 0
        %2583 = vmatprep.subr.bf16.mxu0 0
        %2584 = vmatpush1.bf16.msra.mxu0 0
        %2585 = vmatprep.subr.bf16.mxu0 0
        %2586 = vmatpush1.bf16.msra.mxu0 0
        %2587 = vmatprep.subr.bf16.mxu0 0
        %2588 = vmatpush1.bf16.msra.mxu0 0
        %2589 = vmatprep.subr.bf16.mxu0 0
        %2590 = vmatpush1.bf16.msra.mxu0 %v2573
        %2591 = vmatprep.subr.bf16.mxu0 0
        %2592 = vmatpush2.bf16.msra.mxu0 0
        %2593 = vmatprep.subr.bf16.mxu0 0
        %2594 = vmatpush2.bf16.msra.mxu0 0
        %2595 = vmatprep.subr.bf16.mxu0 0
        %2596 = vmatpush2.bf16.msra.mxu0 0
        %2597 = vmatprep.subr.bf16.mxu0 0
        %2598 = vmatpush2.bf16.msra.mxu0 0
        %2599 = vmatprep.subr.bf16.mxu0 0
        %2600 = vmatpush2.bf16.msra.mxu0 0
        %2601 = vmatprep.subr.bf16.mxu0 0
        %2602 = vmatpush2.bf16.msra.mxu0 0
        %2603 = vmatprep.subr.bf16.mxu0 0
        %2604 = vmatpush2.bf16.msra.mxu0 0
        %2605 = vmatprep.subr.bf16.mxu0 0
        %2606 = vmatpush2.bf16.msra.mxu0 0
        %2607 = vmatprep.mubr.bf16.mxu0 0
        %2608 = vmatmul.mubr.bf16.gmra.mxu0 %v2570
        %v2609 = vpop.f32.mrf.mxu0
        %v2610 = vadd.f32 0.0, %v2609
        %v2611 = vpop.f32.mrf.mxu0
        %v2612 = vpop.f32.mrf.mxu0
        %v2613 = vpop.f32.mrf.mxu0
        %2614 = vdwg.mxu0
        %2615 = vst.msk [vmem:[#allocation2 + $0x18] sm:$0xff] %vm410, %v2564
        %2616 = vst.msk [vmem:[#allocation2 + $0x38] sm:$0xff] %vm410, %v2610
        %2618 = vrot.lane.b32.xlu0 %v1003, 64
        %v2619 = vpop.permute.xlu0 %2618
        %2621 = vrot.lane.b32.xlu0 %v1011, 64
        %v2622 = vpop.permute.xlu0 %2621
        %v2624 = vsel %vm410, %v2619, 0
        %v2627 = vsel %vm410, %v2622, 0
        %2629 = vmatprep.subr.bf16.mxu0 0
        %2630 = vmatpush1.bf16.xpose.msra.mxu0 0
        %2631 = vmatprep.subr.bf16.mxu0 0
        %2632 = vmatpush1.bf16.xpose.msra.mxu0 0
        %2633 = vmatprep.subr.bf16.mxu0 0
        %2634 = vmatpush1.bf16.xpose.msra.mxu0 0
        %2635 = vmatprep.subr.bf16.mxu0 0
        %2636 = vmatpush1.bf16.xpose.msra.mxu0 0
        %2637 = vmatprep.subr.bf16.mxu0 0
        %2638 = vmatpush1.bf16.xpose.msra.mxu0 0
        %2639 = vmatprep.subr.bf16.mxu0 0
        %2640 = vmatpush1.bf16.xpose.msra.mxu0 0
        %2641 = vmatprep.subr.bf16.mxu0 0
        %2642 = vmatpush1.bf16.xpose.msra.mxu0 0
        %2643 = vmatprep.subr.bf16.mxu0 0
        %2644 = vmatpush1.bf16.xpose.msra.mxu0 %v2627
        %2645 = vmatprep.subr.bf16.mxu0 0
        %2646 = vmatpush2.bf16.xpose.msra.mxu0 0
        %2647 = vmatprep.subr.bf16.mxu0 0
        %2648 = vmatpush2.bf16.xpose.msra.mxu0 0
        %2649 = vmatprep.subr.bf16.mxu0 0
        %2650 = vmatpush2.bf16.xpose.msra.mxu0 0
        %2651 = vmatprep.subr.bf16.mxu0 0
        %2652 = vmatpush2.bf16.xpose.msra.mxu0 0
        %2653 = vmatprep.subr.bf16.mxu0 0
        %2654 = vmatpush2.bf16.xpose.msra.mxu0 0
        %2655 = vmatprep.subr.bf16.mxu0 0
        %2656 = vmatpush2.bf16.xpose.msra.mxu0 0
        %2657 = vmatprep.subr.bf16.mxu0 0
        %2658 = vmatpush2.bf16.xpose.msra.mxu0 0
        %2659 = vmatprep.subr.bf16.mxu0 0
        %2660 = vmatpush2.bf16.xpose.msra.mxu0 0
        %2661 = vmatprep.mubr.bf16.mxu0 0
        %2662 = vmatmul.mubr.bf16.gmra.mxu0 %v2624
        %v2663 = vpop.f32.mrf.mxu0
        %v2664 = vadd.f32 0.0, %v2663
        %v2665 = vpop.f32.mrf.mxu0
        %v2666 = vpop.f32.mrf.mxu0
        %v2667 = vpop.f32.mrf.mxu0
        %2668 = vdwg.mxu0
        %2670 = vrot.lane.b32.xlu0 %v1007, 64
        %v2671 = vpop.permute.xlu0 %2670
        %2673 = vrot.lane.b32.xlu0 %v1015, 64
        %v2674 = vpop.permute.xlu0 %2673
        %v2676 = vsel %vm410, %v2671, 0
        %v2679 = vsel %vm410, %v2674, 0
        %2681 = vmatprep.subr.bf16.mxu0 0
        %2682 = vmatpush1.bf16.xpose.msra.mxu0 0
        %2683 = vmatprep.subr.bf16.mxu0 0
        %2684 = vmatpush1.bf16.xpose.msra.mxu0 0
        %2685 = vmatprep.subr.bf16.mxu0 0
        %2686 = vmatpush1.bf16.xpose.msra.mxu0 0
        %2687 = vmatprep.subr.bf16.mxu0 0
        %2688 = vmatpush1.bf16.xpose.msra.mxu0 0
        %2689 = vmatprep.subr.bf16.mxu0 0
        %2690 = vmatpush1.bf16.xpose.msra.mxu0 0
        %2691 = vmatprep.subr.bf16.mxu0 0
        %2692 = vmatpush1.bf16.xpose.msra.mxu0 0
        %2693 = vmatprep.subr.bf16.mxu0 0
        %2694 = vmatpush1.bf16.xpose.msra.mxu0 0
        %2695 = vmatprep.subr.bf16.mxu0 0
        %2696 = vmatpush1.bf16.xpose.msra.mxu0 %v2679
        %2697 = vmatprep.subr.bf16.mxu0 0
        %2698 = vmatpush2.bf16.xpose.msra.mxu0 0
        %2699 = vmatprep.subr.bf16.mxu0 0
        %2700 = vmatpush2.bf16.xpose.msra.mxu0 0
        %2701 = vmatprep.subr.bf16.mxu0 0
        %2702 = vmatpush2.bf16.xpose.msra.mxu0 0
        %2703 = vmatprep.subr.bf16.mxu0 0
        %2704 = vmatpush2.bf16.xpose.msra.mxu0 0
        %2705 = vmatprep.subr.bf16.mxu0 0
        %2706 = vmatpush2.bf16.xpose.msra.mxu0 0
        %2707 = vmatprep.subr.bf16.mxu0 0
        %2708 = vmatpush2.bf16.xpose.msra.mxu0 0
        %2709 = vmatprep.subr.bf16.mxu0 0
        %2710 = vmatpush2.bf16.xpose.msra.mxu0 0
        %2711 = vmatprep.subr.bf16.mxu0 0
        %2712 = vmatpush2.bf16.xpose.msra.mxu0 0
        %2713 = vmatprep.mubr.bf16.mxu0 0
        %2714 = vmatmul.mubr.bf16.gmra.mxu0 %v2676
        %v2715 = vpop.f32.mrf.mxu0
        %v2716 = vadd.f32 0.0, %v2715
        %v2717 = vpop.f32.mrf.mxu0
        %v2718 = vpop.f32.mrf.mxu0
        %v2719 = vpop.f32.mrf.mxu0
        %2720 = vdwg.mxu0
        %v2721 = vsel %vm1116, %v2664, -inf
        %2722 = vmax.xlane.f32.xlu0 %v2721
        %v2723 = vpop.xlane.xlu0 %2722
        %v2724 = vsel %vm1116, %v2716, -inf
        %2725 = vmax.xlane.f32.xlu0 %v2724
        %v2726 = vpop.xlane.xlu0 %2725
        %v2727 = vsub.f32 %v2664, %v2723
        %v2728 = vsub.f32 %v2716, %v2726
        %v2729 = vmul.f32 %v2727, 1.442695
        %v2730 = vpow.pop %v2729
        %v2731 = vmul.f32 %v2728, 1.442695
        %v2732 = vpow.pop %v2731
        %v2733 = vsel %vm1116, %v2730, 0.0
        %2734 = vadd.xlane.f32.xlu0 %v2733
        %v2735 = vpop.xlane.xlu0 %2734
        %v2736 = vsel %vm1116, %v2732, 0.0
        %2737 = vadd.xlane.f32.xlu0 %v2736
        %v2738 = vpop.xlane.xlu0 %2737
        %v2739 = vrcp.pop %v2735
        %v2740 = vrcp.pop %v2738
        %v2741 = vmul.f32 %v2735, %v2739
        %v2742 = vmul.f32 %v2738, %v2740
        %v2743 = vsub.f32 2.0, %v2741
        %v2744 = vsub.f32 2.0, %v2742
        %v2745 = vmul.f32 %v2739, %v2743
        %v2746 = vmul.f32 %v2740, %v2744
        %v2747 = vmul.f32 %v2730, %v2745
        %v2748 = vmul.f32 %v2732, %v2746
        %v2749 = vpack.c.bf16 %v2747, %v2747
        %v2750 = vpack.c.bf16 %v2748, %v2748
        %2752 = vrot.lane.b32.xlu0 %v1019, 64
        %v2753 = vpop.permute.xlu0 %2752
        %v2755 = vsel %vm1116, %v2749, 0
        %v2758 = vsel %vm1150, %v2753, 0
        %2760 = vmatprep.subr.bf16.mxu0 0
        %2761 = vmatpush1.bf16.msra.mxu0 0
        %2762 = vmatprep.subr.bf16.mxu0 0
        %2763 = vmatpush1.bf16.msra.mxu0 0
        %2764 = vmatprep.subr.bf16.mxu0 0
        %2765 = vmatpush1.bf16.msra.mxu0 0
        %2766 = vmatprep.subr.bf16.mxu0 0
        %2767 = vmatpush1.bf16.msra.mxu0 0
        %2768 = vmatprep.subr.bf16.mxu0 0
        %2769 = vmatpush1.bf16.msra.mxu0 0
        %2770 = vmatprep.subr.bf16.mxu0 0
        %2771 = vmatpush1.bf16.msra.mxu0 0
        %2772 = vmatprep.subr.bf16.mxu0 0
        %2773 = vmatpush1.bf16.msra.mxu0 0
        %2774 = vmatprep.subr.bf16.mxu0 0
        %2775 = vmatpush1.bf16.msra.mxu0 %v2758
        %2776 = vmatprep.subr.bf16.mxu0 0
        %2777 = vmatpush2.bf16.msra.mxu0 0
        %2778 = vmatprep.subr.bf16.mxu0 0
        %2779 = vmatpush2.bf16.msra.mxu0 0
        %2780 = vmatprep.subr.bf16.mxu0 0
        %2781 = vmatpush2.bf16.msra.mxu0 0
        %2782 = vmatprep.subr.bf16.mxu0 0
        %2783 = vmatpush2.bf16.msra.mxu0 0
        %2784 = vmatprep.subr.bf16.mxu0 0
        %2785 = vmatpush2.bf16.msra.mxu0 0
        %2786 = vmatprep.subr.bf16.mxu0 0
        %2787 = vmatpush2.bf16.msra.mxu0 0
        %2788 = vmatprep.subr.bf16.mxu0 0
        %2789 = vmatpush2.bf16.msra.mxu0 0
        %2790 = vmatprep.subr.bf16.mxu0 0
        %2791 = vmatpush2.bf16.msra.mxu0 0
        %2792 = vmatprep.mubr.bf16.mxu0 0
        %2793 = vmatmul.mubr.bf16.gmra.mxu0 %v2755
        %v2794 = vpop.f32.mrf.mxu0
        %v2795 = vadd.f32 0.0, %v2794
        %v2796 = vpop.f32.mrf.mxu0
        %v2797 = vpop.f32.mrf.mxu0
        %v2798 = vpop.f32.mrf.mxu0
        %2799 = vdwg.mxu0
        %2801 = vrot.lane.b32.xlu0 %v1023, 64
        %v2802 = vpop.permute.xlu0 %2801
        %v2804 = vsel %vm1116, %v2750, 0
        %v2807 = vsel %vm1150, %v2802, 0
        %2809 = vmatprep.subr.bf16.mxu0 0
        %2810 = vmatpush1.bf16.msra.mxu0 0
        %2811 = vmatprep.subr.bf16.mxu0 0
        %2812 = vmatpush1.bf16.msra.mxu0 0
        %2813 = vmatprep.subr.bf16.mxu0 0
        %2814 = vmatpush1.bf16.msra.mxu0 0
        %2815 = vmatprep.subr.bf16.mxu0 0
        %2816 = vmatpush1.bf16.msra.mxu0 0
        %2817 = vmatprep.subr.bf16.mxu0 0
        %2818 = vmatpush1.bf16.msra.mxu0 0
        %2819 = vmatprep.subr.bf16.mxu0 0
        %2820 = vmatpush1.bf16.msra.mxu0 0
        %2821 = vmatprep.subr.bf16.mxu0 0
        %2822 = vmatpush1.bf16.msra.mxu0 0
        %2823 = vmatprep.subr.bf16.mxu0 0
        %2824 = vmatpush1.bf16.msra.mxu0 %v2807
        %2825 = vmatprep.subr.bf16.mxu0 0
        %2826 = vmatpush2.bf16.msra.mxu0 0
        %2827 = vmatprep.subr.bf16.mxu0 0
        %2828 = vmatpush2.bf16.msra.mxu0 0
        %2829 = vmatprep.subr.bf16.mxu0 0
        %2830 = vmatpush2.bf16.msra.mxu0 0
        %2831 = vmatprep.subr.bf16.mxu0 0
        %2832 = vmatpush2.bf16.msra.mxu0 0
        %2833 = vmatprep.subr.bf16.mxu0 0
        %2834 = vmatpush2.bf16.msra.mxu0 0
        %2835 = vmatprep.subr.bf16.mxu0 0
        %2836 = vmatpush2.bf16.msra.mxu0 0
        %2837 = vmatprep.subr.bf16.mxu0 0
        %2838 = vmatpush2.bf16.msra.mxu0 0
        %2839 = vmatprep.subr.bf16.mxu0 0
        %2840 = vmatpush2.bf16.msra.mxu0 0
        %2841 = vmatprep.mubr.bf16.mxu0 0
        %2842 = vmatmul.mubr.bf16.gmra.mxu0 %v2804
        %v2843 = vpop.f32.mrf.mxu0
        %v2844 = vadd.f32 0.0, %v2843
        %v2845 = vpop.f32.mrf.mxu0
        %v2846 = vpop.f32.mrf.mxu0
        %v2847 = vpop.f32.mrf.mxu0
        %2848 = vdwg.mxu0
        %2851 = vrot.lane.b32.xlu0 %v2795, 64
        %v2852 = vpop.permute.xlu0 %2851
        %2853 = vrot.lane.b32.xlu0 %v2844, 64
        %v2854 = vpop.permute.xlu0 %2853
        %2857 = vst.msk [vmem:[#allocation2 + $0x18] sm:$0xff] %vm1482, %v2852
        %2858 = vst.msk [vmem:[#allocation2 + $0x38] sm:$0xff] %vm1482, %v2854
        %v2859 = vld [vmem:[#allocation2] sm:$0xff]
        %v2860 = vld [vmem:[#allocation2 + $0x8] sm:$0xff]
        %v2861 = vld [vmem:[#allocation2 + $0x10] sm:$0xff]
        %v2862 = vld [vmem:[#allocation2 + $0x18] sm:$0xff]
        %v2863 = vld [vmem:[#allocation2 + $0x20] sm:$0xff]
        %v2864 = vld [vmem:[#allocation2 + $0x28] sm:$0xff]
        %v2865 = vld [vmem:[#allocation2 + $0x30] sm:$0xff]
        %v2866 = vld [vmem:[#allocation2 + $0x38] sm:$0xff]
        %v2867 = vpack.c.bf16 %v2863, %v2859
        %v2868 = vpack.c.bf16 %v2864, %v2860
        %v2869 = vpack.c.bf16 %v2865, %v2861
        %v2870 = vpack.c.bf16 %v2866, %v2862
        %v2871 = vld [vmem:[%s380] sm:$0xf]
        %v2872 = vld [vmem:[%s380 + $0x4] sm:$0xf]
        %v2873 = vld [vmem:[%s380 + $0x8] sm:$0xf]
        %v2874 = vld [vmem:[%s380 + $0xc] sm:$0xf]
        %v2875 = vld [vmem:[%s380 + $0x10] sm:$0xf]
        %v2876 = vld [vmem:[%s380 + $0x14] sm:$0xf]
        %v2877 = vld [vmem:[%s380 + $0x18] sm:$0xf]
        %v2878 = vld [vmem:[%s380 + $0x1c] sm:$0xf]
        %v2879 = vld [vmem:[%s380 + $0x20] sm:$0xf]
        %v2880 = vld [vmem:[%s380 + $0x24] sm:$0xf]
        %v2881 = vld [vmem:[%s380 + $0x28] sm:$0xf]
        %v2882 = vld [vmem:[%s380 + $0x2c] sm:$0xf]
        %v2883 = vld [vmem:[%s380 + $0x30] sm:$0xf]
        %v2884 = vld [vmem:[%s380 + $0x34] sm:$0xf]
        %v2885 = vld [vmem:[%s380 + $0x38] sm:$0xf]
        %v2886 = vld [vmem:[%s380 + $0x3c] sm:$0xf]
        %v2887 = vld [vmem:[%s380 + $0x40] sm:$0xf]
        %v2888 = vld [vmem:[%s380 + $0x44] sm:$0xf]
        %v2889 = vld [vmem:[%s380 + $0x48] sm:$0xf]
        %v2890 = vld [vmem:[%s380 + $0x4c] sm:$0xf]
        %v2891 = vld [vmem:[%s380 + $0x50] sm:$0xf]
        %v2892 = vld [vmem:[%s380 + $0x54] sm:$0xf]
        %v2893 = vld [vmem:[%s380 + $0x58] sm:$0xf]
        %v2894 = vld [vmem:[%s380 + $0x5c] sm:$0xf]
        %v2895 = vld [vmem:[%s380 + $0x60] sm:$0xf]
        %v2896 = vld [vmem:[%s380 + $0x64] sm:$0xf]
        %v2897 = vld [vmem:[%s380 + $0x68] sm:$0xf]
        %v2898 = vld [vmem:[%s380 + $0x6c] sm:$0xf]
        %v2899 = vld [vmem:[%s380 + $0x70] sm:$0xf]
        %v2900 = vld [vmem:[%s380 + $0x74] sm:$0xf]
        %v2901 = vld [vmem:[%s380 + $0x78] sm:$0xf]
        %v2902 = vld [vmem:[%s380 + $0x7c] sm:$0xf]
        %v2903 = vld [vmem:[%s380 + $0x80] sm:$0xf]
        %v2904 = vld [vmem:[%s380 + $0x84] sm:$0xf]
        %v2905 = vld [vmem:[%s380 + $0x88] sm:$0xf]
        %v2906 = vld [vmem:[%s380 + $0x8c] sm:$0xf]
        %v2907 = vld [vmem:[%s380 + $0x90] sm:$0xf]
        %v2908 = vld [vmem:[%s380 + $0x94] sm:$0xf]
        %v2909 = vld [vmem:[%s380 + $0x98] sm:$0xf]
        %v2910 = vld [vmem:[%s380 + $0x9c] sm:$0xf]
        %v2911 = vld [vmem:[%s380 + $0xa0] sm:$0xf]
        %v2912 = vld [vmem:[%s380 + $0xa4] sm:$0xf]
        %v2913 = vld [vmem:[%s380 + $0xa8] sm:$0xf]
        %v2914 = vld [vmem:[%s380 + $0xac] sm:$0xf]
        %v2915 = vld [vmem:[%s380 + $0xb0] sm:$0xf]
        %v2916 = vld [vmem:[%s380 + $0xb4] sm:$0xf]
        %v2917 = vld [vmem:[%s380 + $0xb8] sm:$0xf]
        %v2918 = vld [vmem:[%s380 + $0xbc] sm:$0xf]
        %v2919 = vld [vmem:[%s380 + $0xc0] sm:$0xf]
        %v2920 = vld [vmem:[%s380 + $0xc4] sm:$0xf]
        %v2921 = vld [vmem:[%s380 + $0xc8] sm:$0xf]
        %v2922 = vld [vmem:[%s380 + $0xcc] sm:$0xf]
        %v2923 = vld [vmem:[%s380 + $0xd0] sm:$0xf]
        %v2924 = vld [vmem:[%s380 + $0xd4] sm:$0xf]
        %v2925 = vld [vmem:[%s380 + $0xd8] sm:$0xf]
        %v2926 = vld [vmem:[%s380 + $0xdc] sm:$0xf]
        %v2927 = vld [vmem:[%s380 + $0xe0] sm:$0xf]
        %v2928 = vld [vmem:[%s380 + $0xe4] sm:$0xf]
        %v2929 = vld [vmem:[%s380 + $0xe8] sm:$0xf]
        %v2930 = vld [vmem:[%s380 + $0xec] sm:$0xf]
        %v2931 = vld [vmem:[%s380 + $0xf0] sm:$0xf]
        %v2932 = vld [vmem:[%s380 + $0xf4] sm:$0xf]
        %v2933 = vld [vmem:[%s380 + $0xf8] sm:$0xf]
        %v2934 = vld [vmem:[%s380 + $0xfc] sm:$0xf]
        %v2935 = vlaneseq
        %v2936 = vshrl.u32 %v2935, 7
        %v2937 = vsub.s32 4, %v2936
        %v2938 = vrot.slane %v406, %v2937
        %v3003 = vunpack.c.l.b16 %v2871
        %v3004 = vunpack.c.l.b16 %v2872
        %v3005 = vunpack.c.l.b16 %v2873
        %v3006 = vunpack.c.l.b16 %v2874
        %v3007 = vunpack.c.l.b16 %v2875
        %v3008 = vunpack.c.l.b16 %v2876
        %v3009 = vunpack.c.l.b16 %v2877
        %v3010 = vunpack.c.l.b16 %v2878
        %v3011 = vunpack.c.l.b16 %v2879
        %v3012 = vunpack.c.l.b16 %v2880
        %v3013 = vunpack.c.l.b16 %v2881
        %v3014 = vunpack.c.l.b16 %v2882
        %v3015 = vunpack.c.l.b16 %v2883
        %v3016 = vunpack.c.l.b16 %v2884
        %v3017 = vunpack.c.l.b16 %v2885
        %v3018 = vunpack.c.l.b16 %v2886
        %v3019 = vunpack.c.l.b16 %v2887
        %v3020 = vunpack.c.l.b16 %v2888
        %v3021 = vunpack.c.l.b16 %v2889
        %v3022 = vunpack.c.l.b16 %v2890
        %v3023 = vunpack.c.l.b16 %v2891
        %v3024 = vunpack.c.l.b16 %v2892
        %v3025 = vunpack.c.l.b16 %v2893
        %v3026 = vunpack.c.l.b16 %v2894
        %v3027 = vunpack.c.l.b16 %v2895
        %v3028 = vunpack.c.l.b16 %v2896
        %v3029 = vunpack.c.l.b16 %v2897
        %v3030 = vunpack.c.l.b16 %v2898
        %v3031 = vunpack.c.l.b16 %v2899
        %v3032 = vunpack.c.l.b16 %v2900
        %v3033 = vunpack.c.l.b16 %v2901
        %v3034 = vunpack.c.l.b16 %v2902
        %v3035 = vunpack.c.l.b16 %v2903
        %v3036 = vunpack.c.l.b16 %v2904
        %v3037 = vunpack.c.l.b16 %v2905
        %v3038 = vunpack.c.l.b16 %v2906
        %v3039 = vunpack.c.l.b16 %v2907
        %v3040 = vunpack.c.l.b16 %v2908
        %v3041 = vunpack.c.l.b16 %v2909
        %v3042 = vunpack.c.l.b16 %v2910
        %v3043 = vunpack.c.l.b16 %v2911
        %v3044 = vunpack.c.l.b16 %v2912
        %v3045 = vunpack.c.l.b16 %v2913
        %v3046 = vunpack.c.l.b16 %v2914
        %v3047 = vunpack.c.l.b16 %v2915
        %v3048 = vunpack.c.l.b16 %v2916
        %v3049 = vunpack.c.l.b16 %v2917
        %v3050 = vunpack.c.l.b16 %v2918
        %v3051 = vunpack.c.l.b16 %v2919
        %v3052 = vunpack.c.l.b16 %v2920
        %v3053 = vunpack.c.l.b16 %v2921
        %v3054 = vunpack.c.l.b16 %v2922
        %v3055 = vunpack.c.l.b16 %v2923
        %v3056 = vunpack.c.l.b16 %v2924
        %v3057 = vunpack.c.l.b16 %v2925
        %v3058 = vunpack.c.l.b16 %v2926
        %v3059 = vunpack.c.l.b16 %v2927
        %v3060 = vunpack.c.l.b16 %v2928
        %v3061 = vunpack.c.l.b16 %v2929
        %v3062 = vunpack.c.l.b16 %v2930
        %v3063 = vunpack.c.l.b16 %v2931
        %v3064 = vunpack.c.l.b16 %v2932
        %v3065 = vunpack.c.l.b16 %v2933
        %v3066 = vunpack.c.l.b16 %v2934
        %v3067 = vpack.c.b16 %v3004, %v3003
        %v3068 = vpack.c.b16 %v3006, %v3005
        %v3069 = vpack.c.b16 %v3008, %v3007
        %v3070 = vpack.c.b16 %v3010, %v3009
        %v3071 = vpack.c.b16 %v3012, %v3011
        %v3072 = vpack.c.b16 %v3014, %v3013
        %v3073 = vpack.c.b16 %v3016, %v3015
        %v3074 = vpack.c.b16 %v3018, %v3017
        %v3075 = vpack.c.b16 %v3020, %v3019
        %v3076 = vpack.c.b16 %v3022, %v3021
        %v3077 = vpack.c.b16 %v3024, %v3023
        %v3078 = vpack.c.b16 %v3026, %v3025
        %v3079 = vpack.c.b16 %v3028, %v3027
        %v3080 = vpack.c.b16 %v3030, %v3029
        %v3081 = vpack.c.b16 %v3032, %v3031
        %v3082 = vpack.c.b16 %v3034, %v3033
        %v3083 = vpack.c.b16 %v3036, %v3035
        %v3084 = vpack.c.b16 %v3038, %v3037
        %v3085 = vpack.c.b16 %v3040, %v3039
        %v3086 = vpack.c.b16 %v3042, %v3041
        %v3087 = vpack.c.b16 %v3044, %v3043
        %v3088 = vpack.c.b16 %v3046, %v3045
        %v3089 = vpack.c.b16 %v3048, %v3047
        %v3090 = vpack.c.b16 %v3050, %v3049
        %v3091 = vpack.c.b16 %v3052, %v3051
        %v3092 = vpack.c.b16 %v3054, %v3053
        %v3093 = vpack.c.b16 %v3056, %v3055
        %v3094 = vpack.c.b16 %v3058, %v3057
        %v3095 = vpack.c.b16 %v3060, %v3059
        %v3096 = vpack.c.b16 %v3062, %v3061
        %v3097 = vpack.c.b16 %v3064, %v3063
        %v3098 = vpack.c.b16 %v3066, %v3065
        %3131 = vmatprep.subr.bf16.mxu0 0
        %3132 = vmatpush1.bf16.msra.mxu0 %v3074
        %3133 = vmatprep.subr.bf16.mxu0 0
        %3134 = vmatpush1.bf16.msra.mxu0 %v3073
        %3135 = vmatprep.subr.bf16.mxu0 0
        %3136 = vmatpush1.bf16.msra.mxu0 %v3072
        %3137 = vmatprep.subr.bf16.mxu0 0
        %3138 = vmatpush1.bf16.msra.mxu0 %v3071
        %3139 = vmatprep.subr.bf16.mxu0 0
        %3140 = vmatpush1.bf16.msra.mxu0 %v3070
        %3141 = vmatprep.subr.bf16.mxu0 0
        %3142 = vmatpush1.bf16.msra.mxu0 %v3069
        %3143 = vmatprep.subr.bf16.mxu0 0
        %3144 = vmatpush1.bf16.msra.mxu0 %v3068
        %3145 = vmatprep.subr.bf16.mxu0 0
        %3146 = vmatpush1.bf16.msra.mxu0 %v3067
        %3147 = vmatprep.subr.bf16.mxu0 0
        %3148 = vmatpush2.bf16.msra.mxu0 %v3082
        %3149 = vmatprep.subr.bf16.mxu0 0
        %3150 = vmatpush2.bf16.msra.mxu0 %v3081
        %3151 = vmatprep.subr.bf16.mxu0 0
        %3152 = vmatpush2.bf16.msra.mxu0 %v3080
        %3153 = vmatprep.subr.bf16.mxu0 0
        %3154 = vmatpush2.bf16.msra.mxu0 %v3079
        %3155 = vmatprep.subr.bf16.mxu0 0
        %3156 = vmatpush2.bf16.msra.mxu0 %v3078
        %3157 = vmatprep.subr.bf16.mxu0 0
        %3158 = vmatpush2.bf16.msra.mxu0 %v3077
        %3159 = vmatprep.subr.bf16.mxu0 0
        %3160 = vmatpush2.bf16.msra.mxu0 %v3076
        %3161 = vmatprep.subr.bf16.mxu0 0
        %3162 = vmatpush2.bf16.msra.mxu0 %v3075
        %3163 = vmatprep.mubr.bf16.mxu0 %v2868
        %3164 = vmatmul.mubr.bf16.gmra.mxu0 %v2867
        %v3165 = vpop.f32.mrf.mxu0
        %v3166 = vadd.f32 %v2938, %v3165
        %v3167 = vpop.f32.mrf.mxu0
        %v3168 = vpop.f32.mrf.mxu0
        %v3169 = vadd.f32 %v2938, %v3168
        %v3170 = vpop.f32.mrf.mxu0
        %3171 = vdwg.mxu0
        %3172 = vmatprep.subr.bf16.mxu0 0
        %3173 = vmatpush1.bf16.msra.mxu0 %v3090
        %3174 = vmatprep.subr.bf16.mxu0 0
        %3175 = vmatpush1.bf16.msra.mxu0 %v3089
        %3176 = vmatprep.subr.bf16.mxu0 0
        %3177 = vmatpush1.bf16.msra.mxu0 %v3088
        %3178 = vmatprep.subr.bf16.mxu0 0
        %3179 = vmatpush1.bf16.msra.mxu0 %v3087
        %3180 = vmatprep.subr.bf16.mxu0 0
        %3181 = vmatpush1.bf16.msra.mxu0 %v3086
        %3182 = vmatprep.subr.bf16.mxu0 0
        %3183 = vmatpush1.bf16.msra.mxu0 %v3085
        %3184 = vmatprep.subr.bf16.mxu0 0
        %3185 = vmatpush1.bf16.msra.mxu0 %v3084
        %3186 = vmatprep.subr.bf16.mxu0 0
        %3187 = vmatpush1.bf16.msra.mxu0 %v3083
        %3188 = vmatprep.subr.bf16.mxu0 0
        %3189 = vmatpush2.bf16.msra.mxu0 %v3098
        %3190 = vmatprep.subr.bf16.mxu0 0
        %3191 = vmatpush2.bf16.msra.mxu0 %v3097
        %3192 = vmatprep.subr.bf16.mxu0 0
        %3193 = vmatpush2.bf16.msra.mxu0 %v3096
        %3194 = vmatprep.subr.bf16.mxu0 0
        %3195 = vmatpush2.bf16.msra.mxu0 %v3095
        %3196 = vmatprep.subr.bf16.mxu0 0
        %3197 = vmatpush2.bf16.msra.mxu0 %v3094
        %3198 = vmatprep.subr.bf16.mxu0 0
        %3199 = vmatpush2.bf16.msra.mxu0 %v3093
        %3200 = vmatprep.subr.bf16.mxu0 0
        %3201 = vmatpush2.bf16.msra.mxu0 %v3092
        %3202 = vmatprep.subr.bf16.mxu0 0
        %3203 = vmatpush2.bf16.msra.mxu0 %v3091
        %3204 = vmatprep.mubr.bf16.mxu0 %v2870
        %3205 = vmatmul.mubr.bf16.gmra.mxu0 %v2869
        %v3206 = vpop.f32.mrf.mxu0
        %v3207 = vadd.f32 %v3166, %v3206
        %v3208 = vpop.f32.mrf.mxu0
        %v3209 = vpop.f32.mrf.mxu0
        %v3210 = vadd.f32 %v3169, %v3209
        %v3211 = vpop.f32.mrf.mxu0
        %3212 = vdwg.mxu0
        %v3213 = vadd.f32 %v402, %v3207
        %v3214 = vadd.f32 %v403, %v3210
        %v3215 = vsel %vm410, %v3213, 0.0
        %3216 = vadd.xlane.f32.xlu0 %v3215
        %v3217 = vpop.xlane.xlu0 %3216
        %v3218 = vsel %vm410, %v3214, 0.0
        %3219 = vadd.xlane.f32.xlu0 %v3218
        %v3220 = vpop.xlane.xlu0 %3219
        %v3221 = vmul.f32 %v3217, %v417
        %v3222 = vmul.f32 %v3220, %v417
        %v3223 = vsub.f32 %v3213, %v3221
        %v3224 = vsub.f32 %v3214, %v3222
        %v3225 = vmul.f32 %v3223, %v3223
        %v3226 = vmul.f32 %v3224, %v3224
        %v3227 = vsel %vm410, %v3225, 0.0
        %3228 = vadd.xlane.f32.xlu0 %v3227
        %v3229 = vpop.xlane.xlu0 %3228
        %v3230 = vsel %vm410, %v3226, 0.0
        %3231 = vadd.xlane.f32.xlu0 %v3230
        %v3232 = vpop.xlane.xlu0 %3231
        %v3233 = vmul.f32 %v3229, %v417
        %v3234 = vmul.f32 %v3232, %v417
        %v3235 = vadd.f32 %v3233, 1e-05
        %v3236 = vadd.f32 %v3234, 1e-05
        %v3237 = vrsqrt.pop %v3235
        %v3238 = vrsqrt.pop %v3236
        %v3239 = vmul.f32 %v3223, %v3237
        %v3240 = vmul.f32 %v3224, %v3238
        %v3241 = vlaneseq
        %v3242 = vshrl.u32 %v3241, 7
        %v3243 = vsub.s32 2, %v3242
        %v3244 = vrot.slane %v406, %v3243
        %v3245 = vmul.f32 %v3239, %v3244
        %v3246 = vmul.f32 %v3240, %v3244
        %v3247 = vlaneseq
        %v3248 = vshrl.u32 %v3247, 7
        %v3249 = vsub.s32 3, %v3248
        %v3250 = vrot.slane %v406, %v3249
        %v3251 = vadd.f32 %v3245, %v3250
        %v3252 = vadd.f32 %v3246, %v3250
        %v3253 = vpack.c.bf16 %v3252, %v3251
        %v3254 = vld [vmem:[%s385] sm:$0xff]
        %v3255 = vld [vmem:[%s385 + $0x8] sm:$0xff]
        %v3256 = vld [vmem:[%s385 + $0x10] sm:$0xff]
        %v3257 = vld [vmem:[%s385 + $0x18] sm:$0xff]
        %v3258 = vld [vmem:[%s385 + $0x20] sm:$0xff]
        %v3259 = vld [vmem:[%s385 + $0x28] sm:$0xff]
        %v3260 = vld [vmem:[%s385 + $0x30] sm:$0xff]
        %v3261 = vld [vmem:[%s385 + $0x38] sm:$0xff]
        %v3263 = vlaneseq
        %v3264 = vshrl.u32 %v3263, 7
        %v3265 = vsub.s32 0, %v3264
        %v3266 = vrot.slane %v409, %v3265
        %v3267 = vlaneseq
        %v3268 = vshrl.u32 %v3267, 7
        %v3269 = vsub.s32 1, %v3268
        %v3270 = vrot.slane %v409, %v3269
        %v3281 = vunpack.c.l.b16 %v3254
        %v3282 = vunpack.c.h.b16 %v3254
        %v3283 = vunpack.c.l.b16 %v3255
        %v3284 = vunpack.c.h.b16 %v3255
        %v3285 = vunpack.c.l.b16 %v3256
        %v3286 = vunpack.c.h.b16 %v3256
        %v3287 = vunpack.c.l.b16 %v3257
        %v3288 = vunpack.c.h.b16 %v3257
        %v3289 = vunpack.c.l.b16 %v3258
        %v3290 = vunpack.c.h.b16 %v3258
        %v3291 = vunpack.c.l.b16 %v3259
        %v3292 = vunpack.c.h.b16 %v3259
        %v3293 = vunpack.c.l.b16 %v3260
        %v3294 = vunpack.c.h.b16 %v3260
        %v3295 = vunpack.c.l.b16 %v3261
        %v3296 = vunpack.c.h.b16 %v3261
        %v3297 = vpack.c.b16 %v3283, %v3281
        %v3298 = vpack.c.b16 %v3284, %v3282
        %v3299 = vpack.c.b16 %v3287, %v3285
        %v3300 = vpack.c.b16 %v3288, %v3286
        %v3301 = vpack.c.b16 %v3291, %v3289
        %v3302 = vpack.c.b16 %v3292, %v3290
        %v3303 = vpack.c.b16 %v3295, %v3293
        %v3304 = vpack.c.b16 %v3296, %v3294
        %v3314 = vsel %vm410, %v3253, 0
        %3316 = vmatprep.subr.bf16.mxu0 0
        %3317 = vmatpush1.bf16.msra.mxu0 0
        %3318 = vmatprep.subr.bf16.mxu0 0
        %3319 = vmatpush1.bf16.msra.mxu0 0
        %3320 = vmatprep.subr.bf16.mxu0 0
        %3321 = vmatpush1.bf16.msra.mxu0 0
        %3322 = vmatprep.subr.bf16.mxu0 0
        %3323 = vmatpush1.bf16.msra.mxu0 0
        %3324 = vmatprep.subr.bf16.mxu0 %v3304
        %3325 = vmatpush1.bf16.msra.mxu0 %v3303
        %3326 = vmatprep.subr.bf16.mxu0 %v3302
        %3327 = vmatpush1.bf16.msra.mxu0 %v3301
        %3328 = vmatprep.subr.bf16.mxu0 %v3300
        %3329 = vmatpush1.bf16.msra.mxu0 %v3299
        %3330 = vmatprep.subr.bf16.mxu0 %v3298
        %3331 = vmatpush1.bf16.msra.mxu0 %v3297
        %3332 = vmatprep.subr.bf16.mxu0 0
        %3333 = vmatpush2.bf16.msra.mxu0 0
        %3334 = vmatprep.subr.bf16.mxu0 0
        %3335 = vmatpush2.bf16.msra.mxu0 0
        %3336 = vmatprep.subr.bf16.mxu0 0
        %3337 = vmatpush2.bf16.msra.mxu0 0
        %3338 = vmatprep.subr.bf16.mxu0 0
        %3339 = vmatpush2.bf16.msra.mxu0 0
        %3340 = vmatprep.subr.bf16.mxu0 0
        %3341 = vmatpush2.bf16.msra.mxu0 0
        %3342 = vmatprep.subr.bf16.mxu0 0
        %3343 = vmatpush2.bf16.msra.mxu0 0
        %3344 = vmatprep.subr.bf16.mxu0 0
        %3345 = vmatpush2.bf16.msra.mxu0 0
        %3346 = vmatprep.subr.bf16.mxu0 0
        %3347 = vmatpush2.bf16.msra.mxu0 0
        %3348 = vmatprep.mubr.bf16.mxu0 0
        %3349 = vmatmul.mubr.bf16.gmra.mxu0 %v3314
        %v3350 = vpop.f32.mrf.mxu0
        %v3351 = vadd.f32 %v3266, %v3350
        %v3352 = vpop.f32.mrf.mxu0
        %v3353 = vadd.f32 %v3270, %v3352
        %v3354 = vpop.f32.mrf.mxu0
        %v3355 = vadd.f32 %v3266, %v3354
        %v3356 = vpop.f32.mrf.mxu0
        %v3357 = vadd.f32 %v3270, %v3356
        %3358 = vdwg.mxu0
        %v3359 = vmul.f32 %v3351, 0.5
        %v3360 = vmul.f32 %v3353, 0.5
        %v3361 = vmul.f32 %v3355, 0.5
        %v3362 = vmul.f32 %v3357, 0.5
        %v3363 = vmul.f32 %v3351, 0.70710677
        %v3364 = vmul.f32 %v3353, 0.70710677
        %v3365 = vmul.f32 %v3355, 0.70710677
        %v3366 = vmul.f32 %v3357, 0.70710677
        %vm3367 = vcmp.ge.f32.partialorder %v3363, 0.0
        %vm3368 = vcmp.ge.f32.partialorder %v3364, 0.0
        %vm3369 = vcmp.ge.f32.partialorder %v3365, 0.0
        %vm3370 = vcmp.ge.f32.partialorder %v3366, 0.0
        %v3371 = vsel %vm3367, 1.0, -1.0
        %v3372 = vsel %vm3368, 1.0, -1.0
        %v3373 = vsel %vm3369, 1.0, -1.0
        %v3374 = vsel %vm3370, 1.0, -1.0
        %v3375 = vand.u32 2147483647, %v3363
        %v3376 = vand.u32 2147483647, %v3364
        %v3377 = vand.u32 2147483647, %v3365
        %v3378 = vand.u32 2147483647, %v3366
        %v3379 = vmul.f32 %v3375, 0.3275911
        %v3380 = vmul.f32 %v3376, 0.3275911
        %v3381 = vmul.f32 %v3377, 0.3275911
        %v3382 = vmul.f32 %v3378, 0.3275911
        %v3383 = vadd.f32 %v3379, 1.0
        %v3384 = vadd.f32 %v3380, 1.0
        %v3385 = vadd.f32 %v3381, 1.0
        %v3386 = vadd.f32 %v3382, 1.0
        %v3387 = vrcp.pop %v3383
        %v3388 = vmul.f32 1.0, %v3387
        %v3389 = vrcp.pop %v3384
        %v3390 = vmul.f32 1.0, %v3389
        %v3391 = vrcp.pop %v3385
        %v3392 = vmul.f32 1.0, %v3391
        %v3393 = vrcp.pop %v3386
        %v3394 = vmul.f32 1.0, %v3393
        %v3395 = vmul.f32 %v3388, 1.0614054
        %v3396 = vmul.f32 %v3390, 1.0614054
        %v3397 = vmul.f32 %v3392, 1.0614054
        %v3398 = vmul.f32 %v3394, 1.0614054
        %v3399 = vadd.f32 %v3395, -1.4531521
        %v3400 = vadd.f32 %v3396, -1.4531521
        %v3401 = vadd.f32 %v3397, -1.4531521
        %v3402 = vadd.f32 %v3398, -1.4531521
        %v3403 = vmul.f32 %v3399, %v3388
        %v3404 = vmul.f32 %v3400, %v3390
        %v3405 = vmul.f32 %v3401, %v3392
        %v3406 = vmul.f32 %v3402, %v3394
        %v3407 = vadd.f32 %v3403, 1.4214138
        %v3408 = vadd.f32 %v3404, 1.4214138
        %v3409 = vadd.f32 %v3405, 1.4214138
        %v3410 = vadd.f32 %v3406, 1.4214138
        %v3411 = vmul.f32 %v3407, %v3388
        %v3412 = vmul.f32 %v3408, %v3390
        %v3413 = vmul.f32 %v3409, %v3392
        %v3414 = vmul.f32 %v3410, %v3394
        %v3415 = vadd.f32 %v3411, -0.28449672
        %v3416 = vadd.f32 %v3412, -0.28449672
        %v3417 = vadd.f32 %v3413, -0.28449672
        %v3418 = vadd.f32 %v3414, -0.28449672
        %v3419 = vmul.f32 %v3415, %v3388
        %v3420 = vmul.f32 %v3416, %v3390
        %v3421 = vmul.f32 %v3417, %v3392
        %v3422 = vmul.f32 %v3418, %v3394
        %v3423 = vadd.f32 %v3419, 0.2548296
        %v3424 = vadd.f32 %v3420, 0.2548296
        %v3425 = vadd.f32 %v3421, 0.2548296
        %v3426 = vadd.f32 %v3422, 0.2548296
        %v3427 = vmul.f32 %v3423, %v3388
        %v3428 = vmul.f32 %v3424, %v3390
        %v3429 = vmul.f32 %v3425, %v3392
        %v3430 = vmul.f32 %v3426, %v3394
        %v3431 = vsub.f32 0.0, %v3375
        %v3432 = vsub.f32 0.0, %v3376
        %v3433 = vsub.f32 0.0, %v3377
        %v3434 = vsub.f32 0.0, %v3378
        %v3435 = vmul.f32 %v3431, %v3375
        %v3436 = vmul.f32 %v3432, %v3376
        %v3437 = vmul.f32 %v3433, %v3377
        %v3438 = vmul.f32 %v3434, %v3378
        %v3439 = vmul.f32 %v3435, 1.442695
        %v3440 = vpow.pop %v3439
        %v3441 = vmul.f32 %v3436, 1.442695
        %v3442 = vpow.pop %v3441
        %v3443 = vmul.f32 %v3437, 1.442695
        %v3444 = vpow.pop %v3443
        %v3445 = vmul.f32 %v3438, 1.442695
        %v3446 = vpow.pop %v3445
        %v3447 = vmul.f32 %v3427, %v3440
        %v3448 = vmul.f32 %v3428, %v3442
        %v3449 = vmul.f32 %v3429, %v3444
        %v3450 = vmul.f32 %v3430, %v3446
        %v3451 = vsub.f32 1.0, %v3447
        %v3452 = vsub.f32 1.0, %v3448
        %v3453 = vsub.f32 1.0, %v3449
        %v3454 = vsub.f32 1.0, %v3450
        %v3455 = vmul.f32 %v3371, %v3451
        %v3456 = vmul.f32 %v3372, %v3452
        %v3457 = vmul.f32 %v3373, %v3453
        %v3458 = vmul.f32 %v3374, %v3454
        %v3459 = vadd.f32 %v3455, 1.0
        %v3460 = vadd.f32 %v3456, 1.0
        %v3461 = vadd.f32 %v3457, 1.0
        %v3462 = vadd.f32 %v3458, 1.0
        %v3463 = vmul.f32 %v3359, %v3459
        %v3464 = vmul.f32 %v3360, %v3460
        %v3465 = vmul.f32 %v3361, %v3461
        %v3466 = vmul.f32 %v3362, %v3462
        %v3467 = vpack.c.bf16 %v3465, %v3463
        %v3468 = vpack.c.bf16 %v3466, %v3464
        %v3469 = vld [vmem:[%s390] sm:$0xf]
        %v3470 = vld [vmem:[%s390 + $0x4] sm:$0xf]
        %v3471 = vld [vmem:[%s390 + $0x8] sm:$0xf]
        %v3472 = vld [vmem:[%s390 + $0xc] sm:$0xf]
        %v3473 = vld [vmem:[%s390 + $0x10] sm:$0xf]
        %v3474 = vld [vmem:[%s390 + $0x14] sm:$0xf]
        %v3475 = vld [vmem:[%s390 + $0x18] sm:$0xf]
        %v3476 = vld [vmem:[%s390 + $0x1c] sm:$0xf]
        %v3477 = vld [vmem:[%s390 + $0x20] sm:$0xf]
        %v3478 = vld [vmem:[%s390 + $0x24] sm:$0xf]
        %v3479 = vld [vmem:[%s390 + $0x28] sm:$0xf]
        %v3480 = vld [vmem:[%s390 + $0x2c] sm:$0xf]
        %v3481 = vld [vmem:[%s390 + $0x30] sm:$0xf]
        %v3482 = vld [vmem:[%s390 + $0x34] sm:$0xf]
        %v3483 = vld [vmem:[%s390 + $0x38] sm:$0xf]
        %v3484 = vld [vmem:[%s390 + $0x3c] sm:$0xf]
        %v3485 = vld [vmem:[%s390 + $0x40] sm:$0xf]
        %v3486 = vld [vmem:[%s390 + $0x44] sm:$0xf]
        %v3487 = vld [vmem:[%s390 + $0x48] sm:$0xf]
        %v3488 = vld [vmem:[%s390 + $0x4c] sm:$0xf]
        %v3489 = vld [vmem:[%s390 + $0x50] sm:$0xf]
        %v3490 = vld [vmem:[%s390 + $0x54] sm:$0xf]
        %v3491 = vld [vmem:[%s390 + $0x58] sm:$0xf]
        %v3492 = vld [vmem:[%s390 + $0x5c] sm:$0xf]
        %v3493 = vld [vmem:[%s390 + $0x60] sm:$0xf]
        %v3494 = vld [vmem:[%s390 + $0x64] sm:$0xf]
        %v3495 = vld [vmem:[%s390 + $0x68] sm:$0xf]
        %v3496 = vld [vmem:[%s390 + $0x6c] sm:$0xf]
        %v3497 = vld [vmem:[%s390 + $0x70] sm:$0xf]
        %v3498 = vld [vmem:[%s390 + $0x74] sm:$0xf]
        %v3499 = vld [vmem:[%s390 + $0x78] sm:$0xf]
        %v3500 = vld [vmem:[%s390 + $0x7c] sm:$0xf]
        %v3501 = vlaneseq
        %v3502 = vshrl.u32 %v3501, 7
        %v3503 = vsub.s32 5, %v3502
        %v3504 = vrot.slane %v406, %v3503
        %v3537 = vunpack.c.l.b16 %v3469
        %v3538 = vunpack.c.l.b16 %v3470
        %v3539 = vunpack.c.l.b16 %v3471
        %v3540 = vunpack.c.l.b16 %v3472
        %v3541 = vunpack.c.l.b16 %v3473
        %v3542 = vunpack.c.l.b16 %v3474
        %v3543 = vunpack.c.l.b16 %v3475
        %v3544 = vunpack.c.l.b16 %v3476
        %v3545 = vunpack.c.l.b16 %v3477
        %v3546 = vunpack.c.l.b16 %v3478
        %v3547 = vunpack.c.l.b16 %v3479
        %v3548 = vunpack.c.l.b16 %v3480
        %v3549 = vunpack.c.l.b16 %v3481
        %v3550 = vunpack.c.l.b16 %v3482
        %v3551 = vunpack.c.l.b16 %v3483
        %v3552 = vunpack.c.l.b16 %v3484
        %v3553 = vunpack.c.l.b16 %v3485
        %v3554 = vunpack.c.l.b16 %v3486
        %v3555 = vunpack.c.l.b16 %v3487
        %v3556 = vunpack.c.l.b16 %v3488
        %v3557 = vunpack.c.l.b16 %v3489
        %v3558 = vunpack.c.l.b16 %v3490
        %v3559 = vunpack.c.l.b16 %v3491
        %v3560 = vunpack.c.l.b16 %v3492
        %v3561 = vunpack.c.l.b16 %v3493
        %v3562 = vunpack.c.l.b16 %v3494
        %v3563 = vunpack.c.l.b16 %v3495
        %v3564 = vunpack.c.l.b16 %v3496
        %v3565 = vunpack.c.l.b16 %v3497
        %v3566 = vunpack.c.l.b16 %v3498
        %v3567 = vunpack.c.l.b16 %v3499
        %v3568 = vunpack.c.l.b16 %v3500
        %v3569 = vpack.c.b16 %v3538, %v3537
        %v3570 = vpack.c.b16 %v3540, %v3539
        %v3571 = vpack.c.b16 %v3542, %v3541
        %v3572 = vpack.c.b16 %v3544, %v3543
        %v3573 = vpack.c.b16 %v3546, %v3545
        %v3574 = vpack.c.b16 %v3548, %v3547
        %v3575 = vpack.c.b16 %v3550, %v3549
        %v3576 = vpack.c.b16 %v3552, %v3551
        %v3577 = vpack.c.b16 %v3554, %v3553
        %v3578 = vpack.c.b16 %v3556, %v3555
        %v3579 = vpack.c.b16 %v3558, %v3557
        %v3580 = vpack.c.b16 %v3560, %v3559
        %v3581 = vpack.c.b16 %v3562, %v3561
        %v3582 = vpack.c.b16 %v3564, %v3563
        %v3583 = vpack.c.b16 %v3566, %v3565
        %v3584 = vpack.c.b16 %v3568, %v3567
        %3601 = vmatprep.subr.bf16.mxu0 0
        %3602 = vmatpush1.bf16.msra.mxu0 %v3576
        %3603 = vmatprep.subr.bf16.mxu0 0
        %3604 = vmatpush1.bf16.msra.mxu0 %v3575
        %3605 = vmatprep.subr.bf16.mxu0 0
        %3606 = vmatpush1.bf16.msra.mxu0 %v3574
        %3607 = vmatprep.subr.bf16.mxu0 0
        %3608 = vmatpush1.bf16.msra.mxu0 %v3573
        %3609 = vmatprep.subr.bf16.mxu0 0
        %3610 = vmatpush1.bf16.msra.mxu0 %v3572
        %3611 = vmatprep.subr.bf16.mxu0 0
        %3612 = vmatpush1.bf16.msra.mxu0 %v3571
        %3613 = vmatprep.subr.bf16.mxu0 0
        %3614 = vmatpush1.bf16.msra.mxu0 %v3570
        %3615 = vmatprep.subr.bf16.mxu0 0
        %3616 = vmatpush1.bf16.msra.mxu0 %v3569
        %3617 = vmatprep.subr.bf16.mxu0 0
        %3618 = vmatpush2.bf16.msra.mxu0 %v3584
        %3619 = vmatprep.subr.bf16.mxu0 0
        %3620 = vmatpush2.bf16.msra.mxu0 %v3583
        %3621 = vmatprep.subr.bf16.mxu0 0
        %3622 = vmatpush2.bf16.msra.mxu0 %v3582
        %3623 = vmatprep.subr.bf16.mxu0 0
        %3624 = vmatpush2.bf16.msra.mxu0 %v3581
        %3625 = vmatprep.subr.bf16.mxu0 0
        %3626 = vmatpush2.bf16.msra.mxu0 %v3580
        %3627 = vmatprep.subr.bf16.mxu0 0
        %3628 = vmatpush2.bf16.msra.mxu0 %v3579
        %3629 = vmatprep.subr.bf16.mxu0 0
        %3630 = vmatpush2.bf16.msra.mxu0 %v3578
        %3631 = vmatprep.subr.bf16.mxu0 0
        %3632 = vmatpush2.bf16.msra.mxu0 %v3577
        %3633 = vmatprep.mubr.bf16.mxu0 %v3468
        %3634 = vmatmul.mubr.bf16.gmra.mxu0 %v3467
        %v3635 = vpop.f32.mrf.mxu0
        %v3636 = vadd.f32 %v3504, %v3635
        %v3637 = vpop.f32.mrf.mxu0
        %v3638 = vpop.f32.mrf.mxu0
        %v3639 = vadd.f32 %v3504, %v3638
        %v3640 = vpop.f32.mrf.mxu0
        %3641 = vdwg.mxu0
        %v3642 = vadd.f32 %v3213, %v3636
        %v3643 = vadd.f32 %v3214, %v3639
        %p3644 = scmp.lt.s32.totalorder %s25, 1
        // Predicated region
        $region57: #{transformer_embedder_forward.1} parent=51 // pred_check
          %p3645 = pneg %p3644
        $region58: #{transformer_embedder_forward.1} parent=51 // pred_check_branch
          %3647 = sbr.rel (%p3645) target = $region60
        $region59: #{transformer_embedder_forward.1} parent=51 // pred_region
          %3648 = vst.msk [vmem:[#allocation3] sm:$0xff] %vm410, %v3642
          %3649 = vst.msk [vmem:[#allocation3 + $0x8] sm:$0xff] %vm410, %v3643
        $region60: #{transformer_embedder_forward.1} parent=51 // pred_fallthru
          _
        %p3650 = scmp.eq.s32.totalorder %s25, 1
        // Predicated region
        $region61: #{transformer_embedder_forward.1} parent=51 // pred_check
          %p3651 = pneg %p3650
        $region62: #{transformer_embedder_forward.1} parent=51 // pred_check_branch
          %3653 = sbr.rel (%p3651) target = $region64
        $region63: #{transformer_embedder_forward.1} parent=51 // pred_region
          %v3654 = vld [vmem:[%s3] sm:$0x1]
          %v3655 = vld [vmem:[%s3 + $0x1] sm:$0x1]
          %v3656 = vsel %vm410, %v3642, 0.0
          %3657 = vadd.xlane.f32.xlu0 %v3656
          %v3658 = vpop.xlane.xlu0 %3657
          %v3659 = vsel %vm410, %v3643, 0.0
          %3660 = vadd.xlane.f32.xlu0 %v3659
          %v3661 = vpop.xlane.xlu0 %3660
          %v3662 = vmul.f32 %v3658, %v417
          %v3663 = vmul.f32 %v3661, %v417
          %v3664 = vsub.f32 %v3642, %v3662
          %v3665 = vsub.f32 %v3643, %v3663
          %v3666 = vmul.f32 %v3664, %v3664
          %v3667 = vmul.f32 %v3665, %v3665
          %v3668 = vsel %vm410, %v3666, 0.0
          %3669 = vadd.xlane.f32.xlu0 %v3668
          %v3670 = vpop.xlane.xlu0 %3669
          %v3671 = vsel %vm410, %v3667, 0.0
          %3672 = vadd.xlane.f32.xlu0 %v3671
          %v3673 = vpop.xlane.xlu0 %3672
          %v3674 = vmul.f32 %v3670, %v417
          %v3675 = vmul.f32 %v3673, %v417
          %v3676 = vadd.f32 %v3674, 1e-05
          %v3677 = vadd.f32 %v3675, 1e-05
          %v3678 = vrsqrt.pop %v3676
          %v3679 = vrsqrt.pop %v3677
          %v3680 = vmul.f32 %v3664, %v3678
          %v3681 = vmul.f32 %v3665, %v3679
          %v3682 = vlaneseq
          %v3683 = vshrl.u32 %v3682, 7
          %v3684 = vsub.s32 0, %v3683
          %v3685 = vrot.slane %v3654, %v3684
          %v3686 = vmul.f32 %v3680, %v3685
          %v3687 = vmul.f32 %v3681, %v3685
          %v3688 = vlaneseq
          %v3689 = vshrl.u32 %v3688, 7
          %v3690 = vsub.s32 0, %v3689
          %v3691 = vrot.slane %v3655, %v3690
          %v3692 = vadd.f32 %v3686, %v3691
          %v3693 = vadd.f32 %v3687, %v3691
          %3694 = vst.msk [vmem:[#allocation3] sm:$0xff] %vm410, %v3692
          %3695 = vst.msk [vmem:[#allocation3 + $0x8] sm:$0xff] %vm410, %v3693
        $region64: #{transformer_embedder_forward.1} parent=51 // pred_fallthru
          _
        // Predicated region
        $region65: #{transformer_embedder_forward.1} parent=51 // pred_check
          %p3696 = pneg %p243
        $region66: #{transformer_embedder_forward.1} parent=51 // pred_check_branch
          %3698 = sbr.rel (%p3696) target = $region68
        $region67: #{transformer_embedder_forward.1} parent=51 // pred_region
          %s3699 = smul.u32 2, %s24
          %s3701 = ssub.s32 256, 256
          %3702 = vsyncadd [#allocation4], %s3701
          %s3703 = smul.addr %s3699, 128
          %s3704 = scalar_lea.hbm %s8, %s3703
          %s3705 = sshll.u32 [#allocation3], 4
          %s3706 = int_to_ptr.vmem [resolvable:$true] %s3705
          %3711 = dma.vmem_to_hbm [thread:$0]  %s3706, 256, %s3704, [#allocation4], 128, 128, 8
        $region68: #{transformer_embedder_forward.1} parent=51 // pred_fallthru
          _
        // Predicated region
        $region69: #{transformer_embedder_forward.1} parent=51 // pred_check
          %p3712 = pneg %p243
        $region70: #{transformer_embedder_forward.1} parent=51 // pred_check_branch
          %3714 = sbr.rel (%p3712) target = $region72
        $region71: #{transformer_embedder_forward.1} parent=51 // pred_region
          %3715 = dma.done [#allocation4], 256
        $region72: #{transformer_embedder_forward.1} parent=51 // pred_fallthru
          _
      $region52: #{transformer_embedder_forward.1} parent=5 // pred_fallthru
        _
      %p3716 = scmp.le.s32.totalorder 2, %s15
      // Predicated region
      $region73: #{transformer_embedder_forward.1} parent=5 // pred_check
        %p3717 = pneg %p3716
      $region74: #{transformer_embedder_forward.1} parent=5 // pred_check_branch
        %3719 = sbr.rel (%p3717) target = $region76
      $region75: #{transformer_embedder_forward.1} parent=5 // pred_region
        %s3720 = ssub.s32 %s15, 2
      $region76: #{transformer_embedder_forward.1} parent=5 // pred_fallthru
        _
    $region6: #{transformer_embedder_forward.1} parent=1 // loop_footer
      %s19 = sadd.s32 1, %s15
    $region7: #{transformer_embedder_forward.1} parent=1 // loop_footer_branch
      %14 = sbr.rel target = $region3
    $region8: #{transformer_embedder_forward.1} parent=1 // loop_exit
      _
    %3721 = vsyncpa [#allocation4], 1
    %s3722 = scalar_lea.sflag [#allocation4], 1
    %3723 = vsyncpa %s3722, 1

</llo_original>
